<compile_context>
chip_gen: v7x
topology: tpu7x:2x2x1
jax: 0.10.0
libtpu: 0.0.40
codegen_flags: <defaults>
</compile_context>

<pallas_src>
import functools

import jax
import jax.numpy as jnp
from jax.experimental import pallas as pl
from jax.experimental.pallas import tpu as pltpu


# ---------------------------------------------------------------------------
# Kernel 1: shared conv backbone (3x3 SAME conv + ReLU) fused with the 1x1
# reduce_dim conv.  One grid step per sample.
# ---------------------------------------------------------------------------
def _backbone_kernel(x_ref, w3_ref, b3_ref, wrt_ref, brt_ref, o_ref, lhs_ref,
                     *, width):
    # x_ref  : [1, L, Cin] bf16, L = (H+2)*W + 2  (H zero-padded, row-flattened,
    #          +1 pad element at each end so every tap is a contiguous slice)
    # w3_ref : [9*Cin, Cmid] bf16   (tap-major: (dh, dw, cin) row order)
    # b3_ref : [1, Cmid] f32
    # wrt_ref: [Cr, Cmid] bf16      (reduce_dim 1x1 conv weight, transposed)
    # brt_ref: [Cr, 1]   f32
    # o_ref  : [1, Cr, HW] bf16     (lane-dense: last dim HW % 128 == 0)
    # lhs_ref: [HW, 9*Cin] bf16 VMEM scratch (im2col slab)
    hw = lhs_ref.shape[0]
    cin = x_ref.shape[2]

    # Boundary-column masks generated in-kernel (no HBM constants / DMA).
    row = jax.lax.broadcasted_iota(jnp.int32, (hw, 1), 0)
    if width & (width - 1) == 0:                       # static (trace-time) check
        col = jnp.bitwise_and(row, width - 1)
    else:
        col = jax.lax.rem(row, width)                  # TODO(synk): untested non-pow2 W
    ml = col != 0                                      # tap from w = -1 invalid
    mr = col != width - 1                              # tap from w = W  invalid

    # Assemble the im2col LHS once: 3x3 conv becomes ONE MXU matmul with
    # K = 9*Cin instead of nine tiny K=Cin pushes.
    for dh in range(3):
        for dw in range(3):
            s = dh * width + dw
            slab = x_ref[0, s:s + hw, :]               # [HW, Cin] bf16 shifted view
            if dw == 0:
                slab = jnp.where(ml, slab, jnp.zeros_like(slab))
            elif dw == 2:
                slab = jnp.where(mr, slab, jnp.zeros_like(slab))
            t = dh * 3 + dw
            lhs_ref[:, t * cin:(t + 1) * cin] = slab

    acc = jnp.dot(lhs_ref[...], w3_ref[...],
                  preferred_element_type=jnp.float32)          # [HW, Cmid] f32
    feat = jnp.maximum(acc + b3_ref[...], 0.0)                 # conv bias + ReLU

    # reduce_dim emitted transposed: red_t[c, p] = sum_m wr[m, c] * feat[p, m],
    # i.e. an A @ B^T dot_general (no explicit transpose materialized) so the
    # output store is lane-dense.
    red_t = jax.lax.dot_general(
        wrt_ref[...], feat.astype(jnp.bfloat16),
        dimension_numbers=(((1,), (1,)), ((), ())),
        preferred_element_type=jnp.float32) + brt_ref[...]     # [Cr, HW]
    o_ref[0] = red_t.astype(o_ref.dtype)


# ---------------------------------------------------------------------------
# Kernel 2: fused FC head, K-tiled over the feature dim.
#   Linear -> BatchNorm1d(eval) -> ReLU -> Linear -> (Dropout = id)
#   -> PReLU(1) -> Linear
# ---------------------------------------------------------------------------
def _fc_head_kernel(x_ref, w1_ref, b1_ref, g_ref, be_ref, rm_ref, rv_ref,
                    w2_ref, b2_ref, a_ref, w3_ref, b3_ref, o_ref, acc_ref):
    k = pl.program_id(0)

    @pl.when(k == 0)
    def _():
        acc_ref[...] = jnp.zeros_like(acc_ref)

    # first Linear, accumulated over K tiles (w1 DMA pipelined across the grid)
    acc_ref[...] += jnp.dot(x_ref[...], w1_ref[...],
                            preferred_element_type=jnp.float32)

    @pl.when(k == pl.num_programs(0) - 1)
    def _():
        h1 = acc_ref[...] + b1_ref[...]
        inv_std = jax.lax.rsqrt(rv_ref[...] + 1e-5)                    # EUP slot
        h1 = (h1 - rm_ref[...]) * (inv_std * g_ref[...]) + be_ref[...]
        h1 = jnp.maximum(h1, 0.0)                                      # ReLU
        h2 = jnp.dot(h1.astype(jnp.bfloat16), w2_ref[...],
                     preferred_element_type=jnp.float32) + b2_ref[...]
        # Dropout(0.2) is the identity in eval mode.
        a = a_ref[0, 0]                                                # SMEM scalar
        h2 = jnp.where(h2 >= 0.0, h2, a * h2)                          # PReLU(1)
        h3 = jnp.dot(h2.astype(jnp.bfloat16), w3_ref[...],
                     preferred_element_type=jnp.float32) + b3_ref[...]
        o_ref[...] = h3


# ---------------------------------------------------------------------------
# Wrappers
# ---------------------------------------------------------------------------
def backbone_features(x, params):
    """x: [N, H, W, Cin] f32 -> per-sample features [N, Cr*H*W] bf16
    (channel-major flatten, matching PyTorch NCHW .view(B, -1))."""
    N, H, W, Cin = x.shape
    w3, b3 = params["w_conv"], params["b_conv"]
    wr, br = params["w_red"], params["b_red"]
    Cmid, Cr = w3.shape[-1], wr.shape[-1]
    HW = H * W
    L = HW + 2 * W + 2

    # Single fused producer pass: contiguous reshape (free) + bf16 cast + ONE
    # jnp.pad creating both the H halo rows and the +/-1 flat end elements.
    flat = jnp.pad(x.reshape(N, HW, Cin).astype(jnp.bfloat16),
                   ((0, 0), (W + 1, W + 1), (0, 0)))

    def const(shape):
        return pl.BlockSpec(shape, lambda n: (0,) * len(shape))

    kernel = functools.partial(_backbone_kernel, width=W)
    feats = pl.pallas_call(
        kernel,
        grid=(N,),
        in_specs=[
            pl.BlockSpec((1, L, Cin), lambda n: (n, 0, 0)),
            const((9 * Cin, Cmid)), const((1, Cmid)),
            const((Cr, Cmid)), const((Cr, 1)),
        ],
        out_specs=pl.BlockSpec((1, Cr, HW), lambda n: (n, 0, 0)),
        out_shape=jax.ShapeDtypeStruct((N, Cr, HW), jnp.bfloat16),
        scratch_shapes=[pltpu.VMEM((HW, 9 * Cin), jnp.bfloat16)],
        compiler_params=pltpu.CompilerParams(
            dimension_semantics=("parallel",),     # even grid: both v7x TCs busy
            vmem_limit_bytes=32 * 1024 * 1024),
    )(flat,
      w3.reshape(9 * Cin, Cmid).astype(jnp.bfloat16),
      b3.reshape(1, Cmid).astype(jnp.float32),
      wr.T.astype(jnp.bfloat16),
      br.reshape(Cr, 1).astype(jnp.float32))

    # Contiguous reshape of the lane-dense (N, Cr, HW) output is free.
    return feats.reshape(N, Cr * HW)


def fc_head(feats, params):
    """feats: [N, D] bf16 -> [N, out_dim] f32."""
    N, D = feats.shape
    H1 = params["w1"].shape[-1]
    H2 = params["w2"].shape[-1]
    out_dim = params["w3"].shape[-1]
    Bp = max(8, ((N + 7) // 8) * 8)            # pad batch to a full f32 sublane group
    x = jnp.pad(feats, ((0, Bp - N), (0, 0)))

    TK = 1024 if (D % 1024 == 0 and D > 1024) else D   # K tile of the first Linear
    nk = D // TK

    def vspec(shape):
        return pl.BlockSpec(shape, lambda k: (0,) * len(shape))

    out = pl.pallas_call(
        _fc_head_kernel,
        grid=(nk,),
        in_specs=[
            pl.BlockSpec((Bp, TK), lambda k: (0, k)),
            pl.BlockSpec((TK, H1), lambda k: (k, 0)),
            vspec((1, H1)), vspec((1, H1)), vspec((1, H1)),
            vspec((1, H1)), vspec((1, H1)),
            vspec((H1, H2)), vspec((1, H2)),
            pl.BlockSpec(memory_space=pltpu.MemorySpace.SMEM),   # prelu_a scalar
            vspec((H2, out_dim)), vspec((1, out_dim)),
        ],
        out_specs=pl.BlockSpec((Bp, out_dim), lambda k: (0, 0)),
        out_shape=jax.ShapeDtypeStruct((Bp, out_dim), jnp.float32),
        scratch_shapes=[pltpu.VMEM((Bp, H1), jnp.float32)],
        compiler_params=pltpu.CompilerParams(
            dimension_semantics=("arbitrary",),
            vmem_limit_bytes=32 * 1024 * 1024),
        # TODO(synk): fully fusing this head into the backbone kernel as a
        # per-sample epilogue would remove the second launch + feats round
        # trip, but needs an in-kernel (Cr, HW) -> (1, Cr*HW) relayout.
    )(x,
      params["w1"].astype(jnp.bfloat16), params["b1"].reshape(1, -1),
      params["bn_gamma"].reshape(1, -1), params["bn_beta"].reshape(1, -1),
      params["bn_mean"].reshape(1, -1), params["bn_var"].reshape(1, -1),
      params["w2"].astype(jnp.bfloat16), params["b2"].reshape(1, -1),
      params["prelu_a"].reshape(1, 1),
      params["w3"].astype(jnp.bfloat16), params["b3"].reshape(1, -1))
    return out[:N]


@jax.jit
def siamese_pinet_forward(x1, x2, params):
    """Returns (output1, output2), mirroring SiamesePiNet.forward."""
    B = x1.shape[0]
    # Siamese weight sharing: both branches stacked along batch so the shared
    # backbone + FC head each run once.  The concatenate fuses with the bf16
    # cast + pad inside backbone_features into one XLA producer pass.
    x = jnp.concatenate((x1, x2), axis=0)
    feats = backbone_features(x, params)
    out = fc_head(feats, params)
    return out[:B], out[B:]


# ---------------------------------------------------------------------------
# Deterministic parameter init, pure-JAX reference, demo
# ---------------------------------------------------------------------------
def init_params(key, cin, cmid, cr, feat_dim, h1, h2, out_dim):
    ks = jax.random.split(key, 10)
    s = 0.05
    return {
        # shared conv backbone (stand-in for ResNet18 feature extractor)
        "w_conv": s * jax.random.normal(ks[0], (3, 3, cin, cmid), jnp.float32),
        "b_conv": s * jax.random.normal(ks[1], (cmid,), jnp.float32),
        # reduce_dim 1x1 conv
        "w_red": s * jax.random.normal(ks[2], (cmid, cr), jnp.float32),
        "b_red": s * jax.random.normal(ks[3], (cr,), jnp.float32),
        # fc head
        "w1": s * jax.random.normal(ks[4], (feat_dim, h1), jnp.float32),
        "b1": s * jax.random.normal(ks[5], (h1,), jnp.float32),
        "bn_gamma": jnp.ones((h1,), jnp.float32),
        "bn_beta": jnp.zeros((h1,), jnp.float32),
        "bn_mean": jnp.zeros((h1,), jnp.float32),
        "bn_var": jnp.ones((h1,), jnp.float32),
        "w2": s * jax.random.normal(ks[6], (h1, h2), jnp.float32),
        "b2": s * jax.random.normal(ks[7], (h2,), jnp.float32),
        "prelu_a": jnp.full((1, 1), 0.25, jnp.float32),   # PyTorch PReLU default
        "w3": s * jax.random.normal(ks[8], (h2, out_dim), jnp.float32),
        "b3": s * jax.random.normal(ks[9], (out_dim,), jnp.float32),
    }


def _reference_forward_once(x, p):
    """Pure-JAX f32 reference of one branch (independent of the kernels)."""
    y = jax.lax.conv_general_dilated(
        x, p["w_conv"], window_strides=(1, 1), padding="SAME",
        dimension_numbers=("NHWC", "HWIO", "NHWC"))
    y = jnp.maximum(y + p["b_conv"], 0.0)
    y = jnp.einsum("nhwc,cd->nhwd", y, p["w_red"]) + p["b_red"]
    # channel-major flatten (PyTorch NCHW .view(B, -1)), matching the kernels
    f = jnp.transpose(y, (0, 3, 1, 2)).reshape(x.shape[0], -1)
    h1 = f @ p["w1"] + p["b1"]
    h1 = (h1 - p["bn_mean"]) * jax.lax.rsqrt(p["bn_var"] + 1e-5) * p["bn_gamma"] \
        + p["bn_beta"]
    h1 = jnp.maximum(h1, 0.0)
    h2 = h1 @ p["w2"] + p["b2"]
    h2 = jnp.where(h2 >= 0.0, h2, p["prelu_a"][0, 0] * h2)
    return h2 @ p["w3"] + p["b3"]


if __name__ == "__main__":
    key = jax.random.PRNGKey(0)
    k1, k2, kp = jax.random.split(key, 3)

    # small shapes consistent with the module structure
    B, H, W, CIN = 2, 16, 16, 4
    CMID, CR = 32, 16            # backbone channels / reduce_dim out (orig 512 -> 16)
    D = CR * H * W               # flattened per-branch features (orig 16*17*24)
    H1, H2, OUT = 512, 64, 8     # original fc sizes

    x1 = jax.random.normal(k1, (B, H, W, CIN), jnp.float32)
    x2 = jax.random.normal(k2, (B, H, W, CIN), jnp.float32)
    params = init_params(kp, CIN, CMID, CR, D, H1, H2, OUT)

    o1, o2 = siamese_pinet_forward(x1, x2, params)
    o1, o2 = jax.block_until_ready((o1, o2))

    assert o1.shape == (B, OUT) and o2.shape == (B, OUT)
    assert bool(jnp.all(jnp.isfinite(o1)) & jnp.all(jnp.isfinite(o2)))

    # loose tolerance: kernels use bf16 matmul operands with f32 accumulation
    r1 = _reference_forward_once(x1, params)
    r2 = _reference_forward_once(x2, params)
    assert bool(jnp.allclose(o1, r1, atol=3e-2, rtol=3e-2))
    assert bool(jnp.allclose(o2, r2, atol=3e-2, rtol=3e-2))

    print("KERNEL_OK")
</pallas_src>

<mosaic_0001>
module attributes {stable_mosaic.version = 11 : i64} {
  func.func @_backbone_kernel(%arg0: i32, %arg1: memref<1x290x4xbf16, #tpu.memory_space<vmem>>, %arg2: memref<36x32xbf16, #tpu.memory_space<vmem>>, %arg3: memref<1x32xf32, #tpu.memory_space<vmem>>, %arg4: memref<16x32xbf16, #tpu.memory_space<vmem>>, %arg5: memref<16x1xf32, #tpu.memory_space<vmem>>, %arg6: memref<1x16x256xbf16, #tpu.memory_space<vmem>>, %arg7: memref<256x36xbf16, #tpu.memory_space<vmem>>) attributes {dimension_semantics = [#tpu.dimension_semantics<parallel>], iteration_bounds = array<i64: 4>, scalar_prefetch = 0 : i64, scratch_operands = 1 : i64, tpu.core_type = #tpu.core_type<tc>, window_params = [{transform_indices = @transform_0, window_bounds = array<i64: 1, 290, 4>}, {pipeline_mode = #tpu.pipeline_mode<synchronous>, transform_indices = @transform_1, window_bounds = array<i64: 36, 32>}, {pipeline_mode = #tpu.pipeline_mode<synchronous>, transform_indices = @transform_2, window_bounds = array<i64: 1, 32>}, {pipeline_mode = #tpu.pipeline_mode<synchronous>, transform_indices = @transform_3, window_bounds = array<i64: 16, 32>}, {pipeline_mode = #tpu.pipeline_mode<synchronous>, transform_indices = @transform_4, window_bounds = array<i64: 16, 1>}, {transform_indices = @transform_5, window_bounds = array<i64: 1, 16, 256>}]} {
    %0 = tpu.iota {dimensions = array<i32: 0>} : vector<256x1xi32>
    %c15_i32 = arith.constant 15 : i32
    %1 = vector.broadcast %c15_i32 : i32 to vector<256x1xi32>
    %2 = arith.andi %0, %1 : vector<256x1xi32>
    %c0_i32 = arith.constant 0 : i32
    %3 = vector.broadcast %c0_i32 : i32 to vector<256x1xi32>
    %4 = arith.cmpi ne, %2, %3 : vector<256x1xi32>
    %c15_i32_0 = arith.constant 15 : i32
    %5 = vector.broadcast %c15_i32_0 : i32 to vector<256x1xi32>
    %6 = arith.cmpi ne, %2, %5 : vector<256x1xi32>
    %c0 = arith.constant 0 : index
    %c0_1 = arith.constant 0 : index
    %c0_2 = arith.constant 0 : index
    %7 = vector.load %arg1[%c0, %c0_1, %c0_2] : memref<1x290x4xbf16, #tpu.memory_space<vmem>>, vector<1x256x4xbf16>
    %8 = vector.shape_cast %7 : vector<1x256x4xbf16> to vector<256x4xbf16>
    %cst = arith.constant 0.000000e+00 : bf16
    %9 = vector.broadcast %cst : bf16 to vector<256x4xbf16>
    %10 = vector.shape_cast %4 : vector<256x1xi1> to vector<256x1xi1>
    %11 = vector.broadcast %10 : vector<256x1xi1> to vector<256x4xi1>
    %12 = arith.select %11, %8, %9 : vector<256x4xi1>, vector<256x4xbf16>
    %c0_3 = arith.constant 0 : index
    %c0_4 = arith.constant 0 : index
    %13 = vector.load %arg7[%c0_3, %c0_4] : memref<256x36xbf16, #tpu.memory_space<vmem>>, vector<256x4xbf16>
    tpu.vector_store %arg7[%c0_3, %c0_4], %12 {strides = array<i32>} : memref<256x36xbf16, #tpu.memory_space<vmem>>, vector<256x4xbf16>,
    %c0_5 = arith.constant 0 : index
    %c1 = arith.constant 1 : index
    %c0_6 = arith.constant 0 : index
    %14 = vector.load %arg1[%c0_5, %c1, %c0_6] : memref<1x290x4xbf16, #tpu.memory_space<vmem>>, vector<1x256x4xbf16>
    %15 = vector.shape_cast %14 : vector<1x256x4xbf16> to vector<256x4xbf16>
    %c0_7 = arith.constant 0 : index
    %c4 = arith.constant 4 : index
    %16 = vector.load %arg7[%c0_7, %c4] : memref<256x36xbf16, #tpu.memory_space<vmem>>, vector<256x4xbf16>
    tpu.vector_store %arg7[%c0_7, %c4], %15 {strides = array<i32>} : memref<256x36xbf16, #tpu.memory_space<vmem>>, vector<256x4xbf16>,
    %c0_8 = arith.constant 0 : index
    %c2 = arith.constant 2 : index
    %c0_9 = arith.constant 0 : index
    %17 = vector.load %arg1[%c0_8, %c2, %c0_9] : memref<1x290x4xbf16, #tpu.memory_space<vmem>>, vector<1x256x4xbf16>
    %18 = vector.shape_cast %17 : vector<1x256x4xbf16> to vector<256x4xbf16>
    %cst_10 = arith.constant 0.000000e+00 : bf16
    %19 = vector.broadcast %cst_10 : bf16 to vector<256x4xbf16>
    %20 = vector.shape_cast %6 : vector<256x1xi1> to vector<256x1xi1>
    %21 = vector.broadcast %20 : vector<256x1xi1> to vector<256x4xi1>
    %22 = arith.select %21, %18, %19 : vector<256x4xi1>, vector<256x4xbf16>
    %c0_11 = arith.constant 0 : index
    %c8 = arith.constant 8 : index
    %23 = vector.load %arg7[%c0_11, %c8] : memref<256x36xbf16, #tpu.memory_space<vmem>>, vector<256x4xbf16>
    tpu.vector_store %arg7[%c0_11, %c8], %22 {strides = array<i32>} : memref<256x36xbf16, #tpu.memory_space<vmem>>, vector<256x4xbf16>,
    %c0_12 = arith.constant 0 : index
    %c16 = arith.constant 16 : index
    %c0_13 = arith.constant 0 : index
    %24 = vector.load %arg1[%c0_12, %c16, %c0_13] : memref<1x290x4xbf16, #tpu.memory_space<vmem>>, vector<1x256x4xbf16>
    %25 = vector.shape_cast %24 : vector<1x256x4xbf16> to vector<256x4xbf16>
    %cst_14 = arith.constant 0.000000e+00 : bf16
    %26 = vector.broadcast %cst_14 : bf16 to vector<256x4xbf16>
    %27 = vector.shape_cast %4 : vector<256x1xi1> to vector<256x1xi1>
    %28 = vector.broadcast %27 : vector<256x1xi1> to vector<256x4xi1>
    %29 = arith.select %28, %25, %26 : vector<256x4xi1>, vector<256x4xbf16>
    %c0_15 = arith.constant 0 : index
    %c12 = arith.constant 12 : index
    %30 = vector.load %arg7[%c0_15, %c12] : memref<256x36xbf16, #tpu.memory_space<vmem>>, vector<256x4xbf16>
    tpu.vector_store %arg7[%c0_15, %c12], %29 {strides = array<i32>} : memref<256x36xbf16, #tpu.memory_space<vmem>>, vector<256x4xbf16>,
    %c0_16 = arith.constant 0 : index
    %c17 = arith.constant 17 : index
    %c0_17 = arith.constant 0 : index
    %31 = vector.load %arg1[%c0_16, %c17, %c0_17] : memref<1x290x4xbf16, #tpu.memory_space<vmem>>, vector<1x256x4xbf16>
    %32 = vector.shape_cast %31 : vector<1x256x4xbf16> to vector<256x4xbf16>
    %c0_18 = arith.constant 0 : index
    %c16_19 = arith.constant 16 : index
    %33 = vector.load %arg7[%c0_18, %c16_19] : memref<256x36xbf16, #tpu.memory_space<vmem>>, vector<256x4xbf16>
    tpu.vector_store %arg7[%c0_18, %c16_19], %32 {strides = array<i32>} : memref<256x36xbf16, #tpu.memory_space<vmem>>, vector<256x4xbf16>,
    %c0_20 = arith.constant 0 : index
    %c18 = arith.constant 18 : index
    %c0_21 = arith.constant 0 : index
    %34 = vector.load %arg1[%c0_20, %c18, %c0_21] : memref<1x290x4xbf16, #tpu.memory_space<vmem>>, vector<1x256x4xbf16>
    %35 = vector.shape_cast %34 : vector<1x256x4xbf16> to vector<256x4xbf16>
    %cst_22 = arith.constant 0.000000e+00 : bf16
    %36 = vector.broadcast %cst_22 : bf16 to vector<256x4xbf16>
    %37 = vector.shape_cast %6 : vector<256x1xi1> to vector<256x1xi1>
    %38 = vector.broadcast %37 : vector<256x1xi1> to vector<256x4xi1>
    %39 = arith.select %38, %35, %36 : vector<256x4xi1>, vector<256x4xbf16>
    %c0_23 = arith.constant 0 : index
    %c20 = arith.constant 20 : index
    %40 = vector.load %arg7[%c0_23, %c20] : memref<256x36xbf16, #tpu.memory_space<vmem>>, vector<256x4xbf16>
    tpu.vector_store %arg7[%c0_23, %c20], %39 {strides = array<i32>} : memref<256x36xbf16, #tpu.memory_space<vmem>>, vector<256x4xbf16>,
    %c0_24 = arith.constant 0 : index
    %c32 = arith.constant 32 : index
    %c0_25 = arith.constant 0 : index
    %41 = vector.load %arg1[%c0_24, %c32, %c0_25] : memref<1x290x4xbf16, #tpu.memory_space<vmem>>, vector<1x256x4xbf16>
    %42 = vector.shape_cast %41 : vector<1x256x4xbf16> to vector<256x4xbf16>
    %cst_26 = arith.constant 0.000000e+00 : bf16
    %43 = vector.broadcast %cst_26 : bf16 to vector<256x4xbf16>
    %44 = vector.shape_cast %4 : vector<256x1xi1> to vector<256x1xi1>
    %45 = vector.broadcast %44 : vector<256x1xi1> to vector<256x4xi1>
    %46 = arith.select %45, %42, %43 : vector<256x4xi1>, vector<256x4xbf16>
    %c0_27 = arith.constant 0 : index
    %c24 = arith.constant 24 : index
    %47 = vector.load %arg7[%c0_27, %c24] : memref<256x36xbf16, #tpu.memory_space<vmem>>, vector<256x4xbf16>
    tpu.vector_store %arg7[%c0_27, %c24], %46 {strides = array<i32>} : memref<256x36xbf16, #tpu.memory_space<vmem>>, vector<256x4xbf16>,
    %c0_28 = arith.constant 0 : index
    %c33 = arith.constant 33 : index
    %c0_29 = arith.constant 0 : index
    %48 = vector.load %arg1[%c0_28, %c33, %c0_29] : memref<1x290x4xbf16, #tpu.memory_space<vmem>>, vector<1x256x4xbf16>
    %49 = vector.shape_cast %48 : vector<1x256x4xbf16> to vector<256x4xbf16>
    %c0_30 = arith.constant 0 : index
    %c28 = arith.constant 28 : index
    %50 = vector.load %arg7[%c0_30, %c28] : memref<256x36xbf16, #tpu.memory_space<vmem>>, vector<256x4xbf16>
    tpu.vector_store %arg7[%c0_30, %c28], %49 {strides = array<i32>} : memref<256x36xbf16, #tpu.memory_space<vmem>>, vector<256x4xbf16>,
    %c0_31 = arith.constant 0 : index
    %c34 = arith.constant 34 : index
    %c0_32 = arith.constant 0 : index
    %51 = vector.load %arg1[%c0_31, %c34, %c0_32] : memref<1x290x4xbf16, #tpu.memory_space<vmem>>, vector<1x256x4xbf16>
    %52 = vector.shape_cast %51 : vector<1x256x4xbf16> to vector<256x4xbf16>
    %cst_33 = arith.constant 0.000000e+00 : bf16
    %53 = vector.broadcast %cst_33 : bf16 to vector<256x4xbf16>
    %54 = vector.shape_cast %6 : vector<256x1xi1> to vector<256x1xi1>
    %55 = vector.broadcast %54 : vector<256x1xi1> to vector<256x4xi1>
    %56 = arith.select %55, %52, %53 : vector<256x4xi1>, vector<256x4xbf16>
    %c0_34 = arith.constant 0 : index
    %c32_35 = arith.constant 32 : index
    %57 = vector.load %arg7[%c0_34, %c32_35] : memref<256x36xbf16, #tpu.memory_space<vmem>>, vector<256x4xbf16>
    tpu.vector_store %arg7[%c0_34, %c32_35], %56 {strides = array<i32>} : memref<256x36xbf16, #tpu.memory_space<vmem>>, vector<256x4xbf16>,
    %c0_36 = arith.constant 0 : index
    %c0_37 = arith.constant 0 : index
    %58 = vector.load %arg7[%c0_36, %c0_37] : memref<256x36xbf16, #tpu.memory_space<vmem>>, vector<256x36xbf16>
    %c0_38 = arith.constant 0 : index
    %c0_39 = arith.constant 0 : index
    %59 = vector.load %arg2[%c0_38, %c0_39] : memref<36x32xbf16, #tpu.memory_space<vmem>>, vector<36x32xbf16>
    %cst_40 = arith.constant dense<0.000000e+00> : vector<256x32xf32>
    %60 = tpu.matmul %58, %59, %cst_40 {dimension_numbers = #tpu.dot_dimension_numbers<[1], [0], [0], [1], [0, 0, 1, 1], [], []>} : vector<256x36xbf16>, vector<36x32xbf16>, vector<256x32xf32> -> vector<256x32xf32>
    %c0_41 = arith.constant 0 : index
    %c0_42 = arith.constant 0 : index
    %61 = vector.load %arg3[%c0_41, %c0_42] : memref<1x32xf32, #tpu.memory_space<vmem>>, vector<1x32xf32>
    %62 = vector.broadcast %61 : vector<1x32xf32> to vector<256x32xf32>
    %63 = arith.addf %60, %62 : vector<256x32xf32>
    %cst_43 = arith.constant 0.000000e+00 : f32
    %64 = vector.broadcast %cst_43 : f32 to vector<256x32xf32>
    %65 = arith.maximumf %63, %64 : vector<256x32xf32>
    %c0_44 = arith.constant 0 : index
    %c0_45 = arith.constant 0 : index
    %66 = vector.load %arg4[%c0_44, %c0_45] : memref<16x32xbf16, #tpu.memory_space<vmem>>, vector<16x32xbf16>
    %67 = arith.truncf %65 : vector<256x32xf32> to vector<256x32xbf16>
    %cst_46 = arith.constant dense<0.000000e+00> : vector<16x256xf32>
    %68 = tpu.matmul %66, %67, %cst_46 {dimension_numbers = #tpu.dot_dimension_numbers<[1], [1], [0], [0], [0, 0, 1, 0], [], []>} : vector<16x32xbf16>, vector<256x32xbf16>, vector<16x256xf32> -> vector<16x256xf32>
    %c0_47 = arith.constant 0 : index
    %c0_48 = arith.constant 0 : index
    %69 = vector.load %arg5[%c0_47, %c0_48] : memref<16x1xf32, #tpu.memory_space<vmem>>, vector<16x1xf32>
    %70 = vector.broadcast %69 : vector<16x1xf32> to vector<16x256xf32>
    %71 = arith.addf %68, %70 : vector<16x256xf32>
    %72 = arith.truncf %71 : vector<16x256xf32> to vector<16x256xbf16>
    %c0_49 = arith.constant 0 : index
    %c0_50 = arith.constant 0 : index
    %c0_51 = arith.constant 0 : index
    %73 = vector.load %arg6[%c0_49, %c0_50, %c0_51] : memref<1x16x256xbf16, #tpu.memory_space<vmem>>, vector<1x16x256xbf16>
    %74 = vector.shape_cast %73 : vector<1x16x256xbf16> to vector<16x256xbf16>
    %75 = vector.shape_cast %72 : vector<16x256xbf16> to vector<1x16x256xbf16>
    tpu.vector_store %arg6[%c0_49, %c0_50, %c0_51], %75 {strides = array<i32>} : memref<1x16x256xbf16, #tpu.memory_space<vmem>>, vector<1x16x256xbf16>,
    return
  }
  func.func @transform_0(%arg0: i32) -> (i32, i32, i32) {
    %c0_i32 = arith.constant 0 : i32
    %c0_i32_0 = arith.constant 0 : i32
    %c0_i32_1 = arith.constant 0 : i32
    return %arg0, %c0_i32, %c0_i32_0 : i32, i32, i32
  }
  func.func @transform_1(%arg0: i32) -> (i32, i32) {
    %c0_i32 = arith.constant 0 : i32
    %c0_i32_0 = arith.constant 0 : i32
    %c0_i32_1 = arith.constant 0 : i32
    return %c0_i32, %c0_i32_0 : i32, i32
  }
  func.func @transform_2(%arg0: i32) -> (i32, i32) {
    %c0_i32 = arith.constant 0 : i32
    %c0_i32_0 = arith.constant 0 : i32
    %c0_i32_1 = arith.constant 0 : i32
    return %c0_i32, %c0_i32_0 : i32, i32
  }
  func.func @transform_3(%arg0: i32) -> (i32, i32) {
    %c0_i32 = arith.constant 0 : i32
    %c0_i32_0 = arith.constant 0 : i32
    %c0_i32_1 = arith.constant 0 : i32
    return %c0_i32, %c0_i32_0 : i32, i32
  }
  func.func @transform_4(%arg0: i32) -> (i32, i32) {
    %c0_i32 = arith.constant 0 : i32
    %c0_i32_0 = arith.constant 0 : i32
    %c0_i32_1 = arith.constant 0 : i32
    return %c0_i32, %c0_i32_0 : i32, i32
  }
  func.func @transform_5(%arg0: i32) -> (i32, i32, i32) {
    %c0_i32 = arith.constant 0 : i32
    %c0_i32_0 = arith.constant 0 : i32
    %c0_i32_1 = arith.constant 0 : i32
    return %arg0, %c0_i32, %c0_i32_0 : i32, i32, i32
  }
}

module attributes {stable_mosaic.version = 11 : i64} {
  func.func @_fc_head_kernel(%arg0: i32, %arg1: memref<8x1024xbf16, #tpu.memory_space<vmem>>, %arg2: memref<1024x512xbf16, #tpu.memory_space<vmem>>, %arg3: memref<1x512xf32, #tpu.memory_space<vmem>>, %arg4: memref<1x512xf32, #tpu.memory_space<vmem>>, %arg5: memref<1x512xf32, #tpu.memory_space<vmem>>, %arg6: memref<1x512xf32, #tpu.memory_space<vmem>>, %arg7: memref<1x512xf32, #tpu.memory_space<vmem>>, %arg8: memref<512x64xbf16, #tpu.memory_space<vmem>>, %arg9: memref<1x64xf32, #tpu.memory_space<vmem>>, %arg10: memref<1x1xf32, #tpu.memory_space<smem>>, %arg11: memref<64x8xbf16, #tpu.memory_space<vmem>>, %arg12: memref<1x8xf32, #tpu.memory_space<vmem>>, %arg13: memref<8x8xf32, #tpu.memory_space<vmem>>, %arg14: memref<8x512xf32, #tpu.memory_space<vmem>>) attributes {dimension_semantics = [#tpu.dimension_semantics<arbitrary>], iteration_bounds = array<i64: 4>, scalar_prefetch = 0 : i64, scratch_operands = 1 : i64, tpu.core_type = #tpu.core_type<tc>, window_params = [{transform_indices = @transform_0, window_bounds = array<i64: 8, 1024>}, {transform_indices = @transform_1, window_bounds = array<i64: 1024, 512>}, {pipeline_mode = #tpu.pipeline_mode<synchronous>, transform_indices = @transform_2, window_bounds = array<i64: 1, 512>}, {pipeline_mode = #tpu.pipeline_mode<synchronous>, transform_indices = @transform_3, window_bounds = array<i64: 1, 512>}, {pipeline_mode = #tpu.pipeline_mode<synchronous>, transform_indices = @transform_4, window_bounds = array<i64: 1, 512>}, {pipeline_mode = #tpu.pipeline_mode<synchronous>, transform_indices = @transform_5, window_bounds = array<i64: 1, 512>}, {pipeline_mode = #tpu.pipeline_mode<synchronous>, transform_indices = @transform_6, window_bounds = array<i64: 1, 512>}, {pipeline_mode = #tpu.pipeline_mode<synchronous>, transform_indices = @transform_7, window_bounds = array<i64: 512, 64>}, {pipeline_mode = #tpu.pipeline_mode<synchronous>, transform_indices = @transform_8, window_bounds = array<i64: 1, 64>}, {transform_indices = @transform_9, window_bounds = array<i64: 1, 1>}, {pipeline_mode = #tpu.pipeline_mode<synchronous>, transform_indices = @transform_10, window_bounds = array<i64: 64, 8>}, {pipeline_mode = #tpu.pipeline_mode<synchronous>, transform_indices = @transform_11, window_bounds = array<i64: 1, 8>}, {pipeline_mode = #tpu.pipeline_mode<synchronous>, transform_indices = @transform_12, window_bounds = array<i64: 8, 8>}]} {
    %c0_i32 = arith.constant 0 : i32
    %0 = arith.cmpi eq, %arg0, %c0_i32 : i32
    %1 = arith.extui %0 : i1 to i32
    %c0_i32_0 = arith.constant 0 : i32
    %2 = arith.cmpi ne, %1, %c0_i32_0 : i32
    scf.if %2 {
      %cst_9 = arith.constant 0.000000e+00 : f32
      %12 = vector.broadcast %cst_9 : f32 to vector<8x512xf32>
      %c0_10 = arith.constant 0 : index
      %c0_11 = arith.constant 0 : index
      %13 = vector.load %arg14[%c0_10, %c0_11] : memref<8x512xf32, #tpu.memory_space<vmem>>, vector<8x512xf32>
      tpu.vector_store %arg14[%c0_10, %c0_11], %12 {strides = array<i32>} : memref<8x512xf32, #tpu.memory_space<vmem>>, vector<8x512xf32>,
    } else {
    }
    %c0 = arith.constant 0 : index
    %c0_1 = arith.constant 0 : index
    %3 = vector.load %arg14[%c0, %c0_1] : memref<8x512xf32, #tpu.memory_space<vmem>>, vector<8x512xf32>
    %c0_2 = arith.constant 0 : index
    %c0_3 = arith.constant 0 : index
    %4 = vector.load %arg1[%c0_2, %c0_3] : memref<8x1024xbf16, #tpu.memory_space<vmem>>, vector<8x1024xbf16>
    %c0_4 = arith.constant 0 : index
    %c0_5 = arith.constant 0 : index
    %5 = vector.load %arg2[%c0_4, %c0_5] : memref<1024x512xbf16, #tpu.memory_space<vmem>>, vector<1024x512xbf16>
    %cst = arith.constant dense<0.000000e+00> : vector<8x512xf32>
    %6 = tpu.matmul %4, %5, %cst {dimension_numbers = #tpu.dot_dimension_numbers<[1], [0], [0], [1], [0, 0, 1, 1], [], []>} : vector<8x1024xbf16>, vector<1024x512xbf16>, vector<8x512xf32> -> vector<8x512xf32>
    %7 = arith.addf %3, %6 : vector<8x512xf32>
    %c0_6 = arith.constant 0 : index
    %c0_7 = arith.constant 0 : index
    %8 = vector.load %arg14[%c0_6, %c0_7] : memref<8x512xf32, #tpu.memory_space<vmem>>, vector<8x512xf32>
    tpu.vector_store %arg14[%c0_6, %c0_7], %7 {strides = array<i32>} : memref<8x512xf32, #tpu.memory_space<vmem>>, vector<8x512xf32>,
    %c3_i32 = arith.constant 3 : i32
    %9 = arith.cmpi eq, %arg0, %c3_i32 : i32
    %10 = arith.extui %9 : i1 to i32
    %c0_i32_8 = arith.constant 0 : i32
    %11 = arith.cmpi ne, %10, %c0_i32_8 : i32
    scf.if %11 {
      %c0_9 = arith.constant 0 : index
      %c0_10 = arith.constant 0 : index
      %12 = vector.load %arg14[%c0_9, %c0_10] : memref<8x512xf32, #tpu.memory_space<vmem>>, vector<8x512xf32>
      %c0_11 = arith.constant 0 : index
      %c0_12 = arith.constant 0 : index
      %13 = vector.load %arg3[%c0_11, %c0_12] : memref<1x512xf32, #tpu.memory_space<vmem>>, vector<1x512xf32>
      %14 = vector.broadcast %13 : vector<1x512xf32> to vector<8x512xf32>
      %15 = arith.addf %12, %14 : vector<8x512xf32>
      %c0_13 = arith.constant 0 : index
      %c0_14 = arith.constant 0 : index
      %16 = vector.load %arg7[%c0_13, %c0_14] : memref<1x512xf32, #tpu.memory_space<vmem>>, vector<1x512xf32>
      %cst_15 = arith.constant 9.99999974E-6 : f32
      %17 = vector.broadcast %cst_15 : f32 to vector<1x512xf32>
      %18 = arith.addf %16, %17 : vector<1x512xf32>
      %19 = math.rsqrt %18 : vector<1x512xf32>
      %c0_16 = arith.constant 0 : index
      %c0_17 = arith.constant 0 : index
      %20 = vector.load %arg6[%c0_16, %c0_17] : memref<1x512xf32, #tpu.memory_space<vmem>>, vector<1x512xf32>
      %21 = vector.broadcast %20 : vector<1x512xf32> to vector<8x512xf32>
      %22 = arith.subf %15, %21 : vector<8x512xf32>
      %c0_18 = arith.constant 0 : index
      %c0_19 = arith.constant 0 : index
      %23 = vector.load %arg4[%c0_18, %c0_19] : memref<1x512xf32, #tpu.memory_space<vmem>>, vector<1x512xf32>
      %24 = arith.mulf %19, %23 : vector<1x512xf32>
      %25 = vector.broadcast %24 : vector<1x512xf32> to vector<8x512xf32>
      %26 = arith.mulf %22, %25 : vector<8x512xf32>
      %c0_20 = arith.constant 0 : index
      %c0_21 = arith.constant 0 : index
      %27 = vector.load %arg5[%c0_20, %c0_21] : memref<1x512xf32, #tpu.memory_space<vmem>>, vector<1x512xf32>
      %28 = vector.broadcast %27 : vector<1x512xf32> to vector<8x512xf32>
      %29 = arith.addf %26, %28 : vector<8x512xf32>
      %cst_22 = arith.constant 0.000000e+00 : f32
      %30 = vector.broadcast %cst_22 : f32 to vector<8x512xf32>
      %31 = arith.maximumf %29, %30 : vector<8x512xf32>
      %32 = arith.truncf %31 : vector<8x512xf32> to vector<8x512xbf16>
      %c0_23 = arith.constant 0 : index
      %c0_24 = arith.constant 0 : index
      %33 = vector.load %arg8[%c0_23, %c0_24] : memref<512x64xbf16, #tpu.memory_space<vmem>>, vector<512x64xbf16>
      %cst_25 = arith.constant dense<0.000000e+00> : vector<8x64xf32>
      %34 = tpu.matmul %32, %33, %cst_25 {dimension_numbers = #tpu.dot_dimension_numbers<[1], [0], [0], [1], [0, 0, 1, 1], [], []>} : vector<8x512xbf16>, vector<512x64xbf16>, vector<8x64xf32> -> vector<8x64xf32>
      %c0_26 = arith.constant 0 : index
      %c0_27 = arith.constant 0 : index
      %35 = vector.load %arg9[%c0_26, %c0_27] : memref<1x64xf32, #tpu.memory_space<vmem>>, vector<1x64xf32>
      %36 = vector.broadcast %35 : vector<1x64xf32> to vector<8x64xf32>
      %37 = arith.addf %34, %36 : vector<8x64xf32>
      %c0_28 = arith.constant 0 : index
      %c0_29 = arith.constant 0 : index
      %38 = memref.load %arg10[%c0_28, %c0_29] : memref<1x1xf32, #tpu.memory_space<smem>>
      %cst_30 = arith.constant 0.000000e+00 : f32
      %39 = vector.broadcast %cst_30 : f32 to vector<8x64xf32>
      %40 = arith.cmpf oge, %37, %39 : vector<8x64xf32>
      %41 = vector.broadcast %38 : f32 to vector<8x64xf32>
      %42 = arith.mulf %41, %37 : vector<8x64xf32>
      %43 = arith.select %40, %37, %42 : vector<8x64xi1>, vector<8x64xf32>
      %44 = arith.truncf %43 : vector<8x64xf32> to vector<8x64xbf16>
      %c0_31 = arith.constant 0 : index
      %c0_32 = arith.constant 0 : index
      %45 = vector.load %arg11[%c0_31, %c0_32] : memref<64x8xbf16, #tpu.memory_space<vmem>>, vector<64x8xbf16>
      %cst_33 = arith.constant dense<0.000000e+00> : vector<8x8xf32>
      %46 = tpu.matmul %44, %45, %cst_33 {dimension_numbers = #tpu.dot_dimension_numbers<[1], [0], [0], [1], [0, 0, 1, 1], [], []>} : vector<8x64xbf16>, vector<64x8xbf16>, vector<8x8xf32> -> vector<8x8xf32>
      %c0_34 = arith.constant 0 : index
      %c0_35 = arith.constant 0 : index
      %47 = vector.load %arg12[%c0_34, %c0_35] : memref<1x8xf32, #tpu.memory_space<vmem>>, vector<1x8xf32>
      %48 = vector.broadcast %47 : vector<1x8xf32> to vector<8x8xf32>
      %49 = arith.addf %46, %48 : vector<8x8xf32>
      %c0_36 = arith.constant 0 : index
      %c0_37 = arith.constant 0 : index
      %50 = vector.load %arg13[%c0_36, %c0_37] : memref<8x8xf32, #tpu.memory_space<vmem>>, vector<8x8xf32>
      tpu.vector_store %arg13[%c0_36, %c0_37], %49 {strides = array<i32>} : memref<8x8xf32, #tpu.memory_space<vmem>>, vector<8x8xf32>,
    } else {
    }
    return
  }
  func.func @transform_0(%arg0: i32) -> (i32, i32) {
    %c0_i32 = arith.constant 0 : i32
    %c0_i32_0 = arith.constant 0 : i32
    return %c0_i32, %arg0 : i32, i32
  }
  func.func @transform_1(%arg0: i32) -> (i32, i32) {
    %c0_i32 = arith.constant 0 : i32
    %c0_i32_0 = arith.constant 0 : i32
    return %arg0, %c0_i32 : i32, i32
  }
  func.func @transform_2(%arg0: i32) -> (i32, i32) {
    %c0_i32 = arith.constant 0 : i32
    %c0_i32_0 = arith.constant 0 : i32
    %c0_i32_1 = arith.constant 0 : i32
    return %c0_i32, %c0_i32_0 : i32, i32
  }
  func.func @transform_3(%arg0: i32) -> (i32, i32) {
    %c0_i32 = arith.constant 0 : i32
    %c0_i32_0 = arith.constant 0 : i32
    %c0_i32_1 = arith.constant 0 : i32
    return %c0_i32, %c0_i32_0 : i32, i32
  }
  func.func @transform_4(%arg0: i32) -> (i32, i32) {
    %c0_i32 = arith.constant 0 : i32
    %c0_i32_0 = arith.constant 0 : i32
    %c0_i32_1 = arith.constant 0 : i32
    return %c0_i32, %c0_i32_0 : i32, i32
  }
  func.func @transform_5(%arg0: i32) -> (i32, i32) {
    %c0_i32 = arith.constant 0 : i32
    %c0_i32_0 = arith.constant 0 : i32
    %c0_i32_1 = arith.constant 0 : i32
    return %c0_i32, %c0_i32_0 : i32, i32
  }
  func.func @transform_6(%arg0: i32) -> (i32, i32) {
    %c0_i32 = arith.constant 0 : i32
    %c0_i32_0 = arith.constant 0 : i32
    %c0_i32_1 = arith.constant 0 : i32
    return %c0_i32, %c0_i32_0 : i32, i32
  }
  func.func @transform_7(%arg0: i32) -> (i32, i32) {
    %c0_i32 = arith.constant 0 : i32
    %c0_i32_0 = arith.constant 0 : i32
    %c0_i32_1 = arith.constant 0 : i32
    return %c0_i32, %c0_i32_0 : i32, i32
  }
  func.func @transform_8(%arg0: i32) -> (i32, i32) {
    %c0_i32 = arith.constant 0 : i32
    %c0_i32_0 = arith.constant 0 : i32
    %c0_i32_1 = arith.constant 0 : i32
    return %c0_i32, %c0_i32_0 : i32, i32
  }
  func.func @transform_9(%arg0: i32) -> (i32, i32) {
    %c0_i32 = arith.constant 0 : i32
    %c0_i32_0 = arith.constant 0 : i32
    %c0_i32_1 = arith.constant 0 : i32
    return %c0_i32, %c0_i32_0 : i32, i32
  }
  func.func @transform_10(%arg0: i32) -> (i32, i32) {
    %c0_i32 = arith.constant 0 : i32
    %c0_i32_0 = arith.constant 0 : i32
    %c0_i32_1 = arith.constant 0 : i32
    return %c0_i32, %c0_i32_0 : i32, i32
  }
  func.func @transform_11(%arg0: i32) -> (i32, i32) {
    %c0_i32 = arith.constant 0 : i32
    %c0_i32_0 = arith.constant 0 : i32
    %c0_i32_1 = arith.constant 0 : i32
    return %c0_i32, %c0_i32_0 : i32, i32
  }
  func.func @transform_12(%arg0: i32) -> (i32, i32) {
    %c0_i32 = arith.constant 0 : i32
    %c0_i32_0 = arith.constant 0 : i32
    %c0_i32_1 = arith.constant 0 : i32
    return %c0_i32, %c0_i32_0 : i32, i32
  }
}

</mosaic_0001>

<llo_original>
// kernel: siamese_pinet_forward.3
$region0: #{siamese_pinet_forward.3}
  #allocation0 [shape = 'u32[]', space=smem, size = 0x4, offset = 0x4, fixed_abs, tag = 'smem constant byte address 0x4 - core index']
  #allocation1 [shape = 'u32[144,128]{1,0:T(1,128)}', space=vmem, size = 0x12000, scoped, tag = 'internal scratch']
  #allocation2 [shape = 'f32[8,512]{1,0:T(8,128)}', space=vmem, size = 0x4000, scoped, tag = 'scratch operand']
  #allocation3 [shape = 'f32[1,1]{1,0:T(1,128)S(6)}', space=smem, size = 0x200, scoped, tag = 'scoped memory for siamese_pinet_forward.3']
  %s0 = inlined_call_operand.vmem [shape: bf16[8,4096], index: 0, kind: input, shape index: {}]
  %s1 = inlined_call_operand.vmem [shape: bf16[4096,512], index: 1, kind: input, shape index: {}]
  %s2 = inlined_call_operand.vmem [shape: f32[1,512], index: 2, kind: input, shape index: {}]
  %s3 = inlined_call_operand.vmem [shape: f32[1,512], index: 3, kind: input, shape index: {}]
  %s4 = inlined_call_operand.vmem [shape: f32[1,512], index: 4, kind: input, shape index: {}]
  %s5 = inlined_call_operand.vmem [shape: f32[1,512], index: 5, kind: input, shape index: {}]
  %s6 = inlined_call_operand.vmem [shape: f32[1,512], index: 6, kind: input, shape index: {}]
  %s7 = inlined_call_operand.vmem [shape: bf16[512,64], index: 7, kind: input, shape index: {}]
  %s8 = inlined_call_operand.vmem [shape: f32[1,64], index: 8, kind: input, shape index: {}]
  %s9 = inlined_call_operand.<no memory space> [shape: f32[1,1], index: 9, kind: input, shape index: {}]
  %s10 = inlined_call_operand.vmem [shape: bf16[64,8], index: 10, kind: input, shape index: {}]
  %s11 = inlined_call_operand.vmem [shape: f32[1,8], index: 11, kind: input, shape index: {}]
  %s12 = inlined_call_operand.vmem [shape: f32[8,8], index: 12, kind: output, shape index: {}]
  %s13 = sld [smem:[#allocation0]]
  $region89: #{siamese_pinet_forward.3} parent=0
    _
  %s15 = ssub.s32 1, %s13
  %s16 = scalar_select 0, %s15, %s13
  %17 = sst [smem:[#allocation3]] %s9
  loop: start=0, step=1, limit=6
  $region2: #{siamese_pinet_forward.3} parent=0 // loop_pre_header
    _
  $region3: #{siamese_pinet_forward.3} parent=0 // loop_header
    %s19 = sphi 0, %s23
    %p20 = scmp.ge.s32.totalorder %s19, 6
    %s29 = sphi 0, %s31
    %s32 = sphi 0, %s29
    %s33 = sphi 0, %s32
    %s49 = sphi 0, %s33
    %s55 = sphi 0, %s57
    %s58 = sphi 0, %s55
    %s59 = sphi 0, %s58
    %s75 = sphi 0, %s59
    %s79 = sphi 0, %s79
    %s81 = sphi 0, %s79
    %s82 = sphi 0, %s81
    %s96 = sphi 0, %s82
    %s100 = sphi 0, %s100
    %s102 = sphi 0, %s100
    %s103 = sphi 0, %s102
    %s117 = sphi 0, %s103
    %s121 = sphi 0, %s121
    %s123 = sphi 0, %s121
    %s124 = sphi 0, %s123
    %s138 = sphi 0, %s124
    %s142 = sphi 0, %s142
    %s144 = sphi 0, %s142
    %s145 = sphi 0, %s144
    %s159 = sphi 0, %s145
    %s163 = sphi 0, %s163
    %s165 = sphi 0, %s163
    %s166 = sphi 0, %s165
    %s180 = sphi 0, %s166
    %s184 = sphi 0, %s184
    %s186 = sphi 0, %s184
    %s187 = sphi 0, %s186
    %s201 = sphi 0, %s187
    %s205 = sphi 0, %s205
    %s207 = sphi 0, %s205
    %s208 = sphi 0, %s207
    %s222 = sphi 0, %s208
    %s226 = sphi 0, %s226
    %s228 = sphi 0, %s226
    %s229 = sphi 0, %s228
    %s243 = sphi 0, %s229
    %s247 = sphi 0, %s247
    %s249 = sphi 0, %s247
    %s250 = sphi 0, %s249
    %s264 = sphi 0, %s250
    %s268 = sphi 0, %s268
    %s270 = sphi 0, %s268
    %s271 = sphi 0, %s270
    %s285 = sphi 0, %s271
    %s289 = sphi 0, %s289
    %s291 = sphi 0, %s289
    %s292 = sphi 0, %s291
    %s306 = sphi 0, %s292
  $region4: #{siamese_pinet_forward.3} parent=0 // loop_header_branch
    %22 = sbr.rel (%p20) target = $region8
  $region5: #{siamese_pinet_forward.3} parent=0 // loop_body
    %s24 = ssub.s32 %s19, 1
    %s25 = ssub.s32 %s19, 2
    %s26 = sadd.s32 %s19, 1
    %s27 = ssub.s32 %s19, %s26
    %p28 = scmp.eq.s32.totalorder %s27, 0
    %s30 = sadd.s32 %s29, 1
    %s31 = scalar_select %p28, %s29, %s30
    %p34 = pneg %p28
    %p35 = scmp.eq.s32.totalorder %s19, 3
    %p36 = por %p34, %p35
    %p37 = scmp.ne.s32.totalorder %s29, %s32
    %p38 = scmp.eq.s32.totalorder %s19, 0
    %p39 = por %p37, %p38
    %p40 = scmp.ne.s32.totalorder %s29, %s32
    %p41 = scmp.eq.s32.totalorder %s24, 3
    %p42 = por %p40, %p41
    %p43 = scmp.ne.s32.totalorder %s32, %s33
    %p44 = scmp.eq.s32.totalorder %s24, 0
    %p45 = por %p43, %p44
    %p46 = scmp.ne.s32.totalorder %s32, %s33
    %p47 = scmp.eq.s32.totalorder %s25, 3
    %p48 = por %p46, %p47
    %p50 = scmp.ne.s32.totalorder %s33, %s49
    %p51 = scmp.eq.s32.totalorder %s25, 0
    %p52 = por %p50, %p51
    %s53 = ssub.s32 %s19, %s26
    %p54 = scmp.eq.s32.totalorder %s53, 0
    %s56 = sadd.s32 %s55, 1
    %s57 = scalar_select %p54, %s55, %s56
    %p60 = pneg %p54
    %p61 = scmp.eq.s32.totalorder %s19, 3
    %p62 = por %p60, %p61
    %p63 = scmp.ne.s32.totalorder %s55, %s58
    %p64 = scmp.eq.s32.totalorder %s19, 0
    %p65 = por %p63, %p64
    %p66 = scmp.ne.s32.totalorder %s55, %s58
    %p67 = scmp.eq.s32.totalorder %s24, 3
    %p68 = por %p66, %p67
    %p69 = scmp.ne.s32.totalorder %s58, %s59
    %p70 = scmp.eq.s32.totalorder %s24, 0
    %p71 = por %p69, %p70
    %p72 = scmp.ne.s32.totalorder %s58, %s59
    %p73 = scmp.eq.s32.totalorder %s25, 3
    %p74 = por %p72, %p73
    %p76 = scmp.ne.s32.totalorder %s59, %s75
    %p77 = scmp.eq.s32.totalorder %s25, 0
    %p78 = por %p76, %p77
    %s80 = sadd.s32 %s79, 1
    %p83 = scmp.eq.s32.totalorder %s19, 3
    %p84 = scmp.ne.s32.totalorder %s79, %s81
    %p85 = scmp.eq.s32.totalorder %s19, 0
    %p86 = por %p84, %p85
    %p87 = scmp.ne.s32.totalorder %s79, %s81
    %p88 = scmp.eq.s32.totalorder %s24, 3
    %p89 = por %p87, %p88
    %p90 = scmp.ne.s32.totalorder %s81, %s82
    %p91 = scmp.eq.s32.totalorder %s24, 0
    %p92 = por %p90, %p91
    %p93 = scmp.ne.s32.totalorder %s81, %s82
    %p94 = scmp.eq.s32.totalorder %s25, 3
    %p95 = por %p93, %p94
    %p97 = scmp.ne.s32.totalorder %s82, %s96
    %p98 = scmp.eq.s32.totalorder %s25, 0
    %p99 = por %p97, %p98
    %s101 = sadd.s32 %s100, 1
    %p104 = scmp.eq.s32.totalorder %s19, 3
    %p105 = scmp.ne.s32.totalorder %s100, %s102
    %p106 = scmp.eq.s32.totalorder %s19, 0
    %p107 = por %p105, %p106
    %p108 = scmp.ne.s32.totalorder %s100, %s102
    %p109 = scmp.eq.s32.totalorder %s24, 3
    %p110 = por %p108, %p109
    %p111 = scmp.ne.s32.totalorder %s102, %s103
    %p112 = scmp.eq.s32.totalorder %s24, 0
    %p113 = por %p111, %p112
    %p114 = scmp.ne.s32.totalorder %s102, %s103
    %p115 = scmp.eq.s32.totalorder %s25, 3
    %p116 = por %p114, %p115
    %p118 = scmp.ne.s32.totalorder %s103, %s117
    %p119 = scmp.eq.s32.totalorder %s25, 0
    %p120 = por %p118, %p119
    %s122 = sadd.s32 %s121, 1
    %p125 = scmp.eq.s32.totalorder %s19, 3
    %p126 = scmp.ne.s32.totalorder %s121, %s123
    %p127 = scmp.eq.s32.totalorder %s19, 0
    %p128 = por %p126, %p127
    %p129 = scmp.ne.s32.totalorder %s121, %s123
    %p130 = scmp.eq.s32.totalorder %s24, 3
    %p131 = por %p129, %p130
    %p132 = scmp.ne.s32.totalorder %s123, %s124
    %p133 = scmp.eq.s32.totalorder %s24, 0
    %p134 = por %p132, %p133
    %p135 = scmp.ne.s32.totalorder %s123, %s124
    %p136 = scmp.eq.s32.totalorder %s25, 3
    %p137 = por %p135, %p136
    %p139 = scmp.ne.s32.totalorder %s124, %s138
    %p140 = scmp.eq.s32.totalorder %s25, 0
    %p141 = por %p139, %p140
    %s143 = sadd.s32 %s142, 1
    %p146 = scmp.eq.s32.totalorder %s19, 3
    %p147 = scmp.ne.s32.totalorder %s142, %s144
    %p148 = scmp.eq.s32.totalorder %s19, 0
    %p149 = por %p147, %p148
    %p150 = scmp.ne.s32.totalorder %s142, %s144
    %p151 = scmp.eq.s32.totalorder %s24, 3
    %p152 = por %p150, %p151
    %p153 = scmp.ne.s32.totalorder %s144, %s145
    %p154 = scmp.eq.s32.totalorder %s24, 0
    %p155 = por %p153, %p154
    %p156 = scmp.ne.s32.totalorder %s144, %s145
    %p157 = scmp.eq.s32.totalorder %s25, 3
    %p158 = por %p156, %p157
    %p160 = scmp.ne.s32.totalorder %s145, %s159
    %p161 = scmp.eq.s32.totalorder %s25, 0
    %p162 = por %p160, %p161
    %s164 = sadd.s32 %s163, 1
    %p167 = scmp.eq.s32.totalorder %s19, 3
    %p168 = scmp.ne.s32.totalorder %s163, %s165
    %p169 = scmp.eq.s32.totalorder %s19, 0
    %p170 = por %p168, %p169
    %p171 = scmp.ne.s32.totalorder %s163, %s165
    %p172 = scmp.eq.s32.totalorder %s24, 3
    %p173 = por %p171, %p172
    %p174 = scmp.ne.s32.totalorder %s165, %s166
    %p175 = scmp.eq.s32.totalorder %s24, 0
    %p176 = por %p174, %p175
    %p177 = scmp.ne.s32.totalorder %s165, %s166
    %p178 = scmp.eq.s32.totalorder %s25, 3
    %p179 = por %p177, %p178
    %p181 = scmp.ne.s32.totalorder %s166, %s180
    %p182 = scmp.eq.s32.totalorder %s25, 0
    %p183 = por %p181, %p182
    %s185 = sadd.s32 %s184, 1
    %p188 = scmp.eq.s32.totalorder %s19, 3
    %p189 = scmp.ne.s32.totalorder %s184, %s186
    %p190 = scmp.eq.s32.totalorder %s19, 0
    %p191 = por %p189, %p190
    %p192 = scmp.ne.s32.totalorder %s184, %s186
    %p193 = scmp.eq.s32.totalorder %s24, 3
    %p194 = por %p192, %p193
    %p195 = scmp.ne.s32.totalorder %s186, %s187
    %p196 = scmp.eq.s32.totalorder %s24, 0
    %p197 = por %p195, %p196
    %p198 = scmp.ne.s32.totalorder %s186, %s187
    %p199 = scmp.eq.s32.totalorder %s25, 3
    %p200 = por %p198, %p199
    %p202 = scmp.ne.s32.totalorder %s187, %s201
    %p203 = scmp.eq.s32.totalorder %s25, 0
    %p204 = por %p202, %p203
    %s206 = sadd.s32 %s205, 1
    %p209 = scmp.eq.s32.totalorder %s19, 3
    %p210 = scmp.ne.s32.totalorder %s205, %s207
    %p211 = scmp.eq.s32.totalorder %s19, 0
    %p212 = por %p210, %p211
    %p213 = scmp.ne.s32.totalorder %s205, %s207
    %p214 = scmp.eq.s32.totalorder %s24, 3
    %p215 = por %p213, %p214
    %p216 = scmp.ne.s32.totalorder %s207, %s208
    %p217 = scmp.eq.s32.totalorder %s24, 0
    %p218 = por %p216, %p217
    %p219 = scmp.ne.s32.totalorder %s207, %s208
    %p220 = scmp.eq.s32.totalorder %s25, 3
    %p221 = por %p219, %p220
    %p223 = scmp.ne.s32.totalorder %s208, %s222
    %p224 = scmp.eq.s32.totalorder %s25, 0
    %p225 = por %p223, %p224
    %s227 = sadd.s32 %s226, 1
    %p230 = scmp.eq.s32.totalorder %s19, 3
    %p231 = scmp.ne.s32.totalorder %s226, %s228
    %p232 = scmp.eq.s32.totalorder %s19, 0
    %p233 = por %p231, %p232
    %p234 = scmp.ne.s32.totalorder %s226, %s228
    %p235 = scmp.eq.s32.totalorder %s24, 3
    %p236 = por %p234, %p235
    %p237 = scmp.ne.s32.totalorder %s228, %s229
    %p238 = scmp.eq.s32.totalorder %s24, 0
    %p239 = por %p237, %p238
    %p240 = scmp.ne.s32.totalorder %s228, %s229
    %p241 = scmp.eq.s32.totalorder %s25, 3
    %p242 = por %p240, %p241
    %p244 = scmp.ne.s32.totalorder %s229, %s243
    %p245 = scmp.eq.s32.totalorder %s25, 0
    %p246 = por %p244, %p245
    %s248 = sadd.s32 %s247, 1
    %p251 = scmp.eq.s32.totalorder %s19, 3
    %p252 = scmp.ne.s32.totalorder %s247, %s249
    %p253 = scmp.eq.s32.totalorder %s19, 0
    %p254 = por %p252, %p253
    %p255 = scmp.ne.s32.totalorder %s247, %s249
    %p256 = scmp.eq.s32.totalorder %s24, 3
    %p257 = por %p255, %p256
    %p258 = scmp.ne.s32.totalorder %s249, %s250
    %p259 = scmp.eq.s32.totalorder %s24, 0
    %p260 = por %p258, %p259
    %p261 = scmp.ne.s32.totalorder %s249, %s250
    %p262 = scmp.eq.s32.totalorder %s25, 3
    %p263 = por %p261, %p262
    %p265 = scmp.ne.s32.totalorder %s250, %s264
    %p266 = scmp.eq.s32.totalorder %s25, 0
    %p267 = por %p265, %p266
    %s269 = sadd.s32 %s268, 1
    %p272 = scmp.eq.s32.totalorder %s19, 3
    %p273 = scmp.ne.s32.totalorder %s268, %s270
    %p274 = scmp.eq.s32.totalorder %s19, 0
    %p275 = por %p273, %p274
    %p276 = scmp.ne.s32.totalorder %s268, %s270
    %p277 = scmp.eq.s32.totalorder %s24, 3
    %p278 = por %p276, %p277
    %p279 = scmp.ne.s32.totalorder %s270, %s271
    %p280 = scmp.eq.s32.totalorder %s24, 0
    %p281 = por %p279, %p280
    %p282 = scmp.ne.s32.totalorder %s270, %s271
    %p283 = scmp.eq.s32.totalorder %s25, 3
    %p284 = por %p282, %p283
    %p286 = scmp.ne.s32.totalorder %s271, %s285
    %p287 = scmp.eq.s32.totalorder %s25, 0
    %p288 = por %p286, %p287
    %s290 = sadd.s32 %s289, 1
    %p293 = scmp.eq.s32.totalorder %s19, 3
    %p294 = scmp.ne.s32.totalorder %s289, %s291
    %p295 = scmp.eq.s32.totalorder %s19, 0
    %p296 = por %p294, %p295
    %p297 = scmp.ne.s32.totalorder %s289, %s291
    %p298 = scmp.eq.s32.totalorder %s24, 3
    %p299 = por %p297, %p298
    %p300 = scmp.ne.s32.totalorder %s291, %s292
    %p301 = scmp.eq.s32.totalorder %s24, 0
    %p302 = por %p300, %p301
    %p303 = scmp.ne.s32.totalorder %s291, %s292
    %p304 = scmp.eq.s32.totalorder %s25, 3
    %p305 = por %p303, %p304
    %p307 = scmp.ne.s32.totalorder %s292, %s306
    %p308 = scmp.eq.s32.totalorder %s25, 0
    %p309 = por %p307, %p308
    %p310 = scmp.le.s32.totalorder 1, %s19
    %p311 = scmp.lt.s32.totalorder %s19, 5
    %p312 = pnand %p310, %p311
    %p313 = pneg %p312
    // Predicated region
    $region9: #{siamese_pinet_forward.3} parent=5 // pred_check
      _
    $region10: #{siamese_pinet_forward.3} parent=5 // pred_check_branch
      %315 = sbr.rel (%p312) target = $region12
    $region11: #{siamese_pinet_forward.3} parent=5 // pred_region
      %s316 = ssub.s32 %s19, 1
      // Predicated region
      $region13: #{siamese_pinet_forward.3} parent=11 // pred_check
        %p317 = pneg %p92
      $region14: #{siamese_pinet_forward.3} parent=11 // pred_check_branch
        %319 = sbr.rel (%p317) target = $region16
      $region15: #{siamese_pinet_forward.3} parent=11 // pred_region
        _
      $region16: #{siamese_pinet_forward.3} parent=11 // pred_fallthru
        _
      // Predicated region
      $region17: #{siamese_pinet_forward.3} parent=11 // pred_check
        %p320 = pneg %p113
      $region18: #{siamese_pinet_forward.3} parent=11 // pred_check_branch
        %322 = sbr.rel (%p320) target = $region20
      $region19: #{siamese_pinet_forward.3} parent=11 // pred_region
        _
      $region20: #{siamese_pinet_forward.3} parent=11 // pred_fallthru
        _
      // Predicated region
      $region21: #{siamese_pinet_forward.3} parent=11 // pred_check
        %p323 = pneg %p134
      $region22: #{siamese_pinet_forward.3} parent=11 // pred_check_branch
        %325 = sbr.rel (%p323) target = $region24
      $region23: #{siamese_pinet_forward.3} parent=11 // pred_region
        _
      $region24: #{siamese_pinet_forward.3} parent=11 // pred_fallthru
        _
      // Predicated region
      $region25: #{siamese_pinet_forward.3} parent=11 // pred_check
        %p326 = pneg %p155
      $region26: #{siamese_pinet_forward.3} parent=11 // pred_check_branch
        %328 = sbr.rel (%p326) target = $region28
      $region27: #{siamese_pinet_forward.3} parent=11 // pred_region
        _
      $region28: #{siamese_pinet_forward.3} parent=11 // pred_fallthru
        _
      // Predicated region
      $region29: #{siamese_pinet_forward.3} parent=11 // pred_check
        %p329 = pneg %p176
      $region30: #{siamese_pinet_forward.3} parent=11 // pred_check_branch
        %331 = sbr.rel (%p329) target = $region32
      $region31: #{siamese_pinet_forward.3} parent=11 // pred_region
        _
      $region32: #{siamese_pinet_forward.3} parent=11 // pred_fallthru
        _
      // Predicated region
      $region33: #{siamese_pinet_forward.3} parent=11 // pred_check
        %p332 = pneg %p197
      $region34: #{siamese_pinet_forward.3} parent=11 // pred_check_branch
        %334 = sbr.rel (%p332) target = $region36
      $region35: #{siamese_pinet_forward.3} parent=11 // pred_region
        _
      $region36: #{siamese_pinet_forward.3} parent=11 // pred_fallthru
        _
      // Predicated region
      $region37: #{siamese_pinet_forward.3} parent=11 // pred_check
        %p335 = pneg %p218
      $region38: #{siamese_pinet_forward.3} parent=11 // pred_check_branch
        %337 = sbr.rel (%p335) target = $region40
      $region39: #{siamese_pinet_forward.3} parent=11 // pred_region
        _
      $region40: #{siamese_pinet_forward.3} parent=11 // pred_fallthru
        _
      // Predicated region
      $region41: #{siamese_pinet_forward.3} parent=11 // pred_check
        %p338 = pneg %p239
      $region42: #{siamese_pinet_forward.3} parent=11 // pred_check_branch
        %340 = sbr.rel (%p338) target = $region44
      $region43: #{siamese_pinet_forward.3} parent=11 // pred_region
        _
      $region44: #{siamese_pinet_forward.3} parent=11 // pred_fallthru
        _
      // Predicated region
      $region45: #{siamese_pinet_forward.3} parent=11 // pred_check
        %p341 = pneg %p260
      $region46: #{siamese_pinet_forward.3} parent=11 // pred_check_branch
        %343 = sbr.rel (%p341) target = $region48
      $region47: #{siamese_pinet_forward.3} parent=11 // pred_region
        _
      $region48: #{siamese_pinet_forward.3} parent=11 // pred_fallthru
        _
      // Predicated region
      $region49: #{siamese_pinet_forward.3} parent=11 // pred_check
        %p344 = pneg %p281
      $region50: #{siamese_pinet_forward.3} parent=11 // pred_check_branch
        %346 = sbr.rel (%p344) target = $region52
      $region51: #{siamese_pinet_forward.3} parent=11 // pred_region
        _
      $region52: #{siamese_pinet_forward.3} parent=11 // pred_fallthru
        _
    $region12: #{siamese_pinet_forward.3} parent=5 // pred_fallthru
      _
    %p347 = scmp.lt.s32.totalorder %s19, 4
    // Predicated region
    $region53: #{siamese_pinet_forward.3} parent=5 // pred_check
      %p348 = pneg %p347
    $region54: #{siamese_pinet_forward.3} parent=5 // pred_check_branch
      %350 = sbr.rel (%p348) target = $region56
    $region55: #{siamese_pinet_forward.3} parent=5 // pred_region
      // Predicated region
      $region57: #{siamese_pinet_forward.3} parent=55 // pred_check
        %p351 = pneg %p39
      $region58: #{siamese_pinet_forward.3} parent=55 // pred_check_branch
        %353 = sbr.rel (%p351) target = $region60
      $region59: #{siamese_pinet_forward.3} parent=55 // pred_region
        %s354 = smul.u32 8, %s19
        %p355 = scmp.lt.s32.totalorder %s354, 31
        %s356 = scalar_select %p355, %s354, 31
        %s357 = smul.addr %s356, 4
        %s358 = scalar_lea.vmem %s0, %s357
        %s359 = smul.u32 8, %s19
      $region60: #{siamese_pinet_forward.3} parent=55 // pred_fallthru
        _
      // Predicated region
      $region61: #{siamese_pinet_forward.3} parent=55 // pred_check
        %p360 = pneg %p65
      $region62: #{siamese_pinet_forward.3} parent=55 // pred_check_branch
        %362 = sbr.rel (%p360) target = $region64
      $region63: #{siamese_pinet_forward.3} parent=55 // pred_region
        %s363 = smul.u32 128, %s19
        %p364 = scmp.lt.s32.totalorder %s363, 511
        %s365 = scalar_select %p364, %s363, 511
        %s366 = smul.addr %s365, 4
        %s367 = smul.addr %s366, 4
        %s368 = scalar_lea.vmem %s1, %s367
        %s369 = smul.u32 128, %s19
      $region64: #{siamese_pinet_forward.3} parent=55 // pred_fallthru
        _
    $region56: #{siamese_pinet_forward.3} parent=5 // pred_fallthru
      _
    %p370 = scmp.le.s32.totalorder 1, %s19
    %p371 = scmp.lt.s32.totalorder %s19, 5
    %p372 = pnand %p370, %p371
    %p373 = pneg %p372
    // Predicated region
    $region65: #{siamese_pinet_forward.3} parent=5 // pred_check
      _
    $region66: #{siamese_pinet_forward.3} parent=5 // pred_check_branch
      %375 = sbr.rel (%p372) target = $region68
    $region67: #{siamese_pinet_forward.3} parent=5 // pred_region
      %s376 = ssub.s32 %s19, 1
      %s377 = smul.u32 8, %s24
      %p378 = scmp.lt.s32.totalorder %s377, 31
      %s379 = scalar_select %p378, %s377, 31
      %s380 = smul.addr %s379, 4
      %s381 = scalar_lea.vmem %s0, %s380
      %p382 = pneg %p45
      %p383 = pneg %p42
      %s384 = smul.u32 128, %s24
      %p385 = scmp.lt.s32.totalorder %s384, 511
      %s386 = scalar_select %p385, %s384, 511
      %s387 = smul.addr %s386, 4
      %s388 = smul.addr %s387, 4
      %s389 = scalar_lea.vmem %s1, %s388
      %p390 = pneg %p71
      %p391 = pneg %p68
      %p392 = pneg %p92
      %p393 = pneg %p89
      %p394 = pneg %p113
      %p395 = pneg %p110
      %p396 = pneg %p134
      %p397 = pneg %p131
      %p398 = pneg %p155
      %p399 = pneg %p152
      %p400 = pneg %p176
      %p401 = pneg %p173
      %p402 = pneg %p197
      %p403 = pneg %p194
      %p404 = pneg %p218
      %p405 = pneg %p215
      %p406 = pneg %p239
      %p407 = pneg %p236
      %p408 = pneg %p260
      %p409 = pneg %p257
      %p410 = pneg %p281
      %p411 = pneg %p278
      %p412 = pneg %p302
      %p413 = pneg %p299
      %s414 = smul.u32 8, %s24
      %p415 = scmp.lt.s32.totalorder %s414, 31
      %s416 = scalar_select %p415, %s414, 31
      %s417 = smul.addr %s416, 4
      %s418 = scalar_lea.vmem %s0, %s417
      %s419 = smul.u32 8, %s24
      %s420 = smul.u32 128, %s24
      %p421 = scmp.lt.s32.totalorder %s420, 511
      %s422 = scalar_select %p421, %s420, 511
      %s423 = smul.addr %s422, 4
      %s424 = smul.addr %s423, 4
      %s425 = scalar_lea.vmem %s1, %s424
      %s426 = smul.u32 128, %s24
      %p428 = scmp.eq.s32.totalorder %s24, 0
      // Predicated region
      $region69: #{siamese_pinet_forward.3} parent=67 // pred_check
        %p429 = pneg %p428
      $region70: #{siamese_pinet_forward.3} parent=67 // pred_check_branch
        %431 = sbr.rel (%p429) target = $region72
      $region71: #{siamese_pinet_forward.3} parent=67 // pred_region
        %432 = vst [vmem:[#allocation2] sm:$0xff] 0.0
        %433 = vst [vmem:[#allocation2 + $0x8] sm:$0xff] 0.0
        %434 = vst [vmem:[#allocation2 + $0x10] sm:$0xff] 0.0
        %435 = vst [vmem:[#allocation2 + $0x18] sm:$0xff] 0.0
      $region72: #{siamese_pinet_forward.3} parent=67 // pred_fallthru
        _
      %v436 = vld [vmem:[#allocation2] sm:$0xff]
      %v437 = vld [vmem:[#allocation2 + $0x8] sm:$0xff]
      %v438 = vld [vmem:[#allocation2 + $0x10] sm:$0xff]
      %v439 = vld [vmem:[#allocation2 + $0x18] sm:$0xff]
      %v440 = vld [vmem:[%s418] sm:$0xff]
      %v441 = vld [vmem:[%s418 + $0x8] sm:$0xff]
      %v442 = vld [vmem:[%s418 + $0x10] sm:$0xff]
      %v443 = vld [vmem:[%s418 + $0x18] sm:$0xff]
      %v444 = vld [vmem:[%s425] sm:$0xff]
      %v445 = vld [vmem:[%s425 + $0x8] sm:$0xff]
      %v446 = vld [vmem:[%s425 + $0x10] sm:$0xff]
      %v447 = vld [vmem:[%s425 + $0x18] sm:$0xff]
      %v448 = vld [vmem:[%s425 + $0x20] sm:$0xff]
      %v449 = vld [vmem:[%s425 + $0x28] sm:$0xff]
      %v450 = vld [vmem:[%s425 + $0x30] sm:$0xff]
      %v451 = vld [vmem:[%s425 + $0x38] sm:$0xff]
      %v452 = vld [vmem:[%s425 + $0x40] sm:$0xff]
      %v453 = vld [vmem:[%s425 + $0x48] sm:$0xff]
      %v454 = vld [vmem:[%s425 + $0x50] sm:$0xff]
      %v455 = vld [vmem:[%s425 + $0x58] sm:$0xff]
      %v456 = vld [vmem:[%s425 + $0x60] sm:$0xff]
      %v457 = vld [vmem:[%s425 + $0x68] sm:$0xff]
      %v458 = vld [vmem:[%s425 + $0x70] sm:$0xff]
      %v459 = vld [vmem:[%s425 + $0x78] sm:$0xff]
      %v460 = vld [vmem:[%s425 + $0x80] sm:$0xff]
      %v461 = vld [vmem:[%s425 + $0x88] sm:$0xff]
      %v462 = vld [vmem:[%s425 + $0x90] sm:$0xff]
      %v463 = vld [vmem:[%s425 + $0x98] sm:$0xff]
      %v464 = vld [vmem:[%s425 + $0xa0] sm:$0xff]
      %v465 = vld [vmem:[%s425 + $0xa8] sm:$0xff]
      %v466 = vld [vmem:[%s425 + $0xb0] sm:$0xff]
      %v467 = vld [vmem:[%s425 + $0xb8] sm:$0xff]
      %v468 = vld [vmem:[%s425 + $0xc0] sm:$0xff]
      %v469 = vld [vmem:[%s425 + $0xc8] sm:$0xff]
      %v470 = vld [vmem:[%s425 + $0xd0] sm:$0xff]
      %v471 = vld [vmem:[%s425 + $0xd8] sm:$0xff]
      %v472 = vld [vmem:[%s425 + $0xe0] sm:$0xff]
      %v473 = vld [vmem:[%s425 + $0xe8] sm:$0xff]
      %v474 = vld [vmem:[%s425 + $0xf0] sm:$0xff]
      %v475 = vld [vmem:[%s425 + $0xf8] sm:$0xff]
      %v476 = vld [vmem:[%s425 + $0x100] sm:$0xff]
      %v477 = vld [vmem:[%s425 + $0x108] sm:$0xff]
      %v478 = vld [vmem:[%s425 + $0x110] sm:$0xff]
      %v479 = vld [vmem:[%s425 + $0x118] sm:$0xff]
      %v480 = vld [vmem:[%s425 + $0x120] sm:$0xff]
      %v481 = vld [vmem:[%s425 + $0x128] sm:$0xff]
      %v482 = vld [vmem:[%s425 + $0x130] sm:$0xff]
      %v483 = vld [vmem:[%s425 + $0x138] sm:$0xff]
      %v484 = vld [vmem:[%s425 + $0x140] sm:$0xff]
      %v485 = vld [vmem:[%s425 + $0x148] sm:$0xff]
      %v486 = vld [vmem:[%s425 + $0x150] sm:$0xff]
      %v487 = vld [vmem:[%s425 + $0x158] sm:$0xff]
      %v488 = vld [vmem:[%s425 + $0x160] sm:$0xff]
      %v489 = vld [vmem:[%s425 + $0x168] sm:$0xff]
      %v490 = vld [vmem:[%s425 + $0x170] sm:$0xff]
      %v491 = vld [vmem:[%s425 + $0x178] sm:$0xff]
      %v492 = vld [vmem:[%s425 + $0x180] sm:$0xff]
      %v493 = vld [vmem:[%s425 + $0x188] sm:$0xff]
      %v494 = vld [vmem:[%s425 + $0x190] sm:$0xff]
      %v495 = vld [vmem:[%s425 + $0x198] sm:$0xff]
      %v496 = vld [vmem:[%s425 + $0x1a0] sm:$0xff]
      %v497 = vld [vmem:[%s425 + $0x1a8] sm:$0xff]
      %v498 = vld [vmem:[%s425 + $0x1b0] sm:$0xff]
      %v499 = vld [vmem:[%s425 + $0x1b8] sm:$0xff]
      %v500 = vld [vmem:[%s425 + $0x1c0] sm:$0xff]
      %v501 = vld [vmem:[%s425 + $0x1c8] sm:$0xff]
      %v502 = vld [vmem:[%s425 + $0x1d0] sm:$0xff]
      %v503 = vld [vmem:[%s425 + $0x1d8] sm:$0xff]
      %v504 = vld [vmem:[%s425 + $0x1e0] sm:$0xff]
      %v505 = vld [vmem:[%s425 + $0x1e8] sm:$0xff]
      %v506 = vld [vmem:[%s425 + $0x1f0] sm:$0xff]
      %v507 = vld [vmem:[%s425 + $0x1f8] sm:$0xff]
      %v508 = vld [vmem:[%s425 + $0x200] sm:$0xff]
      %v509 = vld [vmem:[%s425 + $0x208] sm:$0xff]
      %v510 = vld [vmem:[%s425 + $0x210] sm:$0xff]
      %v511 = vld [vmem:[%s425 + $0x218] sm:$0xff]
      %v512 = vld [vmem:[%s425 + $0x220] sm:$0xff]
      %v513 = vld [vmem:[%s425 + $0x228] sm:$0xff]
      %v514 = vld [vmem:[%s425 + $0x230] sm:$0xff]
      %v515 = vld [vmem:[%s425 + $0x238] sm:$0xff]
      %v516 = vld [vmem:[%s425 + $0x240] sm:$0xff]
      %v517 = vld [vmem:[%s425 + $0x248] sm:$0xff]
      %v518 = vld [vmem:[%s425 + $0x250] sm:$0xff]
      %v519 = vld [vmem:[%s425 + $0x258] sm:$0xff]
      %v520 = vld [vmem:[%s425 + $0x260] sm:$0xff]
      %v521 = vld [vmem:[%s425 + $0x268] sm:$0xff]
      %v522 = vld [vmem:[%s425 + $0x270] sm:$0xff]
      %v523 = vld [vmem:[%s425 + $0x278] sm:$0xff]
      %v524 = vld [vmem:[%s425 + $0x280] sm:$0xff]
      %v525 = vld [vmem:[%s425 + $0x288] sm:$0xff]
      %v526 = vld [vmem:[%s425 + $0x290] sm:$0xff]
      %v527 = vld [vmem:[%s425 + $0x298] sm:$0xff]
      %v528 = vld [vmem:[%s425 + $0x2a0] sm:$0xff]
      %v529 = vld [vmem:[%s425 + $0x2a8] sm:$0xff]
      %v530 = vld [vmem:[%s425 + $0x2b0] sm:$0xff]
      %v531 = vld [vmem:[%s425 + $0x2b8] sm:$0xff]
      %v532 = vld [vmem:[%s425 + $0x2c0] sm:$0xff]
      %v533 = vld [vmem:[%s425 + $0x2c8] sm:$0xff]
      %v534 = vld [vmem:[%s425 + $0x2d0] sm:$0xff]
      %v535 = vld [vmem:[%s425 + $0x2d8] sm:$0xff]
      %v536 = vld [vmem:[%s425 + $0x2e0] sm:$0xff]
      %v537 = vld [vmem:[%s425 + $0x2e8] sm:$0xff]
      %v538 = vld [vmem:[%s425 + $0x2f0] sm:$0xff]
      %v539 = vld [vmem:[%s425 + $0x2f8] sm:$0xff]
      %v540 = vld [vmem:[%s425 + $0x300] sm:$0xff]
      %v541 = vld [vmem:[%s425 + $0x308] sm:$0xff]
      %v542 = vld [vmem:[%s425 + $0x310] sm:$0xff]
      %v543 = vld [vmem:[%s425 + $0x318] sm:$0xff]
      %v544 = vld [vmem:[%s425 + $0x320] sm:$0xff]
      %v545 = vld [vmem:[%s425 + $0x328] sm:$0xff]
      %v546 = vld [vmem:[%s425 + $0x330] sm:$0xff]
      %v547 = vld [vmem:[%s425 + $0x338] sm:$0xff]
      %v548 = vld [vmem:[%s425 + $0x340] sm:$0xff]
      %v549 = vld [vmem:[%s425 + $0x348] sm:$0xff]
      %v550 = vld [vmem:[%s425 + $0x350] sm:$0xff]
      %v551 = vld [vmem:[%s425 + $0x358] sm:$0xff]
      %v552 = vld [vmem:[%s425 + $0x360] sm:$0xff]
      %v553 = vld [vmem:[%s425 + $0x368] sm:$0xff]
      %v554 = vld [vmem:[%s425 + $0x370] sm:$0xff]
      %v555 = vld [vmem:[%s425 + $0x378] sm:$0xff]
      %v556 = vld [vmem:[%s425 + $0x380] sm:$0xff]
      %v557 = vld [vmem:[%s425 + $0x388] sm:$0xff]
      %v558 = vld [vmem:[%s425 + $0x390] sm:$0xff]
      %v559 = vld [vmem:[%s425 + $0x398] sm:$0xff]
      %v560 = vld [vmem:[%s425 + $0x3a0] sm:$0xff]
      %v561 = vld [vmem:[%s425 + $0x3a8] sm:$0xff]
      %v562 = vld [vmem:[%s425 + $0x3b0] sm:$0xff]
      %v563 = vld [vmem:[%s425 + $0x3b8] sm:$0xff]
      %v564 = vld [vmem:[%s425 + $0x3c0] sm:$0xff]
      %v565 = vld [vmem:[%s425 + $0x3c8] sm:$0xff]
      %v566 = vld [vmem:[%s425 + $0x3d0] sm:$0xff]
      %v567 = vld [vmem:[%s425 + $0x3d8] sm:$0xff]
      %v568 = vld [vmem:[%s425 + $0x3e0] sm:$0xff]
      %v569 = vld [vmem:[%s425 + $0x3e8] sm:$0xff]
      %v570 = vld [vmem:[%s425 + $0x3f0] sm:$0xff]
      %v571 = vld [vmem:[%s425 + $0x3f8] sm:$0xff]
      %v572 = vld [vmem:[%s425 + $0x400] sm:$0xff]
      %v573 = vld [vmem:[%s425 + $0x408] sm:$0xff]
      %v574 = vld [vmem:[%s425 + $0x410] sm:$0xff]
      %v575 = vld [vmem:[%s425 + $0x418] sm:$0xff]
      %v576 = vld [vmem:[%s425 + $0x420] sm:$0xff]
      %v577 = vld [vmem:[%s425 + $0x428] sm:$0xff]
      %v578 = vld [vmem:[%s425 + $0x430] sm:$0xff]
      %v579 = vld [vmem:[%s425 + $0x438] sm:$0xff]
      %v580 = vld [vmem:[%s425 + $0x440] sm:$0xff]
      %v581 = vld [vmem:[%s425 + $0x448] sm:$0xff]
      %v582 = vld [vmem:[%s425 + $0x450] sm:$0xff]
      %v583 = vld [vmem:[%s425 + $0x458] sm:$0xff]
      %v584 = vld [vmem:[%s425 + $0x460] sm:$0xff]
      %v585 = vld [vmem:[%s425 + $0x468] sm:$0xff]
      %v586 = vld [vmem:[%s425 + $0x470] sm:$0xff]
      %v587 = vld [vmem:[%s425 + $0x478] sm:$0xff]
      %v588 = vld [vmem:[%s425 + $0x480] sm:$0xff]
      %v589 = vld [vmem:[%s425 + $0x488] sm:$0xff]
      %v590 = vld [vmem:[%s425 + $0x490] sm:$0xff]
      %v591 = vld [vmem:[%s425 + $0x498] sm:$0xff]
      %v592 = vld [vmem:[%s425 + $0x4a0] sm:$0xff]
      %v593 = vld [vmem:[%s425 + $0x4a8] sm:$0xff]
      %v594 = vld [vmem:[%s425 + $0x4b0] sm:$0xff]
      %v595 = vld [vmem:[%s425 + $0x4b8] sm:$0xff]
      %v596 = vld [vmem:[%s425 + $0x4c0] sm:$0xff]
      %v597 = vld [vmem:[%s425 + $0x4c8] sm:$0xff]
      %v598 = vld [vmem:[%s425 + $0x4d0] sm:$0xff]
      %v599 = vld [vmem:[%s425 + $0x4d8] sm:$0xff]
      %v600 = vld [vmem:[%s425 + $0x4e0] sm:$0xff]
      %v601 = vld [vmem:[%s425 + $0x4e8] sm:$0xff]
      %v602 = vld [vmem:[%s425 + $0x4f0] sm:$0xff]
      %v603 = vld [vmem:[%s425 + $0x4f8] sm:$0xff]
      %v604 = vld [vmem:[%s425 + $0x500] sm:$0xff]
      %v605 = vld [vmem:[%s425 + $0x508] sm:$0xff]
      %v606 = vld [vmem:[%s425 + $0x510] sm:$0xff]
      %v607 = vld [vmem:[%s425 + $0x518] sm:$0xff]
      %v608 = vld [vmem:[%s425 + $0x520] sm:$0xff]
      %v609 = vld [vmem:[%s425 + $0x528] sm:$0xff]
      %v610 = vld [vmem:[%s425 + $0x530] sm:$0xff]
      %v611 = vld [vmem:[%s425 + $0x538] sm:$0xff]
      %v612 = vld [vmem:[%s425 + $0x540] sm:$0xff]
      %v613 = vld [vmem:[%s425 + $0x548] sm:$0xff]
      %v614 = vld [vmem:[%s425 + $0x550] sm:$0xff]
      %v615 = vld [vmem:[%s425 + $0x558] sm:$0xff]
      %v616 = vld [vmem:[%s425 + $0x560] sm:$0xff]
      %v617 = vld [vmem:[%s425 + $0x568] sm:$0xff]
      %v618 = vld [vmem:[%s425 + $0x570] sm:$0xff]
      %v619 = vld [vmem:[%s425 + $0x578] sm:$0xff]
      %v620 = vld [vmem:[%s425 + $0x580] sm:$0xff]
      %v621 = vld [vmem:[%s425 + $0x588] sm:$0xff]
      %v622 = vld [vmem:[%s425 + $0x590] sm:$0xff]
      %v623 = vld [vmem:[%s425 + $0x598] sm:$0xff]
      %v624 = vld [vmem:[%s425 + $0x5a0] sm:$0xff]
      %v625 = vld [vmem:[%s425 + $0x5a8] sm:$0xff]
      %v626 = vld [vmem:[%s425 + $0x5b0] sm:$0xff]
      %v627 = vld [vmem:[%s425 + $0x5b8] sm:$0xff]
      %v628 = vld [vmem:[%s425 + $0x5c0] sm:$0xff]
      %v629 = vld [vmem:[%s425 + $0x5c8] sm:$0xff]
      %v630 = vld [vmem:[%s425 + $0x5d0] sm:$0xff]
      %v631 = vld [vmem:[%s425 + $0x5d8] sm:$0xff]
      %v632 = vld [vmem:[%s425 + $0x5e0] sm:$0xff]
      %v633 = vld [vmem:[%s425 + $0x5e8] sm:$0xff]
      %v634 = vld [vmem:[%s425 + $0x5f0] sm:$0xff]
      %v635 = vld [vmem:[%s425 + $0x5f8] sm:$0xff]
      %v636 = vld [vmem:[%s425 + $0x600] sm:$0xff]
      %v637 = vld [vmem:[%s425 + $0x608] sm:$0xff]
      %v638 = vld [vmem:[%s425 + $0x610] sm:$0xff]
      %v639 = vld [vmem:[%s425 + $0x618] sm:$0xff]
      %v640 = vld [vmem:[%s425 + $0x620] sm:$0xff]
      %v641 = vld [vmem:[%s425 + $0x628] sm:$0xff]
      %v642 = vld [vmem:[%s425 + $0x630] sm:$0xff]
      %v643 = vld [vmem:[%s425 + $0x638] sm:$0xff]
      %v644 = vld [vmem:[%s425 + $0x640] sm:$0xff]
      %v645 = vld [vmem:[%s425 + $0x648] sm:$0xff]
      %v646 = vld [vmem:[%s425 + $0x650] sm:$0xff]
      %v647 = vld [vmem:[%s425 + $0x658] sm:$0xff]
      %v648 = vld [vmem:[%s425 + $0x660] sm:$0xff]
      %v649 = vld [vmem:[%s425 + $0x668] sm:$0xff]
      %v650 = vld [vmem:[%s425 + $0x670] sm:$0xff]
      %v651 = vld [vmem:[%s425 + $0x678] sm:$0xff]
      %v652 = vld [vmem:[%s425 + $0x680] sm:$0xff]
      %v653 = vld [vmem:[%s425 + $0x688] sm:$0xff]
      %v654 = vld [vmem:[%s425 + $0x690] sm:$0xff]
      %v655 = vld [vmem:[%s425 + $0x698] sm:$0xff]
      %v656 = vld [vmem:[%s425 + $0x6a0] sm:$0xff]
      %v657 = vld [vmem:[%s425 + $0x6a8] sm:$0xff]
      %v658 = vld [vmem:[%s425 + $0x6b0] sm:$0xff]
      %v659 = vld [vmem:[%s425 + $0x6b8] sm:$0xff]
      %v660 = vld [vmem:[%s425 + $0x6c0] sm:$0xff]
      %v661 = vld [vmem:[%s425 + $0x6c8] sm:$0xff]
      %v662 = vld [vmem:[%s425 + $0x6d0] sm:$0xff]
      %v663 = vld [vmem:[%s425 + $0x6d8] sm:$0xff]
      %v664 = vld [vmem:[%s425 + $0x6e0] sm:$0xff]
      %v665 = vld [vmem:[%s425 + $0x6e8] sm:$0xff]
      %v666 = vld [vmem:[%s425 + $0x6f0] sm:$0xff]
      %v667 = vld [vmem:[%s425 + $0x6f8] sm:$0xff]
      %v668 = vld [vmem:[%s425 + $0x700] sm:$0xff]
      %v669 = vld [vmem:[%s425 + $0x708] sm:$0xff]
      %v670 = vld [vmem:[%s425 + $0x710] sm:$0xff]
      %v671 = vld [vmem:[%s425 + $0x718] sm:$0xff]
      %v672 = vld [vmem:[%s425 + $0x720] sm:$0xff]
      %v673 = vld [vmem:[%s425 + $0x728] sm:$0xff]
      %v674 = vld [vmem:[%s425 + $0x730] sm:$0xff]
      %v675 = vld [vmem:[%s425 + $0x738] sm:$0xff]
      %v676 = vld [vmem:[%s425 + $0x740] sm:$0xff]
      %v677 = vld [vmem:[%s425 + $0x748] sm:$0xff]
      %v678 = vld [vmem:[%s425 + $0x750] sm:$0xff]
      %v679 = vld [vmem:[%s425 + $0x758] sm:$0xff]
      %v680 = vld [vmem:[%s425 + $0x760] sm:$0xff]
      %v681 = vld [vmem:[%s425 + $0x768] sm:$0xff]
      %v682 = vld [vmem:[%s425 + $0x770] sm:$0xff]
      %v683 = vld [vmem:[%s425 + $0x778] sm:$0xff]
      %v684 = vld [vmem:[%s425 + $0x780] sm:$0xff]
      %v685 = vld [vmem:[%s425 + $0x788] sm:$0xff]
      %v686 = vld [vmem:[%s425 + $0x790] sm:$0xff]
      %v687 = vld [vmem:[%s425 + $0x798] sm:$0xff]
      %v688 = vld [vmem:[%s425 + $0x7a0] sm:$0xff]
      %v689 = vld [vmem:[%s425 + $0x7a8] sm:$0xff]
      %v690 = vld [vmem:[%s425 + $0x7b0] sm:$0xff]
      %v691 = vld [vmem:[%s425 + $0x7b8] sm:$0xff]
      %v692 = vld [vmem:[%s425 + $0x7c0] sm:$0xff]
      %v693 = vld [vmem:[%s425 + $0x7c8] sm:$0xff]
      %v694 = vld [vmem:[%s425 + $0x7d0] sm:$0xff]
      %v695 = vld [vmem:[%s425 + $0x7d8] sm:$0xff]
      %v696 = vld [vmem:[%s425 + $0x7e0] sm:$0xff]
      %v697 = vld [vmem:[%s425 + $0x7e8] sm:$0xff]
      %v698 = vld [vmem:[%s425 + $0x7f0] sm:$0xff]
      %v699 = vld [vmem:[%s425 + $0x7f8] sm:$0xff]
      %v704 = vunpack.c.l.b16 %v440
      %v705 = vunpack.c.h.b16 %v440
      %v706 = vunpack.c.l.b16 %v441
      %v707 = vunpack.c.h.b16 %v441
      %v708 = vunpack.c.l.b16 %v442
      %v709 = vunpack.c.h.b16 %v442
      %v710 = vunpack.c.l.b16 %v443
      %v711 = vunpack.c.h.b16 %v443
      %v712 = vpack.c.b16 %v704, %v704
      %v713 = vpack.c.b16 %v705, %v705
      %v714 = vpack.c.b16 %v706, %v706
      %v715 = vpack.c.b16 %v707, %v707
      %v716 = vpack.c.b16 %v708, %v708
      %v717 = vpack.c.b16 %v709, %v709
      %v718 = vpack.c.b16 %v710, %v710
      %v719 = vpack.c.b16 %v711, %v711
      %v984 = vunpack.c.l.b16 %v444
      %v985 = vunpack.c.h.b16 %v444
      %v986 = vunpack.c.l.b16 %v445
      %v987 = vunpack.c.h.b16 %v445
      %v988 = vunpack.c.l.b16 %v446
      %v989 = vunpack.c.h.b16 %v446
      %v990 = vunpack.c.l.b16 %v447
      %v991 = vunpack.c.h.b16 %v447
      %v992 = vunpack.c.l.b16 %v448
      %v993 = vunpack.c.h.b16 %v448
      %v994 = vunpack.c.l.b16 %v449
      %v995 = vunpack.c.h.b16 %v449
      %v996 = vunpack.c.l.b16 %v450
      %v997 = vunpack.c.h.b16 %v450
      %v998 = vunpack.c.l.b16 %v451
      %v999 = vunpack.c.h.b16 %v451
      %v1000 = vunpack.c.l.b16 %v452
      %v1001 = vunpack.c.h.b16 %v452
      %v1002 = vunpack.c.l.b16 %v453
      %v1003 = vunpack.c.h.b16 %v453
      %v1004 = vunpack.c.l.b16 %v454
      %v1005 = vunpack.c.h.b16 %v454
      %v1006 = vunpack.c.l.b16 %v455
      %v1007 = vunpack.c.h.b16 %v455
      %v1008 = vunpack.c.l.b16 %v456
      %v1009 = vunpack.c.h.b16 %v456
      %v1010 = vunpack.c.l.b16 %v457
      %v1011 = vunpack.c.h.b16 %v457
      %v1012 = vunpack.c.l.b16 %v458
      %v1013 = vunpack.c.h.b16 %v458
      %v1014 = vunpack.c.l.b16 %v459
      %v1015 = vunpack.c.h.b16 %v459
      %v1016 = vunpack.c.l.b16 %v460
      %v1017 = vunpack.c.h.b16 %v460
      %v1018 = vunpack.c.l.b16 %v461
      %v1019 = vunpack.c.h.b16 %v461
      %v1020 = vunpack.c.l.b16 %v462
      %v1021 = vunpack.c.h.b16 %v462
      %v1022 = vunpack.c.l.b16 %v463
      %v1023 = vunpack.c.h.b16 %v463
      %v1024 = vunpack.c.l.b16 %v464
      %v1025 = vunpack.c.h.b16 %v464
      %v1026 = vunpack.c.l.b16 %v465
      %v1027 = vunpack.c.h.b16 %v465
      %v1028 = vunpack.c.l.b16 %v466
      %v1029 = vunpack.c.h.b16 %v466
      %v1030 = vunpack.c.l.b16 %v467
      %v1031 = vunpack.c.h.b16 %v467
      %v1032 = vunpack.c.l.b16 %v468
      %v1033 = vunpack.c.h.b16 %v468
      %v1034 = vunpack.c.l.b16 %v469
      %v1035 = vunpack.c.h.b16 %v469
      %v1036 = vunpack.c.l.b16 %v470
      %v1037 = vunpack.c.h.b16 %v470
      %v1038 = vunpack.c.l.b16 %v471
      %v1039 = vunpack.c.h.b16 %v471
      %v1040 = vunpack.c.l.b16 %v472
      %v1041 = vunpack.c.h.b16 %v472
      %v1042 = vunpack.c.l.b16 %v473
      %v1043 = vunpack.c.h.b16 %v473
      %v1044 = vunpack.c.l.b16 %v474
      %v1045 = vunpack.c.h.b16 %v474
      %v1046 = vunpack.c.l.b16 %v475
      %v1047 = vunpack.c.h.b16 %v475
      %v1048 = vunpack.c.l.b16 %v476
      %v1049 = vunpack.c.h.b16 %v476
      %v1050 = vunpack.c.l.b16 %v477
      %v1051 = vunpack.c.h.b16 %v477
      %v1052 = vunpack.c.l.b16 %v478
      %v1053 = vunpack.c.h.b16 %v478
      %v1054 = vunpack.c.l.b16 %v479
      %v1055 = vunpack.c.h.b16 %v479
      %v1056 = vunpack.c.l.b16 %v480
      %v1057 = vunpack.c.h.b16 %v480
      %v1058 = vunpack.c.l.b16 %v481
      %v1059 = vunpack.c.h.b16 %v481
      %v1060 = vunpack.c.l.b16 %v482
      %v1061 = vunpack.c.h.b16 %v482
      %v1062 = vunpack.c.l.b16 %v483
      %v1063 = vunpack.c.h.b16 %v483
      %v1064 = vunpack.c.l.b16 %v484
      %v1065 = vunpack.c.h.b16 %v484
      %v1066 = vunpack.c.l.b16 %v485
      %v1067 = vunpack.c.h.b16 %v485
      %v1068 = vunpack.c.l.b16 %v486
      %v1069 = vunpack.c.h.b16 %v486
      %v1070 = vunpack.c.l.b16 %v487
      %v1071 = vunpack.c.h.b16 %v487
      %v1072 = vunpack.c.l.b16 %v488
      %v1073 = vunpack.c.h.b16 %v488
      %v1074 = vunpack.c.l.b16 %v489
      %v1075 = vunpack.c.h.b16 %v489
      %v1076 = vunpack.c.l.b16 %v490
      %v1077 = vunpack.c.h.b16 %v490
      %v1078 = vunpack.c.l.b16 %v491
      %v1079 = vunpack.c.h.b16 %v491
      %v1080 = vunpack.c.l.b16 %v492
      %v1081 = vunpack.c.h.b16 %v492
      %v1082 = vunpack.c.l.b16 %v493
      %v1083 = vunpack.c.h.b16 %v493
      %v1084 = vunpack.c.l.b16 %v494
      %v1085 = vunpack.c.h.b16 %v494
      %v1086 = vunpack.c.l.b16 %v495
      %v1087 = vunpack.c.h.b16 %v495
      %v1088 = vunpack.c.l.b16 %v496
      %v1089 = vunpack.c.h.b16 %v496
      %v1090 = vunpack.c.l.b16 %v497
      %v1091 = vunpack.c.h.b16 %v497
      %v1092 = vunpack.c.l.b16 %v498
      %v1093 = vunpack.c.h.b16 %v498
      %v1094 = vunpack.c.l.b16 %v499
      %v1095 = vunpack.c.h.b16 %v499
      %v1096 = vunpack.c.l.b16 %v500
      %v1097 = vunpack.c.h.b16 %v500
      %v1098 = vunpack.c.l.b16 %v501
      %v1099 = vunpack.c.h.b16 %v501
      %v1100 = vunpack.c.l.b16 %v502
      %v1101 = vunpack.c.h.b16 %v502
      %v1102 = vunpack.c.l.b16 %v503
      %v1103 = vunpack.c.h.b16 %v503
      %v1104 = vunpack.c.l.b16 %v504
      %v1105 = vunpack.c.h.b16 %v504
      %v1106 = vunpack.c.l.b16 %v505
      %v1107 = vunpack.c.h.b16 %v505
      %v1108 = vunpack.c.l.b16 %v506
      %v1109 = vunpack.c.h.b16 %v506
      %v1110 = vunpack.c.l.b16 %v507
      %v1111 = vunpack.c.h.b16 %v507
      %v1112 = vunpack.c.l.b16 %v508
      %v1113 = vunpack.c.h.b16 %v508
      %v1114 = vunpack.c.l.b16 %v509
      %v1115 = vunpack.c.h.b16 %v509
      %v1116 = vunpack.c.l.b16 %v510
      %v1117 = vunpack.c.h.b16 %v510
      %v1118 = vunpack.c.l.b16 %v511
      %v1119 = vunpack.c.h.b16 %v511
      %v1120 = vunpack.c.l.b16 %v512
      %v1121 = vunpack.c.h.b16 %v512
      %v1122 = vunpack.c.l.b16 %v513
      %v1123 = vunpack.c.h.b16 %v513
      %v1124 = vunpack.c.l.b16 %v514
      %v1125 = vunpack.c.h.b16 %v514
      %v1126 = vunpack.c.l.b16 %v515
      %v1127 = vunpack.c.h.b16 %v515
      %v1128 = vunpack.c.l.b16 %v516
      %v1129 = vunpack.c.h.b16 %v516
      %v1130 = vunpack.c.l.b16 %v517
      %v1131 = vunpack.c.h.b16 %v517
      %v1132 = vunpack.c.l.b16 %v518
      %v1133 = vunpack.c.h.b16 %v518
      %v1134 = vunpack.c.l.b16 %v519
      %v1135 = vunpack.c.h.b16 %v519
      %v1136 = vunpack.c.l.b16 %v520
      %v1137 = vunpack.c.h.b16 %v520
      %v1138 = vunpack.c.l.b16 %v521
      %v1139 = vunpack.c.h.b16 %v521
      %v1140 = vunpack.c.l.b16 %v522
      %v1141 = vunpack.c.h.b16 %v522
      %v1142 = vunpack.c.l.b16 %v523
      %v1143 = vunpack.c.h.b16 %v523
      %v1144 = vunpack.c.l.b16 %v524
      %v1145 = vunpack.c.h.b16 %v524
      %v1146 = vunpack.c.l.b16 %v525
      %v1147 = vunpack.c.h.b16 %v525
      %v1148 = vunpack.c.l.b16 %v526
      %v1149 = vunpack.c.h.b16 %v526
      %v1150 = vunpack.c.l.b16 %v527
      %v1151 = vunpack.c.h.b16 %v527
      %v1152 = vunpack.c.l.b16 %v528
      %v1153 = vunpack.c.h.b16 %v528
      %v1154 = vunpack.c.l.b16 %v529
      %v1155 = vunpack.c.h.b16 %v529
      %v1156 = vunpack.c.l.b16 %v530
      %v1157 = vunpack.c.h.b16 %v530
      %v1158 = vunpack.c.l.b16 %v531
      %v1159 = vunpack.c.h.b16 %v531
      %v1160 = vunpack.c.l.b16 %v532
      %v1161 = vunpack.c.h.b16 %v532
      %v1162 = vunpack.c.l.b16 %v533
      %v1163 = vunpack.c.h.b16 %v533
      %v1164 = vunpack.c.l.b16 %v534
      %v1165 = vunpack.c.h.b16 %v534
      %v1166 = vunpack.c.l.b16 %v535
      %v1167 = vunpack.c.h.b16 %v535
      %v1168 = vunpack.c.l.b16 %v536
      %v1169 = vunpack.c.h.b16 %v536
      %v1170 = vunpack.c.l.b16 %v537
      %v1171 = vunpack.c.h.b16 %v537
      %v1172 = vunpack.c.l.b16 %v538
      %v1173 = vunpack.c.h.b16 %v538
      %v1174 = vunpack.c.l.b16 %v539
      %v1175 = vunpack.c.h.b16 %v539
      %v1176 = vunpack.c.l.b16 %v540
      %v1177 = vunpack.c.h.b16 %v540
      %v1178 = vunpack.c.l.b16 %v541
      %v1179 = vunpack.c.h.b16 %v541
      %v1180 = vunpack.c.l.b16 %v542
      %v1181 = vunpack.c.h.b16 %v542
      %v1182 = vunpack.c.l.b16 %v543
      %v1183 = vunpack.c.h.b16 %v543
      %v1184 = vunpack.c.l.b16 %v544
      %v1185 = vunpack.c.h.b16 %v544
      %v1186 = vunpack.c.l.b16 %v545
      %v1187 = vunpack.c.h.b16 %v545
      %v1188 = vunpack.c.l.b16 %v546
      %v1189 = vunpack.c.h.b16 %v546
      %v1190 = vunpack.c.l.b16 %v547
      %v1191 = vunpack.c.h.b16 %v547
      %v1192 = vunpack.c.l.b16 %v548
      %v1193 = vunpack.c.h.b16 %v548
      %v1194 = vunpack.c.l.b16 %v549
      %v1195 = vunpack.c.h.b16 %v549
      %v1196 = vunpack.c.l.b16 %v550
      %v1197 = vunpack.c.h.b16 %v550
      %v1198 = vunpack.c.l.b16 %v551
      %v1199 = vunpack.c.h.b16 %v551
      %v1200 = vunpack.c.l.b16 %v552
      %v1201 = vunpack.c.h.b16 %v552
      %v1202 = vunpack.c.l.b16 %v553
      %v1203 = vunpack.c.h.b16 %v553
      %v1204 = vunpack.c.l.b16 %v554
      %v1205 = vunpack.c.h.b16 %v554
      %v1206 = vunpack.c.l.b16 %v555
      %v1207 = vunpack.c.h.b16 %v555
      %v1208 = vunpack.c.l.b16 %v556
      %v1209 = vunpack.c.h.b16 %v556
      %v1210 = vunpack.c.l.b16 %v557
      %v1211 = vunpack.c.h.b16 %v557
      %v1212 = vunpack.c.l.b16 %v558
      %v1213 = vunpack.c.h.b16 %v558
      %v1214 = vunpack.c.l.b16 %v559
      %v1215 = vunpack.c.h.b16 %v559
      %v1216 = vunpack.c.l.b16 %v560
      %v1217 = vunpack.c.h.b16 %v560
      %v1218 = vunpack.c.l.b16 %v561
      %v1219 = vunpack.c.h.b16 %v561
      %v1220 = vunpack.c.l.b16 %v562
      %v1221 = vunpack.c.h.b16 %v562
      %v1222 = vunpack.c.l.b16 %v563
      %v1223 = vunpack.c.h.b16 %v563
      %v1224 = vunpack.c.l.b16 %v564
      %v1225 = vunpack.c.h.b16 %v564
      %v1226 = vunpack.c.l.b16 %v565
      %v1227 = vunpack.c.h.b16 %v565
      %v1228 = vunpack.c.l.b16 %v566
      %v1229 = vunpack.c.h.b16 %v566
      %v1230 = vunpack.c.l.b16 %v567
      %v1231 = vunpack.c.h.b16 %v567
      %v1232 = vunpack.c.l.b16 %v568
      %v1233 = vunpack.c.h.b16 %v568
      %v1234 = vunpack.c.l.b16 %v569
      %v1235 = vunpack.c.h.b16 %v569
      %v1236 = vunpack.c.l.b16 %v570
      %v1237 = vunpack.c.h.b16 %v570
      %v1238 = vunpack.c.l.b16 %v571
      %v1239 = vunpack.c.h.b16 %v571
      %v1240 = vunpack.c.l.b16 %v572
      %v1241 = vunpack.c.h.b16 %v572
      %v1242 = vunpack.c.l.b16 %v573
      %v1243 = vunpack.c.h.b16 %v573
      %v1244 = vunpack.c.l.b16 %v574
      %v1245 = vunpack.c.h.b16 %v574
      %v1246 = vunpack.c.l.b16 %v575
      %v1247 = vunpack.c.h.b16 %v575
      %v1248 = vunpack.c.l.b16 %v576
      %v1249 = vunpack.c.h.b16 %v576
      %v1250 = vunpack.c.l.b16 %v577
      %v1251 = vunpack.c.h.b16 %v577
      %v1252 = vunpack.c.l.b16 %v578
      %v1253 = vunpack.c.h.b16 %v578
      %v1254 = vunpack.c.l.b16 %v579
      %v1255 = vunpack.c.h.b16 %v579
      %v1256 = vunpack.c.l.b16 %v580
      %v1257 = vunpack.c.h.b16 %v580
      %v1258 = vunpack.c.l.b16 %v581
      %v1259 = vunpack.c.h.b16 %v581
      %v1260 = vunpack.c.l.b16 %v582
      %v1261 = vunpack.c.h.b16 %v582
      %v1262 = vunpack.c.l.b16 %v583
      %v1263 = vunpack.c.h.b16 %v583
      %v1264 = vunpack.c.l.b16 %v584
      %v1265 = vunpack.c.h.b16 %v584
      %v1266 = vunpack.c.l.b16 %v585
      %v1267 = vunpack.c.h.b16 %v585
      %v1268 = vunpack.c.l.b16 %v586
      %v1269 = vunpack.c.h.b16 %v586
      %v1270 = vunpack.c.l.b16 %v587
      %v1271 = vunpack.c.h.b16 %v587
      %v1272 = vunpack.c.l.b16 %v588
      %v1273 = vunpack.c.h.b16 %v588
      %v1274 = vunpack.c.l.b16 %v589
      %v1275 = vunpack.c.h.b16 %v589
      %v1276 = vunpack.c.l.b16 %v590
      %v1277 = vunpack.c.h.b16 %v590
      %v1278 = vunpack.c.l.b16 %v591
      %v1279 = vunpack.c.h.b16 %v591
      %v1280 = vunpack.c.l.b16 %v592
      %v1281 = vunpack.c.h.b16 %v592
      %v1282 = vunpack.c.l.b16 %v593
      %v1283 = vunpack.c.h.b16 %v593
      %v1284 = vunpack.c.l.b16 %v594
      %v1285 = vunpack.c.h.b16 %v594
      %v1286 = vunpack.c.l.b16 %v595
      %v1287 = vunpack.c.h.b16 %v595
      %v1288 = vunpack.c.l.b16 %v596
      %v1289 = vunpack.c.h.b16 %v596
      %v1290 = vunpack.c.l.b16 %v597
      %v1291 = vunpack.c.h.b16 %v597
      %v1292 = vunpack.c.l.b16 %v598
      %v1293 = vunpack.c.h.b16 %v598
      %v1294 = vunpack.c.l.b16 %v599
      %v1295 = vunpack.c.h.b16 %v599
      %v1296 = vunpack.c.l.b16 %v600
      %v1297 = vunpack.c.h.b16 %v600
      %v1298 = vunpack.c.l.b16 %v601
      %v1299 = vunpack.c.h.b16 %v601
      %v1300 = vunpack.c.l.b16 %v602
      %v1301 = vunpack.c.h.b16 %v602
      %v1302 = vunpack.c.l.b16 %v603
      %v1303 = vunpack.c.h.b16 %v603
      %v1304 = vunpack.c.l.b16 %v604
      %v1305 = vunpack.c.h.b16 %v604
      %v1306 = vunpack.c.l.b16 %v605
      %v1307 = vunpack.c.h.b16 %v605
      %v1308 = vunpack.c.l.b16 %v606
      %v1309 = vunpack.c.h.b16 %v606
      %v1310 = vunpack.c.l.b16 %v607
      %v1311 = vunpack.c.h.b16 %v607
      %v1312 = vunpack.c.l.b16 %v608
      %v1313 = vunpack.c.h.b16 %v608
      %v1314 = vunpack.c.l.b16 %v609
      %v1315 = vunpack.c.h.b16 %v609
      %v1316 = vunpack.c.l.b16 %v610
      %v1317 = vunpack.c.h.b16 %v610
      %v1318 = vunpack.c.l.b16 %v611
      %v1319 = vunpack.c.h.b16 %v611
      %v1320 = vunpack.c.l.b16 %v612
      %v1321 = vunpack.c.h.b16 %v612
      %v1322 = vunpack.c.l.b16 %v613
      %v1323 = vunpack.c.h.b16 %v613
      %v1324 = vunpack.c.l.b16 %v614
      %v1325 = vunpack.c.h.b16 %v614
      %v1326 = vunpack.c.l.b16 %v615
      %v1327 = vunpack.c.h.b16 %v615
      %v1328 = vunpack.c.l.b16 %v616
      %v1329 = vunpack.c.h.b16 %v616
      %v1330 = vunpack.c.l.b16 %v617
      %v1331 = vunpack.c.h.b16 %v617
      %v1332 = vunpack.c.l.b16 %v618
      %v1333 = vunpack.c.h.b16 %v618
      %v1334 = vunpack.c.l.b16 %v619
      %v1335 = vunpack.c.h.b16 %v619
      %v1336 = vunpack.c.l.b16 %v620
      %v1337 = vunpack.c.h.b16 %v620
      %v1338 = vunpack.c.l.b16 %v621
      %v1339 = vunpack.c.h.b16 %v621
      %v1340 = vunpack.c.l.b16 %v622
      %v1341 = vunpack.c.h.b16 %v622
      %v1342 = vunpack.c.l.b16 %v623
      %v1343 = vunpack.c.h.b16 %v623
      %v1344 = vunpack.c.l.b16 %v624
      %v1345 = vunpack.c.h.b16 %v624
      %v1346 = vunpack.c.l.b16 %v625
      %v1347 = vunpack.c.h.b16 %v625
      %v1348 = vunpack.c.l.b16 %v626
      %v1349 = vunpack.c.h.b16 %v626
      %v1350 = vunpack.c.l.b16 %v627
      %v1351 = vunpack.c.h.b16 %v627
      %v1352 = vunpack.c.l.b16 %v628
      %v1353 = vunpack.c.h.b16 %v628
      %v1354 = vunpack.c.l.b16 %v629
      %v1355 = vunpack.c.h.b16 %v629
      %v1356 = vunpack.c.l.b16 %v630
      %v1357 = vunpack.c.h.b16 %v630
      %v1358 = vunpack.c.l.b16 %v631
      %v1359 = vunpack.c.h.b16 %v631
      %v1360 = vunpack.c.l.b16 %v632
      %v1361 = vunpack.c.h.b16 %v632
      %v1362 = vunpack.c.l.b16 %v633
      %v1363 = vunpack.c.h.b16 %v633
      %v1364 = vunpack.c.l.b16 %v634
      %v1365 = vunpack.c.h.b16 %v634
      %v1366 = vunpack.c.l.b16 %v635
      %v1367 = vunpack.c.h.b16 %v635
      %v1368 = vunpack.c.l.b16 %v636
      %v1369 = vunpack.c.h.b16 %v636
      %v1370 = vunpack.c.l.b16 %v637
      %v1371 = vunpack.c.h.b16 %v637
      %v1372 = vunpack.c.l.b16 %v638
      %v1373 = vunpack.c.h.b16 %v638
      %v1374 = vunpack.c.l.b16 %v639
      %v1375 = vunpack.c.h.b16 %v639
      %v1376 = vunpack.c.l.b16 %v640
      %v1377 = vunpack.c.h.b16 %v640
      %v1378 = vunpack.c.l.b16 %v641
      %v1379 = vunpack.c.h.b16 %v641
      %v1380 = vunpack.c.l.b16 %v642
      %v1381 = vunpack.c.h.b16 %v642
      %v1382 = vunpack.c.l.b16 %v643
      %v1383 = vunpack.c.h.b16 %v643
      %v1384 = vunpack.c.l.b16 %v644
      %v1385 = vunpack.c.h.b16 %v644
      %v1386 = vunpack.c.l.b16 %v645
      %v1387 = vunpack.c.h.b16 %v645
      %v1388 = vunpack.c.l.b16 %v646
      %v1389 = vunpack.c.h.b16 %v646
      %v1390 = vunpack.c.l.b16 %v647
      %v1391 = vunpack.c.h.b16 %v647
      %v1392 = vunpack.c.l.b16 %v648
      %v1393 = vunpack.c.h.b16 %v648
      %v1394 = vunpack.c.l.b16 %v649
      %v1395 = vunpack.c.h.b16 %v649
      %v1396 = vunpack.c.l.b16 %v650
      %v1397 = vunpack.c.h.b16 %v650
      %v1398 = vunpack.c.l.b16 %v651
      %v1399 = vunpack.c.h.b16 %v651
      %v1400 = vunpack.c.l.b16 %v652
      %v1401 = vunpack.c.h.b16 %v652
      %v1402 = vunpack.c.l.b16 %v653
      %v1403 = vunpack.c.h.b16 %v653
      %v1404 = vunpack.c.l.b16 %v654
      %v1405 = vunpack.c.h.b16 %v654
      %v1406 = vunpack.c.l.b16 %v655
      %v1407 = vunpack.c.h.b16 %v655
      %v1408 = vunpack.c.l.b16 %v656
      %v1409 = vunpack.c.h.b16 %v656
      %v1410 = vunpack.c.l.b16 %v657
      %v1411 = vunpack.c.h.b16 %v657
      %v1412 = vunpack.c.l.b16 %v658
      %v1413 = vunpack.c.h.b16 %v658
      %v1414 = vunpack.c.l.b16 %v659
      %v1415 = vunpack.c.h.b16 %v659
      %v1416 = vunpack.c.l.b16 %v660
      %v1417 = vunpack.c.h.b16 %v660
      %v1418 = vunpack.c.l.b16 %v661
      %v1419 = vunpack.c.h.b16 %v661
      %v1420 = vunpack.c.l.b16 %v662
      %v1421 = vunpack.c.h.b16 %v662
      %v1422 = vunpack.c.l.b16 %v663
      %v1423 = vunpack.c.h.b16 %v663
      %v1424 = vunpack.c.l.b16 %v664
      %v1425 = vunpack.c.h.b16 %v664
      %v1426 = vunpack.c.l.b16 %v665
      %v1427 = vunpack.c.h.b16 %v665
      %v1428 = vunpack.c.l.b16 %v666
      %v1429 = vunpack.c.h.b16 %v666
      %v1430 = vunpack.c.l.b16 %v667
      %v1431 = vunpack.c.h.b16 %v667
      %v1432 = vunpack.c.l.b16 %v668
      %v1433 = vunpack.c.h.b16 %v668
      %v1434 = vunpack.c.l.b16 %v669
      %v1435 = vunpack.c.h.b16 %v669
      %v1436 = vunpack.c.l.b16 %v670
      %v1437 = vunpack.c.h.b16 %v670
      %v1438 = vunpack.c.l.b16 %v671
      %v1439 = vunpack.c.h.b16 %v671
      %v1440 = vunpack.c.l.b16 %v672
      %v1441 = vunpack.c.h.b16 %v672
      %v1442 = vunpack.c.l.b16 %v673
      %v1443 = vunpack.c.h.b16 %v673
      %v1444 = vunpack.c.l.b16 %v674
      %v1445 = vunpack.c.h.b16 %v674
      %v1446 = vunpack.c.l.b16 %v675
      %v1447 = vunpack.c.h.b16 %v675
      %v1448 = vunpack.c.l.b16 %v676
      %v1449 = vunpack.c.h.b16 %v676
      %v1450 = vunpack.c.l.b16 %v677
      %v1451 = vunpack.c.h.b16 %v677
      %v1452 = vunpack.c.l.b16 %v678
      %v1453 = vunpack.c.h.b16 %v678
      %v1454 = vunpack.c.l.b16 %v679
      %v1455 = vunpack.c.h.b16 %v679
      %v1456 = vunpack.c.l.b16 %v680
      %v1457 = vunpack.c.h.b16 %v680
      %v1458 = vunpack.c.l.b16 %v681
      %v1459 = vunpack.c.h.b16 %v681
      %v1460 = vunpack.c.l.b16 %v682
      %v1461 = vunpack.c.h.b16 %v682
      %v1462 = vunpack.c.l.b16 %v683
      %v1463 = vunpack.c.h.b16 %v683
      %v1464 = vunpack.c.l.b16 %v684
      %v1465 = vunpack.c.h.b16 %v684
      %v1466 = vunpack.c.l.b16 %v685
      %v1467 = vunpack.c.h.b16 %v685
      %v1468 = vunpack.c.l.b16 %v686
      %v1469 = vunpack.c.h.b16 %v686
      %v1470 = vunpack.c.l.b16 %v687
      %v1471 = vunpack.c.h.b16 %v687
      %v1472 = vunpack.c.l.b16 %v688
      %v1473 = vunpack.c.h.b16 %v688
      %v1474 = vunpack.c.l.b16 %v689
      %v1475 = vunpack.c.h.b16 %v689
      %v1476 = vunpack.c.l.b16 %v690
      %v1477 = vunpack.c.h.b16 %v690
      %v1478 = vunpack.c.l.b16 %v691
      %v1479 = vunpack.c.h.b16 %v691
      %v1480 = vunpack.c.l.b16 %v692
      %v1481 = vunpack.c.h.b16 %v692
      %v1482 = vunpack.c.l.b16 %v693
      %v1483 = vunpack.c.h.b16 %v693
      %v1484 = vunpack.c.l.b16 %v694
      %v1485 = vunpack.c.h.b16 %v694
      %v1486 = vunpack.c.l.b16 %v695
      %v1487 = vunpack.c.h.b16 %v695
      %v1488 = vunpack.c.l.b16 %v696
      %v1489 = vunpack.c.h.b16 %v696
      %v1490 = vunpack.c.l.b16 %v697
      %v1491 = vunpack.c.h.b16 %v697
      %v1492 = vunpack.c.l.b16 %v698
      %v1493 = vunpack.c.h.b16 %v698
      %v1494 = vunpack.c.l.b16 %v699
      %v1495 = vunpack.c.h.b16 %v699
      %v1496 = vpack.c.b16 %v988, %v984
      %v1497 = vpack.c.b16 %v989, %v985
      %v1498 = vpack.c.b16 %v990, %v986
      %v1499 = vpack.c.b16 %v991, %v987
      %v1500 = vpack.c.b16 %v996, %v992
      %v1501 = vpack.c.b16 %v997, %v993
      %v1502 = vpack.c.b16 %v998, %v994
      %v1503 = vpack.c.b16 %v999, %v995
      %v1504 = vpack.c.b16 %v1004, %v1000
      %v1505 = vpack.c.b16 %v1005, %v1001
      %v1506 = vpack.c.b16 %v1006, %v1002
      %v1507 = vpack.c.b16 %v1007, %v1003
      %v1508 = vpack.c.b16 %v1012, %v1008
      %v1509 = vpack.c.b16 %v1013, %v1009
      %v1510 = vpack.c.b16 %v1014, %v1010
      %v1511 = vpack.c.b16 %v1015, %v1011
      %v1512 = vpack.c.b16 %v1020, %v1016
      %v1513 = vpack.c.b16 %v1021, %v1017
      %v1514 = vpack.c.b16 %v1022, %v1018
      %v1515 = vpack.c.b16 %v1023, %v1019
      %v1516 = vpack.c.b16 %v1028, %v1024
      %v1517 = vpack.c.b16 %v1029, %v1025
      %v1518 = vpack.c.b16 %v1030, %v1026
      %v1519 = vpack.c.b16 %v1031, %v1027
      %v1520 = vpack.c.b16 %v1036, %v1032
      %v1521 = vpack.c.b16 %v1037, %v1033
      %v1522 = vpack.c.b16 %v1038, %v1034
      %v1523 = vpack.c.b16 %v1039, %v1035
      %v1524 = vpack.c.b16 %v1044, %v1040
      %v1525 = vpack.c.b16 %v1045, %v1041
      %v1526 = vpack.c.b16 %v1046, %v1042
      %v1527 = vpack.c.b16 %v1047, %v1043
      %v1528 = vpack.c.b16 %v1052, %v1048
      %v1529 = vpack.c.b16 %v1053, %v1049
      %v1530 = vpack.c.b16 %v1054, %v1050
      %v1531 = vpack.c.b16 %v1055, %v1051
      %v1532 = vpack.c.b16 %v1060, %v1056
      %v1533 = vpack.c.b16 %v1061, %v1057
      %v1534 = vpack.c.b16 %v1062, %v1058
      %v1535 = vpack.c.b16 %v1063, %v1059
      %v1536 = vpack.c.b16 %v1068, %v1064
      %v1537 = vpack.c.b16 %v1069, %v1065
      %v1538 = vpack.c.b16 %v1070, %v1066
      %v1539 = vpack.c.b16 %v1071, %v1067
      %v1540 = vpack.c.b16 %v1076, %v1072
      %v1541 = vpack.c.b16 %v1077, %v1073
      %v1542 = vpack.c.b16 %v1078, %v1074
      %v1543 = vpack.c.b16 %v1079, %v1075
      %v1544 = vpack.c.b16 %v1084, %v1080
      %v1545 = vpack.c.b16 %v1085, %v1081
      %v1546 = vpack.c.b16 %v1086, %v1082
      %v1547 = vpack.c.b16 %v1087, %v1083
      %v1548 = vpack.c.b16 %v1092, %v1088
      %v1549 = vpack.c.b16 %v1093, %v1089
      %v1550 = vpack.c.b16 %v1094, %v1090
      %v1551 = vpack.c.b16 %v1095, %v1091
      %v1552 = vpack.c.b16 %v1100, %v1096
      %v1553 = vpack.c.b16 %v1101, %v1097
      %v1554 = vpack.c.b16 %v1102, %v1098
      %v1555 = vpack.c.b16 %v1103, %v1099
      %v1556 = vpack.c.b16 %v1108, %v1104
      %v1557 = vpack.c.b16 %v1109, %v1105
      %v1558 = vpack.c.b16 %v1110, %v1106
      %v1559 = vpack.c.b16 %v1111, %v1107
      %v1560 = vpack.c.b16 %v1116, %v1112
      %v1561 = vpack.c.b16 %v1117, %v1113
      %v1562 = vpack.c.b16 %v1118, %v1114
      %v1563 = vpack.c.b16 %v1119, %v1115
      %v1564 = vpack.c.b16 %v1124, %v1120
      %v1565 = vpack.c.b16 %v1125, %v1121
      %v1566 = vpack.c.b16 %v1126, %v1122
      %v1567 = vpack.c.b16 %v1127, %v1123
      %v1568 = vpack.c.b16 %v1132, %v1128
      %v1569 = vpack.c.b16 %v1133, %v1129
      %v1570 = vpack.c.b16 %v1134, %v1130
      %v1571 = vpack.c.b16 %v1135, %v1131
      %v1572 = vpack.c.b16 %v1140, %v1136
      %v1573 = vpack.c.b16 %v1141, %v1137
      %v1574 = vpack.c.b16 %v1142, %v1138
      %v1575 = vpack.c.b16 %v1143, %v1139
      %v1576 = vpack.c.b16 %v1148, %v1144
      %v1577 = vpack.c.b16 %v1149, %v1145
      %v1578 = vpack.c.b16 %v1150, %v1146
      %v1579 = vpack.c.b16 %v1151, %v1147
      %v1580 = vpack.c.b16 %v1156, %v1152
      %v1581 = vpack.c.b16 %v1157, %v1153
      %v1582 = vpack.c.b16 %v1158, %v1154
      %v1583 = vpack.c.b16 %v1159, %v1155
      %v1584 = vpack.c.b16 %v1164, %v1160
      %v1585 = vpack.c.b16 %v1165, %v1161
      %v1586 = vpack.c.b16 %v1166, %v1162
      %v1587 = vpack.c.b16 %v1167, %v1163
      %v1588 = vpack.c.b16 %v1172, %v1168
      %v1589 = vpack.c.b16 %v1173, %v1169
      %v1590 = vpack.c.b16 %v1174, %v1170
      %v1591 = vpack.c.b16 %v1175, %v1171
      %v1592 = vpack.c.b16 %v1180, %v1176
      %v1593 = vpack.c.b16 %v1181, %v1177
      %v1594 = vpack.c.b16 %v1182, %v1178
      %v1595 = vpack.c.b16 %v1183, %v1179
      %v1596 = vpack.c.b16 %v1188, %v1184
      %v1597 = vpack.c.b16 %v1189, %v1185
      %v1598 = vpack.c.b16 %v1190, %v1186
      %v1599 = vpack.c.b16 %v1191, %v1187
      %v1600 = vpack.c.b16 %v1196, %v1192
      %v1601 = vpack.c.b16 %v1197, %v1193
      %v1602 = vpack.c.b16 %v1198, %v1194
      %v1603 = vpack.c.b16 %v1199, %v1195
      %v1604 = vpack.c.b16 %v1204, %v1200
      %v1605 = vpack.c.b16 %v1205, %v1201
      %v1606 = vpack.c.b16 %v1206, %v1202
      %v1607 = vpack.c.b16 %v1207, %v1203
      %v1608 = vpack.c.b16 %v1212, %v1208
      %v1609 = vpack.c.b16 %v1213, %v1209
      %v1610 = vpack.c.b16 %v1214, %v1210
      %v1611 = vpack.c.b16 %v1215, %v1211
      %v1612 = vpack.c.b16 %v1220, %v1216
      %v1613 = vpack.c.b16 %v1221, %v1217
      %v1614 = vpack.c.b16 %v1222, %v1218
      %v1615 = vpack.c.b16 %v1223, %v1219
      %v1616 = vpack.c.b16 %v1228, %v1224
      %v1617 = vpack.c.b16 %v1229, %v1225
      %v1618 = vpack.c.b16 %v1230, %v1226
      %v1619 = vpack.c.b16 %v1231, %v1227
      %v1620 = vpack.c.b16 %v1236, %v1232
      %v1621 = vpack.c.b16 %v1237, %v1233
      %v1622 = vpack.c.b16 %v1238, %v1234
      %v1623 = vpack.c.b16 %v1239, %v1235
      %v1624 = vpack.c.b16 %v1244, %v1240
      %v1625 = vpack.c.b16 %v1245, %v1241
      %v1626 = vpack.c.b16 %v1246, %v1242
      %v1627 = vpack.c.b16 %v1247, %v1243
      %v1628 = vpack.c.b16 %v1252, %v1248
      %v1629 = vpack.c.b16 %v1253, %v1249
      %v1630 = vpack.c.b16 %v1254, %v1250
      %v1631 = vpack.c.b16 %v1255, %v1251
      %v1632 = vpack.c.b16 %v1260, %v1256
      %v1633 = vpack.c.b16 %v1261, %v1257
      %v1634 = vpack.c.b16 %v1262, %v1258
      %v1635 = vpack.c.b16 %v1263, %v1259
      %v1636 = vpack.c.b16 %v1268, %v1264
      %v1637 = vpack.c.b16 %v1269, %v1265
      %v1638 = vpack.c.b16 %v1270, %v1266
      %v1639 = vpack.c.b16 %v1271, %v1267
      %v1640 = vpack.c.b16 %v1276, %v1272
      %v1641 = vpack.c.b16 %v1277, %v1273
      %v1642 = vpack.c.b16 %v1278, %v1274
      %v1643 = vpack.c.b16 %v1279, %v1275
      %v1644 = vpack.c.b16 %v1284, %v1280
      %v1645 = vpack.c.b16 %v1285, %v1281
      %v1646 = vpack.c.b16 %v1286, %v1282
      %v1647 = vpack.c.b16 %v1287, %v1283
      %v1648 = vpack.c.b16 %v1292, %v1288
      %v1649 = vpack.c.b16 %v1293, %v1289
      %v1650 = vpack.c.b16 %v1294, %v1290
      %v1651 = vpack.c.b16 %v1295, %v1291
      %v1652 = vpack.c.b16 %v1300, %v1296
      %v1653 = vpack.c.b16 %v1301, %v1297
      %v1654 = vpack.c.b16 %v1302, %v1298
      %v1655 = vpack.c.b16 %v1303, %v1299
      %v1656 = vpack.c.b16 %v1308, %v1304
      %v1657 = vpack.c.b16 %v1309, %v1305
      %v1658 = vpack.c.b16 %v1310, %v1306
      %v1659 = vpack.c.b16 %v1311, %v1307
      %v1660 = vpack.c.b16 %v1316, %v1312
      %v1661 = vpack.c.b16 %v1317, %v1313
      %v1662 = vpack.c.b16 %v1318, %v1314
      %v1663 = vpack.c.b16 %v1319, %v1315
      %v1664 = vpack.c.b16 %v1324, %v1320
      %v1665 = vpack.c.b16 %v1325, %v1321
      %v1666 = vpack.c.b16 %v1326, %v1322
      %v1667 = vpack.c.b16 %v1327, %v1323
      %v1668 = vpack.c.b16 %v1332, %v1328
      %v1669 = vpack.c.b16 %v1333, %v1329
      %v1670 = vpack.c.b16 %v1334, %v1330
      %v1671 = vpack.c.b16 %v1335, %v1331
      %v1672 = vpack.c.b16 %v1340, %v1336
      %v1673 = vpack.c.b16 %v1341, %v1337
      %v1674 = vpack.c.b16 %v1342, %v1338
      %v1675 = vpack.c.b16 %v1343, %v1339
      %v1676 = vpack.c.b16 %v1348, %v1344
      %v1677 = vpack.c.b16 %v1349, %v1345
      %v1678 = vpack.c.b16 %v1350, %v1346
      %v1679 = vpack.c.b16 %v1351, %v1347
      %v1680 = vpack.c.b16 %v1356, %v1352
      %v1681 = vpack.c.b16 %v1357, %v1353
      %v1682 = vpack.c.b16 %v1358, %v1354
      %v1683 = vpack.c.b16 %v1359, %v1355
      %v1684 = vpack.c.b16 %v1364, %v1360
      %v1685 = vpack.c.b16 %v1365, %v1361
      %v1686 = vpack.c.b16 %v1366, %v1362
      %v1687 = vpack.c.b16 %v1367, %v1363
      %v1688 = vpack.c.b16 %v1372, %v1368
      %v1689 = vpack.c.b16 %v1373, %v1369
      %v1690 = vpack.c.b16 %v1374, %v1370
      %v1691 = vpack.c.b16 %v1375, %v1371
      %v1692 = vpack.c.b16 %v1380, %v1376
      %v1693 = vpack.c.b16 %v1381, %v1377
      %v1694 = vpack.c.b16 %v1382, %v1378
      %v1695 = vpack.c.b16 %v1383, %v1379
      %v1696 = vpack.c.b16 %v1388, %v1384
      %v1697 = vpack.c.b16 %v1389, %v1385
      %v1698 = vpack.c.b16 %v1390, %v1386
      %v1699 = vpack.c.b16 %v1391, %v1387
      %v1700 = vpack.c.b16 %v1396, %v1392
      %v1701 = vpack.c.b16 %v1397, %v1393
      %v1702 = vpack.c.b16 %v1398, %v1394
      %v1703 = vpack.c.b16 %v1399, %v1395
      %v1704 = vpack.c.b16 %v1404, %v1400
      %v1705 = vpack.c.b16 %v1405, %v1401
      %v1706 = vpack.c.b16 %v1406, %v1402
      %v1707 = vpack.c.b16 %v1407, %v1403
      %v1708 = vpack.c.b16 %v1412, %v1408
      %v1709 = vpack.c.b16 %v1413, %v1409
      %v1710 = vpack.c.b16 %v1414, %v1410
      %v1711 = vpack.c.b16 %v1415, %v1411
      %v1712 = vpack.c.b16 %v1420, %v1416
      %v1713 = vpack.c.b16 %v1421, %v1417
      %v1714 = vpack.c.b16 %v1422, %v1418
      %v1715 = vpack.c.b16 %v1423, %v1419
      %v1716 = vpack.c.b16 %v1428, %v1424
      %v1717 = vpack.c.b16 %v1429, %v1425
      %v1718 = vpack.c.b16 %v1430, %v1426
      %v1719 = vpack.c.b16 %v1431, %v1427
      %v1720 = vpack.c.b16 %v1436, %v1432
      %v1721 = vpack.c.b16 %v1437, %v1433
      %v1722 = vpack.c.b16 %v1438, %v1434
      %v1723 = vpack.c.b16 %v1439, %v1435
      %v1724 = vpack.c.b16 %v1444, %v1440
      %v1725 = vpack.c.b16 %v1445, %v1441
      %v1726 = vpack.c.b16 %v1446, %v1442
      %v1727 = vpack.c.b16 %v1447, %v1443
      %v1728 = vpack.c.b16 %v1452, %v1448
      %v1729 = vpack.c.b16 %v1453, %v1449
      %v1730 = vpack.c.b16 %v1454, %v1450
      %v1731 = vpack.c.b16 %v1455, %v1451
      %v1732 = vpack.c.b16 %v1460, %v1456
      %v1733 = vpack.c.b16 %v1461, %v1457
      %v1734 = vpack.c.b16 %v1462, %v1458
      %v1735 = vpack.c.b16 %v1463, %v1459
      %v1736 = vpack.c.b16 %v1468, %v1464
      %v1737 = vpack.c.b16 %v1469, %v1465
      %v1738 = vpack.c.b16 %v1470, %v1466
      %v1739 = vpack.c.b16 %v1471, %v1467
      %v1740 = vpack.c.b16 %v1476, %v1472
      %v1741 = vpack.c.b16 %v1477, %v1473
      %v1742 = vpack.c.b16 %v1478, %v1474
      %v1743 = vpack.c.b16 %v1479, %v1475
      %v1744 = vpack.c.b16 %v1484, %v1480
      %v1745 = vpack.c.b16 %v1485, %v1481
      %v1746 = vpack.c.b16 %v1486, %v1482
      %v1747 = vpack.c.b16 %v1487, %v1483
      %v1748 = vpack.c.b16 %v1492, %v1488
      %v1749 = vpack.c.b16 %v1493, %v1489
      %v1750 = vpack.c.b16 %v1494, %v1490
      %v1751 = vpack.c.b16 %v1495, %v1491
      %2008 = vmatprep.subr.bf16.mxu0 %v1497
      %2009 = vmatpush1.bf16.msra.mxu0 %v1496
      %2010 = vmatprep.subr.bf16.mxu0 %v1501
      %2011 = vmatpush1.bf16.msra.mxu0 %v1500
      %2012 = vmatprep.subr.bf16.mxu0 %v1505
      %2013 = vmatpush1.bf16.msra.mxu0 %v1504
      %2014 = vmatprep.subr.bf16.mxu0 %v1509
      %2015 = vmatpush1.bf16.msra.mxu0 %v1508
      %2016 = vmatprep.subr.bf16.mxu0 %v1513
      %2017 = vmatpush1.bf16.msra.mxu0 %v1512
      %2018 = vmatprep.subr.bf16.mxu0 %v1517
      %2019 = vmatpush1.bf16.msra.mxu0 %v1516
      %2020 = vmatprep.subr.bf16.mxu0 %v1521
      %2021 = vmatpush1.bf16.msra.mxu0 %v1520
      %2022 = vmatprep.subr.bf16.mxu0 %v1525
      %2023 = vmatpush1.bf16.msra.mxu0 %v1524
      %2024 = vmatprep.subr.bf16.mxu0 %v1529
      %2025 = vmatpush1.bf16.msra.mxu0 %v1528
      %2026 = vmatprep.subr.bf16.mxu0 %v1533
      %2027 = vmatpush1.bf16.msra.mxu0 %v1532
      %2028 = vmatprep.subr.bf16.mxu0 %v1537
      %2029 = vmatpush1.bf16.msra.mxu0 %v1536
      %2030 = vmatprep.subr.bf16.mxu0 %v1541
      %2031 = vmatpush1.bf16.msra.mxu0 %v1540
      %2032 = vmatprep.subr.bf16.mxu0 %v1545
      %2033 = vmatpush1.bf16.msra.mxu0 %v1544
      %2034 = vmatprep.subr.bf16.mxu0 %v1549
      %2035 = vmatpush1.bf16.msra.mxu0 %v1548
      %2036 = vmatprep.subr.bf16.mxu0 %v1553
      %2037 = vmatpush1.bf16.msra.mxu0 %v1552
      %2038 = vmatprep.subr.bf16.mxu0 %v1557
      %2039 = vmatpush1.bf16.msra.mxu0 %v1556
      %2040 = vmatprep.mubr.bf16.mxu0 %v713
      %2041 = vmatmul.mubr.bf16.gmra.mrb[0].mxu0 %v712
      %v2042 = vpop.f32.mrb[0].mxu0
      %v2043 = vadd.f32 0.0, %v2042
      %v2044 = vpop.f32.mrb[0].mxu0
      %v2045 = vadd.f32 0.0, %v2044
      %v2046 = vpop.f32.mrb[0].mxu0
      %v2047 = vpop.f32.mrb[0].mxu0
      %2048 = vdwg.mxu0
      %2049 = vmatprep.subr.bf16.mxu0 %v1561
      %2050 = vmatpush1.bf16.msra.mxu0 %v1560
      %2051 = vmatprep.subr.bf16.mxu0 %v1565
      %2052 = vmatpush1.bf16.msra.mxu0 %v1564
      %2053 = vmatprep.subr.bf16.mxu0 %v1569
      %2054 = vmatpush1.bf16.msra.mxu0 %v1568
      %2055 = vmatprep.subr.bf16.mxu0 %v1573
      %2056 = vmatpush1.bf16.msra.mxu0 %v1572
      %2057 = vmatprep.subr.bf16.mxu0 %v1577
      %2058 = vmatpush1.bf16.msra.mxu0 %v1576
      %2059 = vmatprep.subr.bf16.mxu0 %v1581
      %2060 = vmatpush1.bf16.msra.mxu0 %v1580
      %2061 = vmatprep.subr.bf16.mxu0 %v1585
      %2062 = vmatpush1.bf16.msra.mxu0 %v1584
      %2063 = vmatprep.subr.bf16.mxu0 %v1589
      %2064 = vmatpush1.bf16.msra.mxu0 %v1588
      %2065 = vmatprep.subr.bf16.mxu0 %v1593
      %2066 = vmatpush1.bf16.msra.mxu0 %v1592
      %2067 = vmatprep.subr.bf16.mxu0 %v1597
      %2068 = vmatpush1.bf16.msra.mxu0 %v1596
      %2069 = vmatprep.subr.bf16.mxu0 %v1601
      %2070 = vmatpush1.bf16.msra.mxu0 %v1600
      %2071 = vmatprep.subr.bf16.mxu0 %v1605
      %2072 = vmatpush1.bf16.msra.mxu0 %v1604
      %2073 = vmatprep.subr.bf16.mxu0 %v1609
      %2074 = vmatpush1.bf16.msra.mxu0 %v1608
      %2075 = vmatprep.subr.bf16.mxu0 %v1613
      %2076 = vmatpush1.bf16.msra.mxu0 %v1612
      %2077 = vmatprep.subr.bf16.mxu0 %v1617
      %2078 = vmatpush1.bf16.msra.mxu0 %v1616
      %2079 = vmatprep.subr.bf16.mxu0 %v1621
      %2080 = vmatpush1.bf16.msra.mxu0 %v1620
      %2081 = vmatprep.mubr.bf16.mxu0 %v715
      %2082 = vmatmul.mubr.bf16.gmra.mrb[0].mxu0 %v714
      %v2083 = vpop.f32.mrb[0].mxu0
      %v2084 = vadd.f32 %v2043, %v2083
      %v2085 = vpop.f32.mrb[0].mxu0
      %v2086 = vadd.f32 %v2045, %v2085
      %v2087 = vpop.f32.mrb[0].mxu0
      %v2088 = vpop.f32.mrb[0].mxu0
      %2089 = vdwg.mxu0
      %2090 = vmatprep.subr.bf16.mxu0 %v1625
      %2091 = vmatpush1.bf16.msra.mxu0 %v1624
      %2092 = vmatprep.subr.bf16.mxu0 %v1629
      %2093 = vmatpush1.bf16.msra.mxu0 %v1628
      %2094 = vmatprep.subr.bf16.mxu0 %v1633
      %2095 = vmatpush1.bf16.msra.mxu0 %v1632
      %2096 = vmatprep.subr.bf16.mxu0 %v1637
      %2097 = vmatpush1.bf16.msra.mxu0 %v1636
      %2098 = vmatprep.subr.bf16.mxu0 %v1641
      %2099 = vmatpush1.bf16.msra.mxu0 %v1640
      %2100 = vmatprep.subr.bf16.mxu0 %v1645
      %2101 = vmatpush1.bf16.msra.mxu0 %v1644
      %2102 = vmatprep.subr.bf16.mxu0 %v1649
      %2103 = vmatpush1.bf16.msra.mxu0 %v1648
      %2104 = vmatprep.subr.bf16.mxu0 %v1653
      %2105 = vmatpush1.bf16.msra.mxu0 %v1652
      %2106 = vmatprep.subr.bf16.mxu0 %v1657
      %2107 = vmatpush1.bf16.msra.mxu0 %v1656
      %2108 = vmatprep.subr.bf16.mxu0 %v1661
      %2109 = vmatpush1.bf16.msra.mxu0 %v1660
      %2110 = vmatprep.subr.bf16.mxu0 %v1665
      %2111 = vmatpush1.bf16.msra.mxu0 %v1664
      %2112 = vmatprep.subr.bf16.mxu0 %v1669
      %2113 = vmatpush1.bf16.msra.mxu0 %v1668
      %2114 = vmatprep.subr.bf16.mxu0 %v1673
      %2115 = vmatpush1.bf16.msra.mxu0 %v1672
      %2116 = vmatprep.subr.bf16.mxu0 %v1677
      %2117 = vmatpush1.bf16.msra.mxu0 %v1676
      %2118 = vmatprep.subr.bf16.mxu0 %v1681
      %2119 = vmatpush1.bf16.msra.mxu0 %v1680
      %2120 = vmatprep.subr.bf16.mxu0 %v1685
      %2121 = vmatpush1.bf16.msra.mxu0 %v1684
      %2122 = vmatprep.mubr.bf16.mxu0 %v717
      %2123 = vmatmul.mubr.bf16.gmra.mrb[0].mxu0 %v716
      %v2124 = vpop.f32.mrb[0].mxu0
      %v2125 = vadd.f32 %v2084, %v2124
      %v2126 = vpop.f32.mrb[0].mxu0
      %v2127 = vadd.f32 %v2086, %v2126
      %v2128 = vpop.f32.mrb[0].mxu0
      %v2129 = vpop.f32.mrb[0].mxu0
      %2130 = vdwg.mxu0
      %2131 = vmatprep.subr.bf16.mxu0 %v1689
      %2132 = vmatpush1.bf16.msra.mxu0 %v1688
      %2133 = vmatprep.subr.bf16.mxu0 %v1693
      %2134 = vmatpush1.bf16.msra.mxu0 %v1692
      %2135 = vmatprep.subr.bf16.mxu0 %v1697
      %2136 = vmatpush1.bf16.msra.mxu0 %v1696
      %2137 = vmatprep.subr.bf16.mxu0 %v1701
      %2138 = vmatpush1.bf16.msra.mxu0 %v1700
      %2139 = vmatprep.subr.bf16.mxu0 %v1705
      %2140 = vmatpush1.bf16.msra.mxu0 %v1704
      %2141 = vmatprep.subr.bf16.mxu0 %v1709
      %2142 = vmatpush1.bf16.msra.mxu0 %v1708
      %2143 = vmatprep.subr.bf16.mxu0 %v1713
      %2144 = vmatpush1.bf16.msra.mxu0 %v1712
      %2145 = vmatprep.subr.bf16.mxu0 %v1717
      %2146 = vmatpush1.bf16.msra.mxu0 %v1716
      %2147 = vmatprep.subr.bf16.mxu0 %v1721
      %2148 = vmatpush1.bf16.msra.mxu0 %v1720
      %2149 = vmatprep.subr.bf16.mxu0 %v1725
      %2150 = vmatpush1.bf16.msra.mxu0 %v1724
      %2151 = vmatprep.subr.bf16.mxu0 %v1729
      %2152 = vmatpush1.bf16.msra.mxu0 %v1728
      %2153 = vmatprep.subr.bf16.mxu0 %v1733
      %2154 = vmatpush1.bf16.msra.mxu0 %v1732
      %2155 = vmatprep.subr.bf16.mxu0 %v1737
      %2156 = vmatpush1.bf16.msra.mxu0 %v1736
      %2157 = vmatprep.subr.bf16.mxu0 %v1741
      %2158 = vmatpush1.bf16.msra.mxu0 %v1740
      %2159 = vmatprep.subr.bf16.mxu0 %v1745
      %2160 = vmatpush1.bf16.msra.mxu0 %v1744
      %2161 = vmatprep.subr.bf16.mxu0 %v1749
      %2162 = vmatpush1.bf16.msra.mxu0 %v1748
      %2163 = vmatprep.mubr.bf16.mxu0 %v719
      %2164 = vmatmul.mubr.bf16.gmra.mrb[0].mxu0 %v718
      %v2165 = vpop.f32.mrb[0].mxu0
      %v2166 = vadd.f32 %v2125, %v2165
      %v2167 = vpop.f32.mrb[0].mxu0
      %v2168 = vadd.f32 %v2127, %v2167
      %v2169 = vpop.f32.mrb[0].mxu0
      %v2170 = vpop.f32.mrb[0].mxu0
      %2171 = vdwg.mxu0
      %2172 = vmatprep.subr.bf16.mxu0 %v1499
      %2173 = vmatpush1.bf16.msra.mxu0 %v1498
      %2174 = vmatprep.subr.bf16.mxu0 %v1503
      %2175 = vmatpush1.bf16.msra.mxu0 %v1502
      %2176 = vmatprep.subr.bf16.mxu0 %v1507
      %2177 = vmatpush1.bf16.msra.mxu0 %v1506
      %2178 = vmatprep.subr.bf16.mxu0 %v1511
      %2179 = vmatpush1.bf16.msra.mxu0 %v1510
      %2180 = vmatprep.subr.bf16.mxu0 %v1515
      %2181 = vmatpush1.bf16.msra.mxu0 %v1514
      %2182 = vmatprep.subr.bf16.mxu0 %v1519
      %2183 = vmatpush1.bf16.msra.mxu0 %v1518
      %2184 = vmatprep.subr.bf16.mxu0 %v1523
      %2185 = vmatpush1.bf16.msra.mxu0 %v1522
      %2186 = vmatprep.subr.bf16.mxu0 %v1527
      %2187 = vmatpush1.bf16.msra.mxu0 %v1526
      %2188 = vmatprep.subr.bf16.mxu0 %v1531
      %2189 = vmatpush1.bf16.msra.mxu0 %v1530
      %2190 = vmatprep.subr.bf16.mxu0 %v1535
      %2191 = vmatpush1.bf16.msra.mxu0 %v1534
      %2192 = vmatprep.subr.bf16.mxu0 %v1539
      %2193 = vmatpush1.bf16.msra.mxu0 %v1538
      %2194 = vmatprep.subr.bf16.mxu0 %v1543
      %2195 = vmatpush1.bf16.msra.mxu0 %v1542
      %2196 = vmatprep.subr.bf16.mxu0 %v1547
      %2197 = vmatpush1.bf16.msra.mxu0 %v1546
      %2198 = vmatprep.subr.bf16.mxu0 %v1551
      %2199 = vmatpush1.bf16.msra.mxu0 %v1550
      %2200 = vmatprep.subr.bf16.mxu0 %v1555
      %2201 = vmatpush1.bf16.msra.mxu0 %v1554
      %2202 = vmatprep.subr.bf16.mxu0 %v1559
      %2203 = vmatpush1.bf16.msra.mxu0 %v1558
      %2204 = vmatprep.mubr.bf16.mxu0 %v713
      %2205 = vmatmul.mubr.bf16.gmra.mrb[0].mxu0 %v712
      %v2206 = vpop.f32.mrb[0].mxu0
      %v2207 = vadd.f32 0.0, %v2206
      %v2208 = vpop.f32.mrb[0].mxu0
      %v2209 = vadd.f32 0.0, %v2208
      %v2210 = vpop.f32.mrb[0].mxu0
      %v2211 = vpop.f32.mrb[0].mxu0
      %2212 = vdwg.mxu0
      %2213 = vmatprep.subr.bf16.mxu0 %v1563
      %2214 = vmatpush1.bf16.msra.mxu0 %v1562
      %2215 = vmatprep.subr.bf16.mxu0 %v1567
      %2216 = vmatpush1.bf16.msra.mxu0 %v1566
      %2217 = vmatprep.subr.bf16.mxu0 %v1571
      %2218 = vmatpush1.bf16.msra.mxu0 %v1570
      %2219 = vmatprep.subr.bf16.mxu0 %v1575
      %2220 = vmatpush1.bf16.msra.mxu0 %v1574
      %2221 = vmatprep.subr.bf16.mxu0 %v1579
      %2222 = vmatpush1.bf16.msra.mxu0 %v1578
      %2223 = vmatprep.subr.bf16.mxu0 %v1583
      %2224 = vmatpush1.bf16.msra.mxu0 %v1582
      %2225 = vmatprep.subr.bf16.mxu0 %v1587
      %2226 = vmatpush1.bf16.msra.mxu0 %v1586
      %2227 = vmatprep.subr.bf16.mxu0 %v1591
      %2228 = vmatpush1.bf16.msra.mxu0 %v1590
      %2229 = vmatprep.subr.bf16.mxu0 %v1595
      %2230 = vmatpush1.bf16.msra.mxu0 %v1594
      %2231 = vmatprep.subr.bf16.mxu0 %v1599
      %2232 = vmatpush1.bf16.msra.mxu0 %v1598
      %2233 = vmatprep.subr.bf16.mxu0 %v1603
      %2234 = vmatpush1.bf16.msra.mxu0 %v1602
      %2235 = vmatprep.subr.bf16.mxu0 %v1607
      %2236 = vmatpush1.bf16.msra.mxu0 %v1606
      %2237 = vmatprep.subr.bf16.mxu0 %v1611
      %2238 = vmatpush1.bf16.msra.mxu0 %v1610
      %2239 = vmatprep.subr.bf16.mxu0 %v1615
      %2240 = vmatpush1.bf16.msra.mxu0 %v1614
      %2241 = vmatprep.subr.bf16.mxu0 %v1619
      %2242 = vmatpush1.bf16.msra.mxu0 %v1618
      %2243 = vmatprep.subr.bf16.mxu0 %v1623
      %2244 = vmatpush1.bf16.msra.mxu0 %v1622
      %2245 = vmatprep.mubr.bf16.mxu0 %v715
      %2246 = vmatmul.mubr.bf16.gmra.mrb[0].mxu0 %v714
      %v2247 = vpop.f32.mrb[0].mxu0
      %v2248 = vadd.f32 %v2207, %v2247
      %v2249 = vpop.f32.mrb[0].mxu0
      %v2250 = vadd.f32 %v2209, %v2249
      %v2251 = vpop.f32.mrb[0].mxu0
      %v2252 = vpop.f32.mrb[0].mxu0
      %2253 = vdwg.mxu0
      %2254 = vmatprep.subr.bf16.mxu0 %v1627
      %2255 = vmatpush1.bf16.msra.mxu0 %v1626
      %2256 = vmatprep.subr.bf16.mxu0 %v1631
      %2257 = vmatpush1.bf16.msra.mxu0 %v1630
      %2258 = vmatprep.subr.bf16.mxu0 %v1635
      %2259 = vmatpush1.bf16.msra.mxu0 %v1634
      %2260 = vmatprep.subr.bf16.mxu0 %v1639
      %2261 = vmatpush1.bf16.msra.mxu0 %v1638
      %2262 = vmatprep.subr.bf16.mxu0 %v1643
      %2263 = vmatpush1.bf16.msra.mxu0 %v1642
      %2264 = vmatprep.subr.bf16.mxu0 %v1647
      %2265 = vmatpush1.bf16.msra.mxu0 %v1646
      %2266 = vmatprep.subr.bf16.mxu0 %v1651
      %2267 = vmatpush1.bf16.msra.mxu0 %v1650
      %2268 = vmatprep.subr.bf16.mxu0 %v1655
      %2269 = vmatpush1.bf16.msra.mxu0 %v1654
      %2270 = vmatprep.subr.bf16.mxu0 %v1659
      %2271 = vmatpush1.bf16.msra.mxu0 %v1658
      %2272 = vmatprep.subr.bf16.mxu0 %v1663
      %2273 = vmatpush1.bf16.msra.mxu0 %v1662
      %2274 = vmatprep.subr.bf16.mxu0 %v1667
      %2275 = vmatpush1.bf16.msra.mxu0 %v1666
      %2276 = vmatprep.subr.bf16.mxu0 %v1671
      %2277 = vmatpush1.bf16.msra.mxu0 %v1670
      %2278 = vmatprep.subr.bf16.mxu0 %v1675
      %2279 = vmatpush1.bf16.msra.mxu0 %v1674
      %2280 = vmatprep.subr.bf16.mxu0 %v1679
      %2281 = vmatpush1.bf16.msra.mxu0 %v1678
      %2282 = vmatprep.subr.bf16.mxu0 %v1683
      %2283 = vmatpush1.bf16.msra.mxu0 %v1682
      %2284 = vmatprep.subr.bf16.mxu0 %v1687
      %2285 = vmatpush1.bf16.msra.mxu0 %v1686
      %2286 = vmatprep.mubr.bf16.mxu0 %v717
      %2287 = vmatmul.mubr.bf16.gmra.mrb[0].mxu0 %v716
      %v2288 = vpop.f32.mrb[0].mxu0
      %v2289 = vadd.f32 %v2248, %v2288
      %v2290 = vpop.f32.mrb[0].mxu0
      %v2291 = vadd.f32 %v2250, %v2290
      %v2292 = vpop.f32.mrb[0].mxu0
      %v2293 = vpop.f32.mrb[0].mxu0
      %2294 = vdwg.mxu0
      %2295 = vmatprep.subr.bf16.mxu0 %v1691
      %2296 = vmatpush1.bf16.msra.mxu0 %v1690
      %2297 = vmatprep.subr.bf16.mxu0 %v1695
      %2298 = vmatpush1.bf16.msra.mxu0 %v1694
      %2299 = vmatprep.subr.bf16.mxu0 %v1699
      %2300 = vmatpush1.bf16.msra.mxu0 %v1698
      %2301 = vmatprep.subr.bf16.mxu0 %v1703
      %2302 = vmatpush1.bf16.msra.mxu0 %v1702
      %2303 = vmatprep.subr.bf16.mxu0 %v1707
      %2304 = vmatpush1.bf16.msra.mxu0 %v1706
      %2305 = vmatprep.subr.bf16.mxu0 %v1711
      %2306 = vmatpush1.bf16.msra.mxu0 %v1710
      %2307 = vmatprep.subr.bf16.mxu0 %v1715
      %2308 = vmatpush1.bf16.msra.mxu0 %v1714
      %2309 = vmatprep.subr.bf16.mxu0 %v1719
      %2310 = vmatpush1.bf16.msra.mxu0 %v1718
      %2311 = vmatprep.subr.bf16.mxu0 %v1723
      %2312 = vmatpush1.bf16.msra.mxu0 %v1722
      %2313 = vmatprep.subr.bf16.mxu0 %v1727
      %2314 = vmatpush1.bf16.msra.mxu0 %v1726
      %2315 = vmatprep.subr.bf16.mxu0 %v1731
      %2316 = vmatpush1.bf16.msra.mxu0 %v1730
      %2317 = vmatprep.subr.bf16.mxu0 %v1735
      %2318 = vmatpush1.bf16.msra.mxu0 %v1734
      %2319 = vmatprep.subr.bf16.mxu0 %v1739
      %2320 = vmatpush1.bf16.msra.mxu0 %v1738
      %2321 = vmatprep.subr.bf16.mxu0 %v1743
      %2322 = vmatpush1.bf16.msra.mxu0 %v1742
      %2323 = vmatprep.subr.bf16.mxu0 %v1747
      %2324 = vmatpush1.bf16.msra.mxu0 %v1746
      %2325 = vmatprep.subr.bf16.mxu0 %v1751
      %2326 = vmatpush1.bf16.msra.mxu0 %v1750
      %2327 = vmatprep.mubr.bf16.mxu0 %v719
      %2328 = vmatmul.mubr.bf16.gmra.mrb[0].mxu0 %v718
      %v2329 = vpop.f32.mrb[0].mxu0
      %v2330 = vadd.f32 %v2289, %v2329
      %v2331 = vpop.f32.mrb[0].mxu0
      %v2332 = vadd.f32 %v2291, %v2331
      %v2333 = vpop.f32.mrb[0].mxu0
      %v2334 = vpop.f32.mrb[0].mxu0
      %2335 = vdwg.mxu0
      %v2336 = vadd.f32 %v436, %v2166
      %v2337 = vadd.f32 %v437, %v2168
      %v2338 = vadd.f32 %v438, %v2330
      %v2339 = vadd.f32 %v439, %v2332
      %2340 = vst [vmem:[#allocation2] sm:$0xff] %v2336
      %2341 = vst [vmem:[#allocation2 + $0x8] sm:$0xff] %v2337
      %2342 = vst [vmem:[#allocation2 + $0x10] sm:$0xff] %v2338
      %2343 = vst [vmem:[#allocation2 + $0x18] sm:$0xff] %v2339
      %p2344 = scmp.eq.s32.totalorder %s24, 3
      // Predicated region
      $region73: #{siamese_pinet_forward.3} parent=67 // pred_check
        %p2345 = pneg %p2344
      $region74: #{siamese_pinet_forward.3} parent=67 // pred_check_branch
        %2347 = sbr.rel (%p2345) target = $region76
      $region75: #{siamese_pinet_forward.3} parent=67 // pred_region
        %v2348 = vld [vmem:[#allocation2] sm:$0xff]
        %v2349 = vld [vmem:[#allocation2 + $0x8] sm:$0xff]
        %v2350 = vld [vmem:[#allocation2 + $0x10] sm:$0xff]
        %v2351 = vld [vmem:[#allocation2 + $0x18] sm:$0xff]
        %v2352 = vld [vmem:[%s2] sm:$0xf]
        %v2354 = vlaneseq
        %v2355 = vshrl.u32 %v2354, 7
        %v2356 = vsub.s32 0, %v2355
        %v2357 = vrot.slane %v2352, %v2356
        %v2358 = vlaneseq
        %v2359 = vshrl.u32 %v2358, 7
        %v2360 = vsub.s32 1, %v2359
        %v2361 = vrot.slane %v2352, %v2360
        %v2362 = vlaneseq
        %v2363 = vshrl.u32 %v2362, 7
        %v2364 = vsub.s32 2, %v2363
        %v2365 = vrot.slane %v2352, %v2364
        %v2366 = vlaneseq
        %v2367 = vshrl.u32 %v2366, 7
        %v2368 = vsub.s32 3, %v2367
        %v2369 = vrot.slane %v2352, %v2368
        %v2374 = vadd.f32 %v2348, %v2357
        %v2375 = vadd.f32 %v2349, %v2361
        %v2376 = vadd.f32 %v2350, %v2365
        %v2377 = vadd.f32 %v2351, %v2369
        %v2378 = vld [vmem:[%s6] sm:$0xf]
        %v2379 = vadd.f32 %v2378, 1e-05
        %v2380 = vrsqrt.pop %v2379
        %v2381 = vld [vmem:[%s5] sm:$0xf]
        %v2383 = vlaneseq
        %v2384 = vshrl.u32 %v2383, 7
        %v2385 = vsub.s32 0, %v2384
        %v2386 = vrot.slane %v2381, %v2385
        %v2387 = vlaneseq
        %v2388 = vshrl.u32 %v2387, 7
        %v2389 = vsub.s32 1, %v2388
        %v2390 = vrot.slane %v2381, %v2389
        %v2391 = vlaneseq
        %v2392 = vshrl.u32 %v2391, 7
        %v2393 = vsub.s32 2, %v2392
        %v2394 = vrot.slane %v2381, %v2393
        %v2395 = vlaneseq
        %v2396 = vshrl.u32 %v2395, 7
        %v2397 = vsub.s32 3, %v2396
        %v2398 = vrot.slane %v2381, %v2397
        %v2403 = vsub.f32 %v2374, %v2386
        %v2404 = vsub.f32 %v2375, %v2390
        %v2405 = vsub.f32 %v2376, %v2394
        %v2406 = vsub.f32 %v2377, %v2398
        %v2407 = vld [vmem:[%s3] sm:$0xf]
        %v2408 = vmul.f32 %v2380, %v2407
        %v2410 = vlaneseq
        %v2411 = vshrl.u32 %v2410, 7
        %v2412 = vsub.s32 0, %v2411
        %v2413 = vrot.slane %v2408, %v2412
        %v2414 = vlaneseq
        %v2415 = vshrl.u32 %v2414, 7
        %v2416 = vsub.s32 1, %v2415
        %v2417 = vrot.slane %v2408, %v2416
        %v2418 = vlaneseq
        %v2419 = vshrl.u32 %v2418, 7
        %v2420 = vsub.s32 2, %v2419
        %v2421 = vrot.slane %v2408, %v2420
        %v2422 = vlaneseq
        %v2423 = vshrl.u32 %v2422, 7
        %v2424 = vsub.s32 3, %v2423
        %v2425 = vrot.slane %v2408, %v2424
        %v2430 = vmul.f32 %v2403, %v2413
        %v2431 = vmul.f32 %v2404, %v2417
        %v2432 = vmul.f32 %v2405, %v2421
        %v2433 = vmul.f32 %v2406, %v2425
        %v2434 = vld [vmem:[%s4] sm:$0xf]
        %v2436 = vlaneseq
        %v2437 = vshrl.u32 %v2436, 7
        %v2438 = vsub.s32 0, %v2437
        %v2439 = vrot.slane %v2434, %v2438
        %v2440 = vlaneseq
        %v2441 = vshrl.u32 %v2440, 7
        %v2442 = vsub.s32 1, %v2441
        %v2443 = vrot.slane %v2434, %v2442
        %v2444 = vlaneseq
        %v2445 = vshrl.u32 %v2444, 7
        %v2446 = vsub.s32 2, %v2445
        %v2447 = vrot.slane %v2434, %v2446
        %v2448 = vlaneseq
        %v2449 = vshrl.u32 %v2448, 7
        %v2450 = vsub.s32 3, %v2449
        %v2451 = vrot.slane %v2434, %v2450
        %v2456 = vadd.f32 %v2430, %v2439
        %v2457 = vadd.f32 %v2431, %v2443
        %v2458 = vadd.f32 %v2432, %v2447
        %v2459 = vadd.f32 %v2433, %v2451
        %v2460 = vmax.f32 %v2456, 0.0
        %v2461 = vmax.f32 %v2457, 0.0
        %v2462 = vmax.f32 %v2458, 0.0
        %v2463 = vmax.f32 %v2459, 0.0
        %v2464 = vpack.c.bf16 %v2460, %v2460
        %v2465 = vpack.c.bf16 %v2461, %v2461
        %v2466 = vpack.c.bf16 %v2462, %v2462
        %v2467 = vpack.c.bf16 %v2463, %v2463
        %v2468 = vld [vmem:[%s7] sm:$0xf]
        %v2469 = vld [vmem:[%s7 + $0x4] sm:$0xf]
        %v2470 = vld [vmem:[%s7 + $0x8] sm:$0xf]
        %v2471 = vld [vmem:[%s7 + $0xc] sm:$0xf]
        %v2472 = vld [vmem:[%s7 + $0x10] sm:$0xf]
        %v2473 = vld [vmem:[%s7 + $0x14] sm:$0xf]
        %v2474 = vld [vmem:[%s7 + $0x18] sm:$0xf]
        %v2475 = vld [vmem:[%s7 + $0x1c] sm:$0xf]
        %v2476 = vld [vmem:[%s7 + $0x20] sm:$0xf]
        %v2477 = vld [vmem:[%s7 + $0x24] sm:$0xf]
        %v2478 = vld [vmem:[%s7 + $0x28] sm:$0xf]
        %v2479 = vld [vmem:[%s7 + $0x2c] sm:$0xf]
        %v2480 = vld [vmem:[%s7 + $0x30] sm:$0xf]
        %v2481 = vld [vmem:[%s7 + $0x34] sm:$0xf]
        %v2482 = vld [vmem:[%s7 + $0x38] sm:$0xf]
        %v2483 = vld [vmem:[%s7 + $0x3c] sm:$0xf]
        %v2484 = vld [vmem:[%s7 + $0x40] sm:$0xf]
        %v2485 = vld [vmem:[%s7 + $0x44] sm:$0xf]
        %v2486 = vld [vmem:[%s7 + $0x48] sm:$0xf]
        %v2487 = vld [vmem:[%s7 + $0x4c] sm:$0xf]
        %v2488 = vld [vmem:[%s7 + $0x50] sm:$0xf]
        %v2489 = vld [vmem:[%s7 + $0x54] sm:$0xf]
        %v2490 = vld [vmem:[%s7 + $0x58] sm:$0xf]
        %v2491 = vld [vmem:[%s7 + $0x5c] sm:$0xf]
        %v2492 = vld [vmem:[%s7 + $0x60] sm:$0xf]
        %v2493 = vld [vmem:[%s7 + $0x64] sm:$0xf]
        %v2494 = vld [vmem:[%s7 + $0x68] sm:$0xf]
        %v2495 = vld [vmem:[%s7 + $0x6c] sm:$0xf]
        %v2496 = vld [vmem:[%s7 + $0x70] sm:$0xf]
        %v2497 = vld [vmem:[%s7 + $0x74] sm:$0xf]
        %v2498 = vld [vmem:[%s7 + $0x78] sm:$0xf]
        %v2499 = vld [vmem:[%s7 + $0x7c] sm:$0xf]
        %v2500 = vld [vmem:[%s7 + $0x80] sm:$0xf]
        %v2501 = vld [vmem:[%s7 + $0x84] sm:$0xf]
        %v2502 = vld [vmem:[%s7 + $0x88] sm:$0xf]
        %v2503 = vld [vmem:[%s7 + $0x8c] sm:$0xf]
        %v2504 = vld [vmem:[%s7 + $0x90] sm:$0xf]
        %v2505 = vld [vmem:[%s7 + $0x94] sm:$0xf]
        %v2506 = vld [vmem:[%s7 + $0x98] sm:$0xf]
        %v2507 = vld [vmem:[%s7 + $0x9c] sm:$0xf]
        %v2508 = vld [vmem:[%s7 + $0xa0] sm:$0xf]
        %v2509 = vld [vmem:[%s7 + $0xa4] sm:$0xf]
        %v2510 = vld [vmem:[%s7 + $0xa8] sm:$0xf]
        %v2511 = vld [vmem:[%s7 + $0xac] sm:$0xf]
        %v2512 = vld [vmem:[%s7 + $0xb0] sm:$0xf]
        %v2513 = vld [vmem:[%s7 + $0xb4] sm:$0xf]
        %v2514 = vld [vmem:[%s7 + $0xb8] sm:$0xf]
        %v2515 = vld [vmem:[%s7 + $0xbc] sm:$0xf]
        %v2516 = vld [vmem:[%s7 + $0xc0] sm:$0xf]
        %v2517 = vld [vmem:[%s7 + $0xc4] sm:$0xf]
        %v2518 = vld [vmem:[%s7 + $0xc8] sm:$0xf]
        %v2519 = vld [vmem:[%s7 + $0xcc] sm:$0xf]
        %v2520 = vld [vmem:[%s7 + $0xd0] sm:$0xf]
        %v2521 = vld [vmem:[%s7 + $0xd4] sm:$0xf]
        %v2522 = vld [vmem:[%s7 + $0xd8] sm:$0xf]
        %v2523 = vld [vmem:[%s7 + $0xdc] sm:$0xf]
        %v2524 = vld [vmem:[%s7 + $0xe0] sm:$0xf]
        %v2525 = vld [vmem:[%s7 + $0xe4] sm:$0xf]
        %v2526 = vld [vmem:[%s7 + $0xe8] sm:$0xf]
        %v2527 = vld [vmem:[%s7 + $0xec] sm:$0xf]
        %v2528 = vld [vmem:[%s7 + $0xf0] sm:$0xf]
        %v2529 = vld [vmem:[%s7 + $0xf4] sm:$0xf]
        %v2530 = vld [vmem:[%s7 + $0xf8] sm:$0xf]
        %v2531 = vld [vmem:[%s7 + $0xfc] sm:$0xf]
        %v2532 = vld [vmem:[%s8] sm:$0x1]
        %v2534 = vlaneseq
        %v2535 = vshrl.u32 %v2534, 7
        %v2536 = vsub.s32 0, %v2535
        %v2537 = vrot.slane %v2532, %v2536
        %v2603 = vunpack.c.l.b16 %v2468
        %v2604 = vunpack.c.l.b16 %v2469
        %v2605 = vunpack.c.l.b16 %v2470
        %v2606 = vunpack.c.l.b16 %v2471
        %v2607 = vunpack.c.l.b16 %v2472
        %v2608 = vunpack.c.l.b16 %v2473
        %v2609 = vunpack.c.l.b16 %v2474
        %v2610 = vunpack.c.l.b16 %v2475
        %v2611 = vunpack.c.l.b16 %v2476
        %v2612 = vunpack.c.l.b16 %v2477
        %v2613 = vunpack.c.l.b16 %v2478
        %v2614 = vunpack.c.l.b16 %v2479
        %v2615 = vunpack.c.l.b16 %v2480
        %v2616 = vunpack.c.l.b16 %v2481
        %v2617 = vunpack.c.l.b16 %v2482
        %v2618 = vunpack.c.l.b16 %v2483
        %v2619 = vunpack.c.l.b16 %v2484
        %v2620 = vunpack.c.l.b16 %v2485
        %v2621 = vunpack.c.l.b16 %v2486
        %v2622 = vunpack.c.l.b16 %v2487
        %v2623 = vunpack.c.l.b16 %v2488
        %v2624 = vunpack.c.l.b16 %v2489
        %v2625 = vunpack.c.l.b16 %v2490
        %v2626 = vunpack.c.l.b16 %v2491
        %v2627 = vunpack.c.l.b16 %v2492
        %v2628 = vunpack.c.l.b16 %v2493
        %v2629 = vunpack.c.l.b16 %v2494
        %v2630 = vunpack.c.l.b16 %v2495
        %v2631 = vunpack.c.l.b16 %v2496
        %v2632 = vunpack.c.l.b16 %v2497
        %v2633 = vunpack.c.l.b16 %v2498
        %v2634 = vunpack.c.l.b16 %v2499
        %v2635 = vunpack.c.l.b16 %v2500
        %v2636 = vunpack.c.l.b16 %v2501
        %v2637 = vunpack.c.l.b16 %v2502
        %v2638 = vunpack.c.l.b16 %v2503
        %v2639 = vunpack.c.l.b16 %v2504
        %v2640 = vunpack.c.l.b16 %v2505
        %v2641 = vunpack.c.l.b16 %v2506
        %v2642 = vunpack.c.l.b16 %v2507
        %v2643 = vunpack.c.l.b16 %v2508
        %v2644 = vunpack.c.l.b16 %v2509
        %v2645 = vunpack.c.l.b16 %v2510
        %v2646 = vunpack.c.l.b16 %v2511
        %v2647 = vunpack.c.l.b16 %v2512
        %v2648 = vunpack.c.l.b16 %v2513
        %v2649 = vunpack.c.l.b16 %v2514
        %v2650 = vunpack.c.l.b16 %v2515
        %v2651 = vunpack.c.l.b16 %v2516
        %v2652 = vunpack.c.l.b16 %v2517
        %v2653 = vunpack.c.l.b16 %v2518
        %v2654 = vunpack.c.l.b16 %v2519
        %v2655 = vunpack.c.l.b16 %v2520
        %v2656 = vunpack.c.l.b16 %v2521
        %v2657 = vunpack.c.l.b16 %v2522
        %v2658 = vunpack.c.l.b16 %v2523
        %v2659 = vunpack.c.l.b16 %v2524
        %v2660 = vunpack.c.l.b16 %v2525
        %v2661 = vunpack.c.l.b16 %v2526
        %v2662 = vunpack.c.l.b16 %v2527
        %v2663 = vunpack.c.l.b16 %v2528
        %v2664 = vunpack.c.l.b16 %v2529
        %v2665 = vunpack.c.l.b16 %v2530
        %v2666 = vunpack.c.l.b16 %v2531
        %v2667 = vpack.c.b16 %v2604, %v2603
        %v2668 = vpack.c.b16 %v2606, %v2605
        %v2669 = vpack.c.b16 %v2608, %v2607
        %v2670 = vpack.c.b16 %v2610, %v2609
        %v2671 = vpack.c.b16 %v2612, %v2611
        %v2672 = vpack.c.b16 %v2614, %v2613
        %v2673 = vpack.c.b16 %v2616, %v2615
        %v2674 = vpack.c.b16 %v2618, %v2617
        %v2675 = vpack.c.b16 %v2620, %v2619
        %v2676 = vpack.c.b16 %v2622, %v2621
        %v2677 = vpack.c.b16 %v2624, %v2623
        %v2678 = vpack.c.b16 %v2626, %v2625
        %v2679 = vpack.c.b16 %v2628, %v2627
        %v2680 = vpack.c.b16 %v2630, %v2629
        %v2681 = vpack.c.b16 %v2632, %v2631
        %v2682 = vpack.c.b16 %v2634, %v2633
        %v2683 = vpack.c.b16 %v2636, %v2635
        %v2684 = vpack.c.b16 %v2638, %v2637
        %v2685 = vpack.c.b16 %v2640, %v2639
        %v2686 = vpack.c.b16 %v2642, %v2641
        %v2687 = vpack.c.b16 %v2644, %v2643
        %v2688 = vpack.c.b16 %v2646, %v2645
        %v2689 = vpack.c.b16 %v2648, %v2647
        %v2690 = vpack.c.b16 %v2650, %v2649
        %v2691 = vpack.c.b16 %v2652, %v2651
        %v2692 = vpack.c.b16 %v2654, %v2653
        %v2693 = vpack.c.b16 %v2656, %v2655
        %v2694 = vpack.c.b16 %v2658, %v2657
        %v2695 = vpack.c.b16 %v2660, %v2659
        %v2696 = vpack.c.b16 %v2662, %v2661
        %v2697 = vpack.c.b16 %v2664, %v2663
        %v2698 = vpack.c.b16 %v2666, %v2665
        %2731 = vmatprep.subr.bf16.mxu0 0
        %2732 = vmatpush1.bf16.msra.mxu0 %v2667
        %2733 = vmatprep.subr.bf16.mxu0 0
        %2734 = vmatpush1.bf16.msra.mxu0 %v2668
        %2735 = vmatprep.subr.bf16.mxu0 0
        %2736 = vmatpush1.bf16.msra.mxu0 %v2669
        %2737 = vmatprep.subr.bf16.mxu0 0
        %2738 = vmatpush1.bf16.msra.mxu0 %v2670
        %2739 = vmatprep.subr.bf16.mxu0 0
        %2740 = vmatpush1.bf16.msra.mxu0 %v2671
        %2741 = vmatprep.subr.bf16.mxu0 0
        %2742 = vmatpush1.bf16.msra.mxu0 %v2672
        %2743 = vmatprep.subr.bf16.mxu0 0
        %2744 = vmatpush1.bf16.msra.mxu0 %v2673
        %2745 = vmatprep.subr.bf16.mxu0 0
        %2746 = vmatpush1.bf16.msra.mxu0 %v2674
        %2747 = vmatprep.subr.bf16.mxu0 0
        %2748 = vmatpush1.bf16.msra.mxu0 %v2675
        %2749 = vmatprep.subr.bf16.mxu0 0
        %2750 = vmatpush1.bf16.msra.mxu0 %v2676
        %2751 = vmatprep.subr.bf16.mxu0 0
        %2752 = vmatpush1.bf16.msra.mxu0 %v2677
        %2753 = vmatprep.subr.bf16.mxu0 0
        %2754 = vmatpush1.bf16.msra.mxu0 %v2678
        %2755 = vmatprep.subr.bf16.mxu0 0
        %2756 = vmatpush1.bf16.msra.mxu0 %v2679
        %2757 = vmatprep.subr.bf16.mxu0 0
        %2758 = vmatpush1.bf16.msra.mxu0 %v2680
        %2759 = vmatprep.subr.bf16.mxu0 0
        %2760 = vmatpush1.bf16.msra.mxu0 %v2681
        %2761 = vmatprep.subr.bf16.mxu0 0
        %2762 = vmatpush1.bf16.msra.mxu0 %v2682
        %2763 = vmatprep.mubr.bf16.mxu0 %v2465
        %2764 = vmatmul.mubr.bf16.gmra.mrb[0].mxu0 %v2464
        %v2765 = vpop.f32.mrb[0].mxu0
        %v2766 = vadd.f32 %v2537, %v2765
        %v2767 = vpop.f32.mrb[0].mxu0
        %v2768 = vpop.f32.mrb[0].mxu0
        %v2769 = vpop.f32.mrb[0].mxu0
        %2770 = vdwg.mxu0
        %2771 = vmatprep.subr.bf16.mxu0 0
        %2772 = vmatpush1.bf16.msra.mxu0 %v2683
        %2773 = vmatprep.subr.bf16.mxu0 0
        %2774 = vmatpush1.bf16.msra.mxu0 %v2684
        %2775 = vmatprep.subr.bf16.mxu0 0
        %2776 = vmatpush1.bf16.msra.mxu0 %v2685
        %2777 = vmatprep.subr.bf16.mxu0 0
        %2778 = vmatpush1.bf16.msra.mxu0 %v2686
        %2779 = vmatprep.subr.bf16.mxu0 0
        %2780 = vmatpush1.bf16.msra.mxu0 %v2687
        %2781 = vmatprep.subr.bf16.mxu0 0
        %2782 = vmatpush1.bf16.msra.mxu0 %v2688
        %2783 = vmatprep.subr.bf16.mxu0 0
        %2784 = vmatpush1.bf16.msra.mxu0 %v2689
        %2785 = vmatprep.subr.bf16.mxu0 0
        %2786 = vmatpush1.bf16.msra.mxu0 %v2690
        %2787 = vmatprep.subr.bf16.mxu0 0
        %2788 = vmatpush1.bf16.msra.mxu0 %v2691
        %2789 = vmatprep.subr.bf16.mxu0 0
        %2790 = vmatpush1.bf16.msra.mxu0 %v2692
        %2791 = vmatprep.subr.bf16.mxu0 0
        %2792 = vmatpush1.bf16.msra.mxu0 %v2693
        %2793 = vmatprep.subr.bf16.mxu0 0
        %2794 = vmatpush1.bf16.msra.mxu0 %v2694
        %2795 = vmatprep.subr.bf16.mxu0 0
        %2796 = vmatpush1.bf16.msra.mxu0 %v2695
        %2797 = vmatprep.subr.bf16.mxu0 0
        %2798 = vmatpush1.bf16.msra.mxu0 %v2696
        %2799 = vmatprep.subr.bf16.mxu0 0
        %2800 = vmatpush1.bf16.msra.mxu0 %v2697
        %2801 = vmatprep.subr.bf16.mxu0 0
        %2802 = vmatpush1.bf16.msra.mxu0 %v2698
        %2803 = vmatprep.mubr.bf16.mxu0 %v2467
        %2804 = vmatmul.mubr.bf16.gmra.mrb[0].mxu0 %v2466
        %v2805 = vpop.f32.mrb[0].mxu0
        %v2806 = vadd.f32 %v2766, %v2805
        %v2807 = vpop.f32.mrb[0].mxu0
        %v2808 = vpop.f32.mrb[0].mxu0
        %v2809 = vpop.f32.mrb[0].mxu0
        %2810 = vdwg.mxu0
        %s2811 = sld [smem:[#allocation3]]
        %vm2812 = vcmp.ge.f32.partialorder %v2806, 0.0
        %v2813 = vstv %s2811
        %v2814 = vmul.f32 %v2813, %v2806
        %v2815 = vsel %vm2812, %v2806, %v2814
        %v2816 = vpack.c.bf16 %v2815, %v2815
        %v2817 = vld [vmem:[%s10] sm:$0xf]
        %v2818 = vld [vmem:[%s10 + $0x4] sm:$0xf]
        %v2819 = vld [vmem:[%s10 + $0x8] sm:$0xf]
        %v2820 = vld [vmem:[%s10 + $0xc] sm:$0xf]
        %v2821 = vld [vmem:[%s10 + $0x10] sm:$0xf]
        %v2822 = vld [vmem:[%s10 + $0x14] sm:$0xf]
        %v2823 = vld [vmem:[%s10 + $0x18] sm:$0xf]
        %v2824 = vld [vmem:[%s10 + $0x1c] sm:$0xf]
        %v2825 = vld [vmem:[%s11] sm:$0x1]
        %v2827 = vlaneseq
        %v2828 = vshrl.u32 %v2827, 7
        %v2829 = vsub.s32 0, %v2828
        %v2830 = vrot.slane %v2825, %v2829
        %v2840 = vunpack.c.l.b16 %v2817
        %v2841 = vunpack.c.l.b16 %v2818
        %v2842 = vunpack.c.l.b16 %v2819
        %v2843 = vunpack.c.l.b16 %v2820
        %v2844 = vunpack.c.l.b16 %v2821
        %v2845 = vunpack.c.l.b16 %v2822
        %v2846 = vunpack.c.l.b16 %v2823
        %v2847 = vunpack.c.l.b16 %v2824
        %v2848 = vpack.c.b16 %v2841, %v2840
        %v2849 = vpack.c.b16 %v2843, %v2842
        %v2850 = vpack.c.b16 %v2845, %v2844
        %v2851 = vpack.c.b16 %v2847, %v2846
        %vm2856 = vcmask 523264
        %v2858 = vsel %vm2856, %v2816, 0
        %2860 = vmatprep.subr.bf16.mxu0 0
        %2861 = vmatpush1.bf16.msra.mxu0 %v2848
        %2862 = vmatprep.subr.bf16.mxu0 0
        %2863 = vmatpush1.bf16.msra.mxu0 %v2849
        %2864 = vmatprep.subr.bf16.mxu0 0
        %2865 = vmatpush1.bf16.msra.mxu0 %v2850
        %2866 = vmatprep.subr.bf16.mxu0 0
        %2867 = vmatpush1.bf16.msra.mxu0 %v2851
        %2868 = vmatprep.subr.bf16.mxu0 0
        %2869 = vmatpush1.bf16.msra.mxu0 0
        %2870 = vmatprep.subr.bf16.mxu0 0
        %2871 = vmatpush1.bf16.msra.mxu0 0
        %2872 = vmatprep.subr.bf16.mxu0 0
        %2873 = vmatpush1.bf16.msra.mxu0 0
        %2874 = vmatprep.subr.bf16.mxu0 0
        %2875 = vmatpush1.bf16.msra.mxu0 0
        %2876 = vmatprep.subr.bf16.mxu0 0
        %2877 = vmatpush1.bf16.msra.mxu0 0
        %2878 = vmatprep.subr.bf16.mxu0 0
        %2879 = vmatpush1.bf16.msra.mxu0 0
        %2880 = vmatprep.subr.bf16.mxu0 0
        %2881 = vmatpush1.bf16.msra.mxu0 0
        %2882 = vmatprep.subr.bf16.mxu0 0
        %2883 = vmatpush1.bf16.msra.mxu0 0
        %2884 = vmatprep.subr.bf16.mxu0 0
        %2885 = vmatpush1.bf16.msra.mxu0 0
        %2886 = vmatprep.subr.bf16.mxu0 0
        %2887 = vmatpush1.bf16.msra.mxu0 0
        %2888 = vmatprep.subr.bf16.mxu0 0
        %2889 = vmatpush1.bf16.msra.mxu0 0
        %2890 = vmatprep.subr.bf16.mxu0 0
        %2891 = vmatpush1.bf16.msra.mxu0 0
        %2892 = vmatprep.mubr.bf16.mxu0 0
        %2893 = vmatmul.mubr.bf16.gmra.mrb[0].mxu0 %v2858
        %v2894 = vpop.f32.mrb[0].mxu0
        %v2895 = vadd.f32 %v2830, %v2894
        %v2896 = vpop.f32.mrb[0].mxu0
        %v2897 = vpop.f32.mrb[0].mxu0
        %v2898 = vpop.f32.mrb[0].mxu0
        %2899 = vdwg.mxu0
        %vm2900 = vcmask 64512
        %2901 = vst.msk [vmem:[%s12] sm:$0xff] %vm2900, %v2895
      $region76: #{siamese_pinet_forward.3} parent=67 // pred_fallthru
        _
      // Predicated region
      $region77: #{siamese_pinet_forward.3} parent=67 // pred_check
        %p2902 = pneg %p299
      $region78: #{siamese_pinet_forward.3} parent=67 // pred_check_branch
        %2904 = sbr.rel (%p2902) target = $region80
      $region79: #{siamese_pinet_forward.3} parent=67 // pred_region
        _
      $region80: #{siamese_pinet_forward.3} parent=67 // pred_fallthru
        _
      // Predicated region
      $region81: #{siamese_pinet_forward.3} parent=67 // pred_check
        %p2905 = pneg %p299
      $region82: #{siamese_pinet_forward.3} parent=67 // pred_check_branch
        %2907 = sbr.rel (%p2905) target = $region84
      $region83: #{siamese_pinet_forward.3} parent=67 // pred_region
        _
      $region84: #{siamese_pinet_forward.3} parent=67 // pred_fallthru
        _
    $region68: #{siamese_pinet_forward.3} parent=5 // pred_fallthru
      _
    %p2908 = scmp.le.s32.totalorder 2, %s19
    // Predicated region
    $region85: #{siamese_pinet_forward.3} parent=5 // pred_check
      %p2909 = pneg %p2908
    $region86: #{siamese_pinet_forward.3} parent=5 // pred_check_branch
      %2911 = sbr.rel (%p2909) target = $region88
    $region87: #{siamese_pinet_forward.3} parent=5 // pred_region
      %s2912 = ssub.s32 %s19, 2
    $region88: #{siamese_pinet_forward.3} parent=5 // pred_fallthru
      _
  $region6: #{siamese_pinet_forward.3} parent=0 // loop_footer
    %s23 = sadd.s32 1, %s19
  $region7: #{siamese_pinet_forward.3} parent=0 // loop_footer_branch
    %18 = sbr.rel target = $region3
  $region8: #{siamese_pinet_forward.3} parent=0 // loop_exit
    _

// kernel: siamese_pinet_forward.2
$region0: #{siamese_pinet_forward.2}
  #allocation0 [shape = 'u32[]', space=smem, size = 0x4, offset = 0x4, fixed_abs, tag = 'smem constant byte address 0x4 - core index']
  #allocation1 [shape = 'u32[144,128]{1,0:T(1,128)}', space=vmem, size = 0x12000, scoped, tag = 'internal scratch']
  #allocation2 [shape = 'bf16[256,36]{1,0:T(16,128)(2,1)}', space=vmem, size = 0x10000, scoped, tag = 'scratch operand']
  %s0 = inlined_call_operand.vmem [shape: bf16[4,290,4], index: 0, kind: input, shape index: {}]
  %s1 = inlined_call_operand.vmem [shape: bf16[36,32], index: 1, kind: input, shape index: {}]
  %s2 = inlined_call_operand.hbm [shape: f32[1,32], index: 2, kind: input, shape index: {}]
  %s3 = inlined_call_operand.vmem [shape: bf16[16,32], index: 3, kind: input, shape index: {}]
  %s4 = inlined_call_operand.vmem [shape: f32[16,1], index: 4, kind: input, shape index: {}]
  %s5 = inlined_call_operand.vmem [shape: bf16[4,16,256], index: 5, kind: output, shape index: {}]
  %s6 = sld [smem:[#allocation0]]
  $region57: #{siamese_pinet_forward.2} parent=0
    _
  %s8 = ssub.s32 1, %s6
  %s9 = scalar_select 0, %s8, %s6
  $region1: #{siamese_pinet_forward.2} parent=0
    #allocation3 [shape = 'u8[512]{0}', space=vmem, size = 0x400, scoped, tag = 'input window, operand 2, single buffered']
    #allocation4 [shape = 's32[2]{0}', space=sflag, size = 0x8, scoped, tag = 'scoped memory for siamese_pinet_forward.2']
    %10 = vsyncpa [#allocation4], 0
    loop: start=0, step=1, limit=6
    $region2: #{siamese_pinet_forward.2} parent=1 // loop_pre_header
      _
    $region3: #{siamese_pinet_forward.2} parent=1 // loop_header
      %s12 = sphi 0, %s16
      %p13 = scmp.ge.s32.totalorder %s12, 6
      %s22 = sphi 0, %s24
      %s25 = sphi 0, %s22
      %s26 = sphi 0, %s25
      %s42 = sphi 0, %s26
      %s46 = sphi 0, %s46
      %s48 = sphi 0, %s46
      %s49 = sphi 0, %s48
      %s63 = sphi 0, %s49
      %s67 = sphi 0, %s67
      %s69 = sphi 0, %s67
      %s70 = sphi 0, %s69
      %s84 = sphi 0, %s70
      %s88 = sphi 0, %s88
      %s90 = sphi 0, %s88
      %s91 = sphi 0, %s90
      %s105 = sphi 0, %s91
      %s109 = sphi 0, %s109
      %s111 = sphi 0, %s109
      %s112 = sphi 0, %s111
      %s126 = sphi 0, %s112
      %s132 = sphi 0, %s134
      %s135 = sphi 0, %s132
      %s136 = sphi 0, %s135
      %s152 = sphi 0, %s136
    $region4: #{siamese_pinet_forward.2} parent=1 // loop_header_branch
      %15 = sbr.rel (%p13) target = $region8
    $region5: #{siamese_pinet_forward.2} parent=1 // loop_body
      %s17 = ssub.s32 %s12, 1
      %s18 = ssub.s32 %s12, 2
      %s19 = sadd.s32 %s12, 1
      %s20 = ssub.s32 %s12, %s19
      %p21 = scmp.eq.s32.totalorder %s20, 0
      %s23 = sadd.s32 %s22, 1
      %s24 = scalar_select %p21, %s22, %s23
      %p27 = pneg %p21
      %p28 = scmp.eq.s32.totalorder %s12, 3
      %p29 = por %p27, %p28
      %p30 = scmp.ne.s32.totalorder %s22, %s25
      %p31 = scmp.eq.s32.totalorder %s12, 0
      %p32 = por %p30, %p31
      %p33 = scmp.ne.s32.totalorder %s22, %s25
      %p34 = scmp.eq.s32.totalorder %s17, 3
      %p35 = por %p33, %p34
      %p36 = scmp.ne.s32.totalorder %s25, %s26
      %p37 = scmp.eq.s32.totalorder %s17, 0
      %p38 = por %p36, %p37
      %p39 = scmp.ne.s32.totalorder %s25, %s26
      %p40 = scmp.eq.s32.totalorder %s18, 3
      %p41 = por %p39, %p40
      %p43 = scmp.ne.s32.totalorder %s26, %s42
      %p44 = scmp.eq.s32.totalorder %s18, 0
      %p45 = por %p43, %p44
      %s47 = sadd.s32 %s46, 1
      %p50 = scmp.eq.s32.totalorder %s12, 3
      %p51 = scmp.ne.s32.totalorder %s46, %s48
      %p52 = scmp.eq.s32.totalorder %s12, 0
      %p53 = por %p51, %p52
      %p54 = scmp.ne.s32.totalorder %s46, %s48
      %p55 = scmp.eq.s32.totalorder %s17, 3
      %p56 = por %p54, %p55
      %p57 = scmp.ne.s32.totalorder %s48, %s49
      %p58 = scmp.eq.s32.totalorder %s17, 0
      %p59 = por %p57, %p58
      %p60 = scmp.ne.s32.totalorder %s48, %s49
      %p61 = scmp.eq.s32.totalorder %s18, 3
      %p62 = por %p60, %p61
      %p64 = scmp.ne.s32.totalorder %s49, %s63
      %p65 = scmp.eq.s32.totalorder %s18, 0
      %p66 = por %p64, %p65
      %s68 = sadd.s32 %s67, 1
      %p71 = scmp.eq.s32.totalorder %s12, 3
      %p72 = scmp.ne.s32.totalorder %s67, %s69
      %p73 = scmp.eq.s32.totalorder %s12, 0
      %p74 = por %p72, %p73
      %p75 = scmp.ne.s32.totalorder %s67, %s69
      %p76 = scmp.eq.s32.totalorder %s17, 3
      %p77 = por %p75, %p76
      %p78 = scmp.ne.s32.totalorder %s69, %s70
      %p79 = scmp.eq.s32.totalorder %s17, 0
      %p80 = por %p78, %p79
      %p81 = scmp.ne.s32.totalorder %s69, %s70
      %p82 = scmp.eq.s32.totalorder %s18, 3
      %p83 = por %p81, %p82
      %p85 = scmp.ne.s32.totalorder %s70, %s84
      %p86 = scmp.eq.s32.totalorder %s18, 0
      %p87 = por %p85, %p86
      %s89 = sadd.s32 %s88, 1
      %p92 = scmp.eq.s32.totalorder %s12, 3
      %p93 = scmp.ne.s32.totalorder %s88, %s90
      %p94 = scmp.eq.s32.totalorder %s12, 0
      %p95 = por %p93, %p94
      %p96 = scmp.ne.s32.totalorder %s88, %s90
      %p97 = scmp.eq.s32.totalorder %s17, 3
      %p98 = por %p96, %p97
      %p99 = scmp.ne.s32.totalorder %s90, %s91
      %p100 = scmp.eq.s32.totalorder %s17, 0
      %p101 = por %p99, %p100
      %p102 = scmp.ne.s32.totalorder %s90, %s91
      %p103 = scmp.eq.s32.totalorder %s18, 3
      %p104 = por %p102, %p103
      %p106 = scmp.ne.s32.totalorder %s91, %s105
      %p107 = scmp.eq.s32.totalorder %s18, 0
      %p108 = por %p106, %p107
      %s110 = sadd.s32 %s109, 1
      %p113 = scmp.eq.s32.totalorder %s12, 3
      %p114 = scmp.ne.s32.totalorder %s109, %s111
      %p115 = scmp.eq.s32.totalorder %s12, 0
      %p116 = por %p114, %p115
      %p117 = scmp.ne.s32.totalorder %s109, %s111
      %p118 = scmp.eq.s32.totalorder %s17, 3
      %p119 = por %p117, %p118
      %p120 = scmp.ne.s32.totalorder %s111, %s112
      %p121 = scmp.eq.s32.totalorder %s17, 0
      %p122 = por %p120, %p121
      %p123 = scmp.ne.s32.totalorder %s111, %s112
      %p124 = scmp.eq.s32.totalorder %s18, 3
      %p125 = por %p123, %p124
      %p127 = scmp.ne.s32.totalorder %s112, %s126
      %p128 = scmp.eq.s32.totalorder %s18, 0
      %p129 = por %p127, %p128
      %s130 = ssub.s32 %s12, %s19
      %p131 = scmp.eq.s32.totalorder %s130, 0
      %s133 = sadd.s32 %s132, 1
      %s134 = scalar_select %p131, %s132, %s133
      %p137 = pneg %p131
      %p138 = scmp.eq.s32.totalorder %s12, 3
      %p139 = por %p137, %p138
      %p140 = scmp.ne.s32.totalorder %s132, %s135
      %p141 = scmp.eq.s32.totalorder %s12, 0
      %p142 = por %p140, %p141
      %p143 = scmp.ne.s32.totalorder %s132, %s135
      %p144 = scmp.eq.s32.totalorder %s17, 3
      %p145 = por %p143, %p144
      %p146 = scmp.ne.s32.totalorder %s135, %s136
      %p147 = scmp.eq.s32.totalorder %s17, 0
      %p148 = por %p146, %p147
      %p149 = scmp.ne.s32.totalorder %s135, %s136
      %p150 = scmp.eq.s32.totalorder %s18, 3
      %p151 = por %p149, %p150
      %p153 = scmp.ne.s32.totalorder %s136, %s152
      %p154 = scmp.eq.s32.totalorder %s18, 0
      %p155 = por %p153, %p154
      %p156 = scmp.le.s32.totalorder 1, %s12
      %p157 = scmp.lt.s32.totalorder %s12, 5
      %p158 = pnand %p156, %p157
      %p159 = pneg %p158
      // Predicated region
      $region9: #{siamese_pinet_forward.2} parent=5 // pred_check
        _
      $region10: #{siamese_pinet_forward.2} parent=5 // pred_check_branch
        %161 = sbr.rel (%p158) target = $region12
      $region11: #{siamese_pinet_forward.2} parent=5 // pred_region
        %s162 = ssub.s32 %s12, 1
        // Predicated region
        $region13: #{siamese_pinet_forward.2} parent=11 // pred_check
          %p163 = pneg %p59
        $region14: #{siamese_pinet_forward.2} parent=11 // pred_check_branch
          %165 = sbr.rel (%p163) target = $region16
        $region15: #{siamese_pinet_forward.2} parent=11 // pred_region
          _
        $region16: #{siamese_pinet_forward.2} parent=11 // pred_fallthru
          _
        // Predicated region
        $region17: #{siamese_pinet_forward.2} parent=11 // pred_check
          %p166 = pneg %p80
        $region18: #{siamese_pinet_forward.2} parent=11 // pred_check_branch
          %168 = sbr.rel (%p166) target = $region20
        $region19: #{siamese_pinet_forward.2} parent=11 // pred_region
          %s170 = ssub.s32 16, 16
          %171 = vsyncadd [#allocation4], %s170
          %s173 = sshll.u32 [#allocation3], 4
          %s174 = int_to_ptr.vmem [resolvable:$true] %s173
          %176 = dma.hbm_to_vmem [thread:$0]  %s2, 16, %s174, [#allocation4]
        $region20: #{siamese_pinet_forward.2} parent=11 // pred_fallthru
          _
        // Predicated region
        $region21: #{siamese_pinet_forward.2} parent=11 // pred_check
          %p177 = pneg %p101
        $region22: #{siamese_pinet_forward.2} parent=11 // pred_check_branch
          %179 = sbr.rel (%p177) target = $region24
        $region23: #{siamese_pinet_forward.2} parent=11 // pred_region
          _
        $region24: #{siamese_pinet_forward.2} parent=11 // pred_fallthru
          _
        // Predicated region
        $region25: #{siamese_pinet_forward.2} parent=11 // pred_check
          %p180 = pneg %p122
        $region26: #{siamese_pinet_forward.2} parent=11 // pred_check_branch
          %182 = sbr.rel (%p180) target = $region28
        $region27: #{siamese_pinet_forward.2} parent=11 // pred_region
          _
        $region28: #{siamese_pinet_forward.2} parent=11 // pred_fallthru
          _
      $region12: #{siamese_pinet_forward.2} parent=5 // pred_fallthru
        _
      %p183 = scmp.lt.s32.totalorder %s12, 4
      // Predicated region
      $region29: #{siamese_pinet_forward.2} parent=5 // pred_check
        %p184 = pneg %p183
      $region30: #{siamese_pinet_forward.2} parent=5 // pred_check_branch
        %186 = sbr.rel (%p184) target = $region32
      $region31: #{siamese_pinet_forward.2} parent=5 // pred_region
        // Predicated region
        $region33: #{siamese_pinet_forward.2} parent=31 // pred_check
          %p187 = pneg %p32
        $region34: #{siamese_pinet_forward.2} parent=31 // pred_check_branch
          %189 = sbr.rel (%p187) target = $region36
        $region35: #{siamese_pinet_forward.2} parent=31 // pred_region
          %p190 = scmp.lt.s32.totalorder %s12, 3
          %s191 = scalar_select %p190, %s12, 3
          %s192 = smul.addr %s191, 37
          %s193 = smul.addr %s192, 4
          %s194 = scalar_lea.vmem %s0, %s193
        $region36: #{siamese_pinet_forward.2} parent=31 // pred_fallthru
          _
      $region32: #{siamese_pinet_forward.2} parent=5 // pred_fallthru
        _
      %p195 = scmp.le.s32.totalorder 1, %s12
      %p196 = scmp.lt.s32.totalorder %s12, 5
      %p197 = pnand %p195, %p196
      %p198 = pneg %p197
      // Predicated region
      $region37: #{siamese_pinet_forward.2} parent=5 // pred_check
        _
      $region38: #{siamese_pinet_forward.2} parent=5 // pred_check_branch
        %200 = sbr.rel (%p197) target = $region40
      $region39: #{siamese_pinet_forward.2} parent=5 // pred_region
        %s201 = ssub.s32 %s12, 1
        // Predicated region
        $region41: #{siamese_pinet_forward.2} parent=39 // pred_check
          %p202 = pneg %p80
        $region42: #{siamese_pinet_forward.2} parent=39 // pred_check_branch
          %204 = sbr.rel (%p202) target = $region44
        $region43: #{siamese_pinet_forward.2} parent=39 // pred_region
          %205 = dma.done [#allocation4], 16
        $region44: #{siamese_pinet_forward.2} parent=39 // pred_fallthru
          _
        %p206 = scmp.lt.s32.totalorder %s17, 3
        %s207 = scalar_select %p206, %s17, 3
        %s208 = smul.addr %s207, 37
        %s209 = smul.addr %s208, 4
        %s210 = scalar_lea.vmem %s0, %s209
        %p211 = pneg %p38
        %p212 = pneg %p35
        %p213 = pneg %p59
        %p214 = pneg %p56
        %p215 = pneg %p80
        %p216 = pneg %p77
        %p217 = pneg %p101
        %p218 = pneg %p98
        %p219 = pneg %p122
        %p220 = pneg %p119
        %p221 = pneg %p148
        %p222 = pneg %p145
        %p223 = scmp.lt.s32.totalorder %s17, 3
        %s224 = scalar_select %p223, %s17, 3
        %s225 = smul.addr %s224, 4
        %s226 = smul.addr %s225, 4
        %s227 = scalar_lea.vmem %s5, %s226
        %p228 = scmp.lt.s32.totalorder %s17, 3
        %s229 = scalar_select %p228, %s17, 3
        %s230 = smul.addr %s229, 37
        %s231 = smul.addr %s230, 4
        %s232 = scalar_lea.vmem %s0, %s231
        %p233 = scmp.lt.s32.totalorder %s17, 3
        %s234 = scalar_select %p233, %s17, 3
        %s235 = smul.addr %s234, 4
        %s236 = smul.addr %s235, 4
        %s237 = scalar_lea.vmem %s5, %s236
        %v241 = vlaneseq
        %v242 = vshrl.u32 %v241, 7
        %v243 = vadd.s32 %v242, 8
        %v244 = vadd.s32 %v242, 16
        %v245 = vadd.s32 %v242, 24
        %v246 = vadd.s32 %v242, 32
        %v247 = vadd.s32 %v242, 40
        %v248 = vadd.s32 %v242, 48
        %v249 = vadd.s32 %v242, 56
        %v250 = vadd.s32 %v242, 64
        %v251 = vadd.s32 %v242, 72
        %v252 = vadd.s32 %v242, 80
        %v253 = vadd.s32 %v242, 88
        %v254 = vadd.s32 %v242, 96
        %v255 = vadd.s32 %v242, 104
        %v256 = vadd.s32 %v242, 112
        %v257 = vadd.s32 %v242, 120
        %v258 = vadd.s32 %v242, 128
        %v259 = vadd.s32 %v242, 136
        %v260 = vadd.s32 %v242, 144
        %v261 = vadd.s32 %v242, 152
        %v262 = vadd.s32 %v242, 160
        %v263 = vadd.s32 %v242, 168
        %v264 = vadd.s32 %v242, 176
        %v265 = vadd.s32 %v242, 184
        %v266 = vadd.s32 %v242, 192
        %v267 = vadd.s32 %v242, 200
        %v268 = vadd.s32 %v242, 208
        %v269 = vadd.s32 %v242, 216
        %v270 = vadd.s32 %v242, 224
        %v271 = vadd.s32 %v242, 232
        %v272 = vadd.s32 %v242, 240
        %v273 = vadd.s32 %v242, 248
        %v274 = vand.u32 %v242, 15
        %v275 = vand.u32 %v243, 15
        %v276 = vand.u32 %v244, 15
        %v277 = vand.u32 %v245, 15
        %v278 = vand.u32 %v246, 15
        %v279 = vand.u32 %v247, 15
        %v280 = vand.u32 %v248, 15
        %v281 = vand.u32 %v249, 15
        %v282 = vand.u32 %v250, 15
        %v283 = vand.u32 %v251, 15
        %v284 = vand.u32 %v252, 15
        %v285 = vand.u32 %v253, 15
        %v286 = vand.u32 %v254, 15
        %v287 = vand.u32 %v255, 15
        %v288 = vand.u32 %v256, 15
        %v289 = vand.u32 %v257, 15
        %v290 = vand.u32 %v258, 15
        %v291 = vand.u32 %v259, 15
        %v292 = vand.u32 %v260, 15
        %v293 = vand.u32 %v261, 15
        %v294 = vand.u32 %v262, 15
        %v295 = vand.u32 %v263, 15
        %v296 = vand.u32 %v264, 15
        %v297 = vand.u32 %v265, 15
        %v298 = vand.u32 %v266, 15
        %v299 = vand.u32 %v267, 15
        %v300 = vand.u32 %v268, 15
        %v301 = vand.u32 %v269, 15
        %v302 = vand.u32 %v270, 15
        %v303 = vand.u32 %v271, 15
        %v304 = vand.u32 %v272, 15
        %v305 = vand.u32 %v273, 15
        %vm306 = vcmp.ne.s32.totalorder %v274, 0
        %vm307 = vcmp.ne.s32.totalorder %v275, 0
        %vm308 = vcmp.ne.s32.totalorder %v276, 0
        %vm309 = vcmp.ne.s32.totalorder %v277, 0
        %vm310 = vcmp.ne.s32.totalorder %v278, 0
        %vm311 = vcmp.ne.s32.totalorder %v279, 0
        %vm312 = vcmp.ne.s32.totalorder %v280, 0
        %vm313 = vcmp.ne.s32.totalorder %v281, 0
        %vm314 = vcmp.ne.s32.totalorder %v282, 0
        %vm315 = vcmp.ne.s32.totalorder %v283, 0
        %vm316 = vcmp.ne.s32.totalorder %v284, 0
        %vm317 = vcmp.ne.s32.totalorder %v285, 0
        %vm318 = vcmp.ne.s32.totalorder %v286, 0
        %vm319 = vcmp.ne.s32.totalorder %v287, 0
        %vm320 = vcmp.ne.s32.totalorder %v288, 0
        %vm321 = vcmp.ne.s32.totalorder %v289, 0
        %vm322 = vcmp.ne.s32.totalorder %v290, 0
        %vm323 = vcmp.ne.s32.totalorder %v291, 0
        %vm324 = vcmp.ne.s32.totalorder %v292, 0
        %vm325 = vcmp.ne.s32.totalorder %v293, 0
        %vm326 = vcmp.ne.s32.totalorder %v294, 0
        %vm327 = vcmp.ne.s32.totalorder %v295, 0
        %vm328 = vcmp.ne.s32.totalorder %v296, 0
        %vm329 = vcmp.ne.s32.totalorder %v297, 0
        %vm330 = vcmp.ne.s32.totalorder %v298, 0
        %vm331 = vcmp.ne.s32.totalorder %v299, 0
        %vm332 = vcmp.ne.s32.totalorder %v300, 0
        %vm333 = vcmp.ne.s32.totalorder %v301, 0
        %vm334 = vcmp.ne.s32.totalorder %v302, 0
        %vm335 = vcmp.ne.s32.totalorder %v303, 0
        %vm336 = vcmp.ne.s32.totalorder %v304, 0
        %vm337 = vcmp.ne.s32.totalorder %v305, 0
        %vm338 = vcmp.ne.s32.totalorder %v274, 15
        %vm339 = vcmp.ne.s32.totalorder %v275, 15
        %vm340 = vcmp.ne.s32.totalorder %v276, 15
        %vm341 = vcmp.ne.s32.totalorder %v277, 15
        %vm342 = vcmp.ne.s32.totalorder %v278, 15
        %vm343 = vcmp.ne.s32.totalorder %v279, 15
        %vm344 = vcmp.ne.s32.totalorder %v280, 15
        %vm345 = vcmp.ne.s32.totalorder %v281, 15
        %vm346 = vcmp.ne.s32.totalorder %v282, 15
        %vm347 = vcmp.ne.s32.totalorder %v283, 15
        %vm348 = vcmp.ne.s32.totalorder %v284, 15
        %vm349 = vcmp.ne.s32.totalorder %v285, 15
        %vm350 = vcmp.ne.s32.totalorder %v286, 15
        %vm351 = vcmp.ne.s32.totalorder %v287, 15
        %vm352 = vcmp.ne.s32.totalorder %v288, 15
        %vm353 = vcmp.ne.s32.totalorder %v289, 15
        %vm354 = vcmp.ne.s32.totalorder %v290, 15
        %vm355 = vcmp.ne.s32.totalorder %v291, 15
        %vm356 = vcmp.ne.s32.totalorder %v292, 15
        %vm357 = vcmp.ne.s32.totalorder %v293, 15
        %vm358 = vcmp.ne.s32.totalorder %v294, 15
        %vm359 = vcmp.ne.s32.totalorder %v295, 15
        %vm360 = vcmp.ne.s32.totalorder %v296, 15
        %vm361 = vcmp.ne.s32.totalorder %v297, 15
        %vm362 = vcmp.ne.s32.totalorder %v298, 15
        %vm363 = vcmp.ne.s32.totalorder %v299, 15
        %vm364 = vcmp.ne.s32.totalorder %v300, 15
        %vm365 = vcmp.ne.s32.totalorder %v301, 15
        %vm366 = vcmp.ne.s32.totalorder %v302, 15
        %vm367 = vcmp.ne.s32.totalorder %v303, 15
        %vm368 = vcmp.ne.s32.totalorder %v304, 15
        %vm369 = vcmp.ne.s32.totalorder %v305, 15
        %v370 = vld [vmem:[%s232] sm:$0xf]
        %v371 = vld [vmem:[%s232 + $0x4] sm:$0xf]
        %v372 = vld [vmem:[%s232 + $0x8] sm:$0xf]
        %v373 = vld [vmem:[%s232 + $0xc] sm:$0xf]
        %v374 = vld [vmem:[%s232 + $0x10] sm:$0xf]
        %v375 = vld [vmem:[%s232 + $0x14] sm:$0xf]
        %v376 = vld [vmem:[%s232 + $0x18] sm:$0xf]
        %v377 = vld [vmem:[%s232 + $0x1c] sm:$0xf]
        %v378 = vld [vmem:[%s232 + $0x20] sm:$0xf]
        %v379 = vld [vmem:[%s232 + $0x24] sm:$0xf]
        %v380 = vld [vmem:[%s232 + $0x28] sm:$0xf]
        %v381 = vld [vmem:[%s232 + $0x2c] sm:$0xf]
        %v382 = vld [vmem:[%s232 + $0x30] sm:$0xf]
        %v383 = vld [vmem:[%s232 + $0x34] sm:$0xf]
        %v384 = vld [vmem:[%s232 + $0x38] sm:$0xf]
        %v385 = vld [vmem:[%s232 + $0x3c] sm:$0xf]
        %v386 = vld [vmem:[%s232 + $0x40] sm:$0xf]
        %v387 = vld [vmem:[%s232 + $0x44] sm:$0xf]
        %v388 = vld [vmem:[%s232 + $0x48] sm:$0xf]
        %v389 = vld [vmem:[%s232 + $0x4c] sm:$0xf]
        %v390 = vld [vmem:[%s232 + $0x50] sm:$0xf]
        %v391 = vld [vmem:[%s232 + $0x54] sm:$0xf]
        %v392 = vld [vmem:[%s232 + $0x58] sm:$0xf]
        %v393 = vld [vmem:[%s232 + $0x5c] sm:$0xf]
        %v394 = vld [vmem:[%s232 + $0x60] sm:$0xf]
        %v395 = vld [vmem:[%s232 + $0x64] sm:$0xf]
        %v396 = vld [vmem:[%s232 + $0x68] sm:$0xf]
        %v397 = vld [vmem:[%s232 + $0x6c] sm:$0xf]
        %v398 = vld [vmem:[%s232 + $0x70] sm:$0xf]
        %v399 = vld [vmem:[%s232 + $0x74] sm:$0xf]
        %v400 = vld [vmem:[%s232 + $0x78] sm:$0xf]
        %v401 = vld [vmem:[%s232 + $0x7c] sm:$0xf]
        %v402 = vsel %vm306, 1, 0
        %v403 = vsel %vm307, 1, 0
        %v404 = vsel %vm308, 1, 0
        %v405 = vsel %vm309, 1, 0
        %v406 = vsel %vm310, 1, 0
        %v407 = vsel %vm311, 1, 0
        %v408 = vsel %vm312, 1, 0
        %v409 = vsel %vm313, 1, 0
        %v410 = vsel %vm314, 1, 0
        %v411 = vsel %vm315, 1, 0
        %v412 = vsel %vm316, 1, 0
        %v413 = vsel %vm317, 1, 0
        %v414 = vsel %vm318, 1, 0
        %v415 = vsel %vm319, 1, 0
        %v416 = vsel %vm320, 1, 0
        %v417 = vsel %vm321, 1, 0
        %v418 = vsel %vm322, 1, 0
        %v419 = vsel %vm323, 1, 0
        %v420 = vsel %vm324, 1, 0
        %v421 = vsel %vm325, 1, 0
        %v422 = vsel %vm326, 1, 0
        %v423 = vsel %vm327, 1, 0
        %v424 = vsel %vm328, 1, 0
        %v425 = vsel %vm329, 1, 0
        %v426 = vsel %vm330, 1, 0
        %v427 = vsel %vm331, 1, 0
        %v428 = vsel %vm332, 1, 0
        %v429 = vsel %vm333, 1, 0
        %v430 = vsel %vm334, 1, 0
        %v431 = vsel %vm335, 1, 0
        %v432 = vsel %vm336, 1, 0
        %v433 = vsel %vm337, 1, 0
        %vm434 = vcmp.eq.s32.totalorder %v402, 1
        %vm435 = vcmp.eq.s32.totalorder %v403, 1
        %vm436 = vcmp.eq.s32.totalorder %v404, 1
        %vm437 = vcmp.eq.s32.totalorder %v405, 1
        %vm438 = vcmp.eq.s32.totalorder %v406, 1
        %vm439 = vcmp.eq.s32.totalorder %v407, 1
        %vm440 = vcmp.eq.s32.totalorder %v408, 1
        %vm441 = vcmp.eq.s32.totalorder %v409, 1
        %vm442 = vcmp.eq.s32.totalorder %v410, 1
        %vm443 = vcmp.eq.s32.totalorder %v411, 1
        %vm444 = vcmp.eq.s32.totalorder %v412, 1
        %vm445 = vcmp.eq.s32.totalorder %v413, 1
        %vm446 = vcmp.eq.s32.totalorder %v414, 1
        %vm447 = vcmp.eq.s32.totalorder %v415, 1
        %vm448 = vcmp.eq.s32.totalorder %v416, 1
        %vm449 = vcmp.eq.s32.totalorder %v417, 1
        %vm450 = vcmp.eq.s32.totalorder %v418, 1
        %vm451 = vcmp.eq.s32.totalorder %v419, 1
        %vm452 = vcmp.eq.s32.totalorder %v420, 1
        %vm453 = vcmp.eq.s32.totalorder %v421, 1
        %vm454 = vcmp.eq.s32.totalorder %v422, 1
        %vm455 = vcmp.eq.s32.totalorder %v423, 1
        %vm456 = vcmp.eq.s32.totalorder %v424, 1
        %vm457 = vcmp.eq.s32.totalorder %v425, 1
        %vm458 = vcmp.eq.s32.totalorder %v426, 1
        %vm459 = vcmp.eq.s32.totalorder %v427, 1
        %vm460 = vcmp.eq.s32.totalorder %v428, 1
        %vm461 = vcmp.eq.s32.totalorder %v429, 1
        %vm462 = vcmp.eq.s32.totalorder %v430, 1
        %vm463 = vcmp.eq.s32.totalorder %v431, 1
        %vm464 = vcmp.eq.s32.totalorder %v432, 1
        %vm465 = vcmp.eq.s32.totalorder %v433, 1
        %vm466 = vmpackc.low %vm434, %vm434
        %vm467 = vmpackc.low %vm435, %vm435
        %vm468 = vmpackc.low %vm436, %vm436
        %vm469 = vmpackc.low %vm437, %vm437
        %vm470 = vmpackc.low %vm438, %vm438
        %vm471 = vmpackc.low %vm439, %vm439
        %vm472 = vmpackc.low %vm440, %vm440
        %vm473 = vmpackc.low %vm441, %vm441
        %vm474 = vmpackc.low %vm442, %vm442
        %vm475 = vmpackc.low %vm443, %vm443
        %vm476 = vmpackc.low %vm444, %vm444
        %vm477 = vmpackc.low %vm445, %vm445
        %vm478 = vmpackc.low %vm446, %vm446
        %vm479 = vmpackc.low %vm447, %vm447
        %vm480 = vmpackc.low %vm448, %vm448
        %vm481 = vmpackc.low %vm449, %vm449
        %vm482 = vmpackc.low %vm450, %vm450
        %vm483 = vmpackc.low %vm451, %vm451
        %vm484 = vmpackc.low %vm452, %vm452
        %vm485 = vmpackc.low %vm453, %vm453
        %vm486 = vmpackc.low %vm454, %vm454
        %vm487 = vmpackc.low %vm455, %vm455
        %vm488 = vmpackc.low %vm456, %vm456
        %vm489 = vmpackc.low %vm457, %vm457
        %vm490 = vmpackc.low %vm458, %vm458
        %vm491 = vmpackc.low %vm459, %vm459
        %vm492 = vmpackc.low %vm460, %vm460
        %vm493 = vmpackc.low %vm461, %vm461
        %vm494 = vmpackc.low %vm462, %vm462
        %vm495 = vmpackc.low %vm463, %vm463
        %vm496 = vmpackc.low %vm464, %vm464
        %vm497 = vmpackc.low %vm465, %vm465
        %v498 = vsel %vm466, %v370, 0
        %v499 = vsel %vm467, %v371, 0
        %v500 = vsel %vm468, %v372, 0
        %v501 = vsel %vm469, %v373, 0
        %v502 = vsel %vm470, %v374, 0
        %v503 = vsel %vm471, %v375, 0
        %v504 = vsel %vm472, %v376, 0
        %v505 = vsel %vm473, %v377, 0
        %v506 = vsel %vm474, %v378, 0
        %v507 = vsel %vm475, %v379, 0
        %v508 = vsel %vm476, %v380, 0
        %v509 = vsel %vm477, %v381, 0
        %v510 = vsel %vm478, %v382, 0
        %v511 = vsel %vm479, %v383, 0
        %v512 = vsel %vm480, %v384, 0
        %v513 = vsel %vm481, %v385, 0
        %v514 = vsel %vm482, %v386, 0
        %v515 = vsel %vm483, %v387, 0
        %v516 = vsel %vm484, %v388, 0
        %v517 = vsel %vm485, %v389, 0
        %v518 = vsel %vm486, %v390, 0
        %v519 = vsel %vm487, %v391, 0
        %v520 = vsel %vm488, %v392, 0
        %v521 = vsel %vm489, %v393, 0
        %v522 = vsel %vm490, %v394, 0
        %v523 = vsel %vm491, %v395, 0
        %v524 = vsel %vm492, %v396, 0
        %v525 = vsel %vm493, %v397, 0
        %v526 = vsel %vm494, %v398, 0
        %v527 = vsel %vm495, %v399, 0
        %v528 = vsel %vm496, %v400, 0
        %v529 = vsel %vm497, %v401, 0
        %v562 = vunpack.c.l.b16 %v498
        %v563 = vunpack.c.l.b16 %v499
        %v564 = vunpack.c.l.b16 %v500
        %v565 = vunpack.c.l.b16 %v501
        %v566 = vunpack.c.l.b16 %v502
        %v567 = vunpack.c.l.b16 %v503
        %v568 = vunpack.c.l.b16 %v504
        %v569 = vunpack.c.l.b16 %v505
        %v570 = vunpack.c.l.b16 %v506
        %v571 = vunpack.c.l.b16 %v507
        %v572 = vunpack.c.l.b16 %v508
        %v573 = vunpack.c.l.b16 %v509
        %v574 = vunpack.c.l.b16 %v510
        %v575 = vunpack.c.l.b16 %v511
        %v576 = vunpack.c.l.b16 %v512
        %v577 = vunpack.c.l.b16 %v513
        %v578 = vunpack.c.l.b16 %v514
        %v579 = vunpack.c.l.b16 %v515
        %v580 = vunpack.c.l.b16 %v516
        %v581 = vunpack.c.l.b16 %v517
        %v582 = vunpack.c.l.b16 %v518
        %v583 = vunpack.c.l.b16 %v519
        %v584 = vunpack.c.l.b16 %v520
        %v585 = vunpack.c.l.b16 %v521
        %v586 = vunpack.c.l.b16 %v522
        %v587 = vunpack.c.l.b16 %v523
        %v588 = vunpack.c.l.b16 %v524
        %v589 = vunpack.c.l.b16 %v525
        %v590 = vunpack.c.l.b16 %v526
        %v591 = vunpack.c.l.b16 %v527
        %v592 = vunpack.c.l.b16 %v528
        %v593 = vunpack.c.l.b16 %v529
        %v594 = vpack.c.b16 %v563, %v562
        %v595 = vpack.c.b16 %v565, %v564
        %v596 = vpack.c.b16 %v567, %v566
        %v597 = vpack.c.b16 %v569, %v568
        %v598 = vpack.c.b16 %v571, %v570
        %v599 = vpack.c.b16 %v573, %v572
        %v600 = vpack.c.b16 %v575, %v574
        %v601 = vpack.c.b16 %v577, %v576
        %v602 = vpack.c.b16 %v579, %v578
        %v603 = vpack.c.b16 %v581, %v580
        %v604 = vpack.c.b16 %v583, %v582
        %v605 = vpack.c.b16 %v585, %v584
        %v606 = vpack.c.b16 %v587, %v586
        %v607 = vpack.c.b16 %v589, %v588
        %v608 = vpack.c.b16 %v591, %v590
        %v609 = vpack.c.b16 %v593, %v592
        %vm626 = vcmask 31744
        %627 = vst.msk [vmem:[#allocation2] sm:$0xff] %vm626, %v594
        %628 = vst.msk [vmem:[#allocation2 + $0x8] sm:$0xff] %vm626, %v595
        %629 = vst.msk [vmem:[#allocation2 + $0x10] sm:$0xff] %vm626, %v596
        %630 = vst.msk [vmem:[#allocation2 + $0x18] sm:$0xff] %vm626, %v597
        %631 = vst.msk [vmem:[#allocation2 + $0x20] sm:$0xff] %vm626, %v598
        %632 = vst.msk [vmem:[#allocation2 + $0x28] sm:$0xff] %vm626, %v599
        %633 = vst.msk [vmem:[#allocation2 + $0x30] sm:$0xff] %vm626, %v600
        %634 = vst.msk [vmem:[#allocation2 + $0x38] sm:$0xff] %vm626, %v601
        %635 = vst.msk [vmem:[#allocation2 + $0x40] sm:$0xff] %vm626, %v602
        %636 = vst.msk [vmem:[#allocation2 + $0x48] sm:$0xff] %vm626, %v603
        %637 = vst.msk [vmem:[#allocation2 + $0x50] sm:$0xff] %vm626, %v604
        %638 = vst.msk [vmem:[#allocation2 + $0x58] sm:$0xff] %vm626, %v605
        %639 = vst.msk [vmem:[#allocation2 + $0x60] sm:$0xff] %vm626, %v606
        %640 = vst.msk [vmem:[#allocation2 + $0x68] sm:$0xff] %vm626, %v607
        %641 = vst.msk [vmem:[#allocation2 + $0x70] sm:$0xff] %vm626, %v608
        %642 = vst.msk [vmem:[#allocation2 + $0x78] sm:$0xff] %vm626, %v609
        %v643 = vld [vmem:[%s232] sm:$0xf]
        %v644 = vld [vmem:[%s232 + $0x4] sm:$0xf]
        %v645 = vld [vmem:[%s232 + $0x8] sm:$0xf]
        %v646 = vld [vmem:[%s232 + $0xc] sm:$0xf]
        %v647 = vld [vmem:[%s232 + $0x10] sm:$0xf]
        %v648 = vld [vmem:[%s232 + $0x14] sm:$0xf]
        %v649 = vld [vmem:[%s232 + $0x18] sm:$0xf]
        %v650 = vld [vmem:[%s232 + $0x1c] sm:$0xf]
        %v651 = vld [vmem:[%s232 + $0x20] sm:$0xf]
        %v652 = vld [vmem:[%s232 + $0x24] sm:$0xf]
        %v653 = vld [vmem:[%s232 + $0x28] sm:$0xf]
        %v654 = vld [vmem:[%s232 + $0x2c] sm:$0xf]
        %v655 = vld [vmem:[%s232 + $0x30] sm:$0xf]
        %v656 = vld [vmem:[%s232 + $0x34] sm:$0xf]
        %v657 = vld [vmem:[%s232 + $0x38] sm:$0xf]
        %v658 = vld [vmem:[%s232 + $0x3c] sm:$0xf]
        %v659 = vld [vmem:[%s232 + $0x40] sm:$0xf]
        %v660 = vld [vmem:[%s232 + $0x44] sm:$0xf]
        %v661 = vld [vmem:[%s232 + $0x48] sm:$0xf]
        %v662 = vld [vmem:[%s232 + $0x4c] sm:$0xf]
        %v663 = vld [vmem:[%s232 + $0x50] sm:$0xf]
        %v664 = vld [vmem:[%s232 + $0x54] sm:$0xf]
        %v665 = vld [vmem:[%s232 + $0x58] sm:$0xf]
        %v666 = vld [vmem:[%s232 + $0x5c] sm:$0xf]
        %v667 = vld [vmem:[%s232 + $0x60] sm:$0xf]
        %v668 = vld [vmem:[%s232 + $0x64] sm:$0xf]
        %v669 = vld [vmem:[%s232 + $0x68] sm:$0xf]
        %v670 = vld [vmem:[%s232 + $0x6c] sm:$0xf]
        %v671 = vld [vmem:[%s232 + $0x70] sm:$0xf]
        %v672 = vld [vmem:[%s232 + $0x74] sm:$0xf]
        %v673 = vld [vmem:[%s232 + $0x78] sm:$0xf]
        %v674 = vld [vmem:[%s232 + $0x7c] sm:$0xf]
        %v675 = vld [vmem:[%s232 + $0x80] sm:$0x1]
        %v709 = vunpack.c.l.b16 %v643
        %v710 = vunpack.c.l.b16 %v644
        %v711 = vunpack.c.l.b16 %v645
        %v712 = vunpack.c.l.b16 %v646
        %v713 = vunpack.c.l.b16 %v647
        %v714 = vunpack.c.l.b16 %v648
        %v715 = vunpack.c.l.b16 %v649
        %v716 = vunpack.c.l.b16 %v650
        %v717 = vunpack.c.l.b16 %v651
        %v718 = vunpack.c.l.b16 %v652
        %v719 = vunpack.c.l.b16 %v653
        %v720 = vunpack.c.l.b16 %v654
        %v721 = vunpack.c.l.b16 %v655
        %v722 = vunpack.c.l.b16 %v656
        %v723 = vunpack.c.l.b16 %v657
        %v724 = vunpack.c.l.b16 %v658
        %v725 = vunpack.c.l.b16 %v659
        %v726 = vunpack.c.l.b16 %v660
        %v727 = vunpack.c.l.b16 %v661
        %v728 = vunpack.c.l.b16 %v662
        %v729 = vunpack.c.l.b16 %v663
        %v730 = vunpack.c.l.b16 %v664
        %v731 = vunpack.c.l.b16 %v665
        %v732 = vunpack.c.l.b16 %v666
        %v733 = vunpack.c.l.b16 %v667
        %v734 = vunpack.c.l.b16 %v668
        %v735 = vunpack.c.l.b16 %v669
        %v736 = vunpack.c.l.b16 %v670
        %v737 = vunpack.c.l.b16 %v671
        %v738 = vunpack.c.l.b16 %v672
        %v739 = vunpack.c.l.b16 %v673
        %v740 = vunpack.c.l.b16 %v674
        %v741 = vunpack.c.l.b16 %v675
        %v742 = vpack.c.b16 %v710, %v709
        %v743 = vpack.c.b16 %v712, %v711
        %v744 = vpack.c.b16 %v714, %v713
        %v745 = vpack.c.b16 %v716, %v715
        %v746 = vpack.c.b16 %v718, %v717
        %v747 = vpack.c.b16 %v720, %v719
        %v748 = vpack.c.b16 %v722, %v721
        %v749 = vpack.c.b16 %v724, %v723
        %v750 = vpack.c.b16 %v726, %v725
        %v751 = vpack.c.b16 %v728, %v727
        %v752 = vpack.c.b16 %v730, %v729
        %v753 = vpack.c.b16 %v732, %v731
        %v754 = vpack.c.b16 %v734, %v733
        %v755 = vpack.c.b16 %v736, %v735
        %v756 = vpack.c.b16 %v738, %v737
        %v757 = vpack.c.b16 %v740, %v739
        %v758 = vpack.c.b16 %v741, %v741
        %vm759 = vsmask.f32 7424
        %v761 = vshrl.u32 %v742, 16
        %v763 = vshll.u32 %v742, 16
        %v765 = vrot.slane %v763, 1
        %v766 = vor.u32 %v761, %v765
        %v768 = vshll.u32 %v743, 16
        %v770 = vrot.slane %v768, 1
        %v771 = vsel %vm759, %v766, %v770
        %v772 = vshrl.u32 %v743, 16
        %v774 = vor.u32 %v772, %v770
        %v776 = vshll.u32 %v744, 16
        %v778 = vrot.slane %v776, 1
        %v779 = vsel %vm759, %v774, %v778
        %v780 = vshrl.u32 %v744, 16
        %v782 = vor.u32 %v780, %v778
        %v784 = vshll.u32 %v745, 16
        %v786 = vrot.slane %v784, 1
        %v787 = vsel %vm759, %v782, %v786
        %v788 = vshrl.u32 %v745, 16
        %v790 = vor.u32 %v788, %v786
        %v792 = vshll.u32 %v746, 16
        %v794 = vrot.slane %v792, 1
        %v795 = vsel %vm759, %v790, %v794
        %v796 = vshrl.u32 %v746, 16
        %v798 = vor.u32 %v796, %v794
        %v800 = vshll.u32 %v747, 16
        %v802 = vrot.slane %v800, 1
        %v803 = vsel %vm759, %v798, %v802
        %v804 = vshrl.u32 %v747, 16
        %v806 = vor.u32 %v804, %v802
        %v808 = vshll.u32 %v748, 16
        %v810 = vrot.slane %v808, 1
        %v811 = vsel %vm759, %v806, %v810
        %v812 = vshrl.u32 %v748, 16
        %v814 = vor.u32 %v812, %v810
        %v816 = vshll.u32 %v749, 16
        %v818 = vrot.slane %v816, 1
        %v819 = vsel %vm759, %v814, %v818
        %v820 = vshrl.u32 %v749, 16
        %v822 = vor.u32 %v820, %v818
        %v824 = vshll.u32 %v750, 16
        %v826 = vrot.slane %v824, 1
        %v827 = vsel %vm759, %v822, %v826
        %v828 = vshrl.u32 %v750, 16
        %v830 = vor.u32 %v828, %v826
        %v832 = vshll.u32 %v751, 16
        %v834 = vrot.slane %v832, 1
        %v835 = vsel %vm759, %v830, %v834
        %v836 = vshrl.u32 %v751, 16
        %v838 = vor.u32 %v836, %v834
        %v840 = vshll.u32 %v752, 16
        %v842 = vrot.slane %v840, 1
        %v843 = vsel %vm759, %v838, %v842
        %v844 = vshrl.u32 %v752, 16
        %v846 = vor.u32 %v844, %v842
        %v848 = vshll.u32 %v753, 16
        %v850 = vrot.slane %v848, 1
        %v851 = vsel %vm759, %v846, %v850
        %v852 = vshrl.u32 %v753, 16
        %v854 = vor.u32 %v852, %v850
        %v856 = vshll.u32 %v754, 16
        %v858 = vrot.slane %v856, 1
        %v859 = vsel %vm759, %v854, %v858
        %v860 = vshrl.u32 %v754, 16
        %v862 = vor.u32 %v860, %v858
        %v864 = vshll.u32 %v755, 16
        %v866 = vrot.slane %v864, 1
        %v867 = vsel %vm759, %v862, %v866
        %v868 = vshrl.u32 %v755, 16
        %v870 = vor.u32 %v868, %v866
        %v872 = vshll.u32 %v756, 16
        %v874 = vrot.slane %v872, 1
        %v875 = vsel %vm759, %v870, %v874
        %v876 = vshrl.u32 %v756, 16
        %v878 = vor.u32 %v876, %v874
        %v880 = vshll.u32 %v757, 16
        %v882 = vrot.slane %v880, 1
        %v883 = vsel %vm759, %v878, %v882
        %v884 = vshrl.u32 %v757, 16
        %v886 = vor.u32 %v884, %v882
        %v888 = vshll.u32 %v758, 16
        %v890 = vrot.slane %v888, 1
        %v891 = vsel %vm759, %v886, %v890
        %892 = vrot.lane.b32.xlu0 %v771, 4
        %v893 = vpop.permute.xlu0 %892
        %894 = vrot.lane.b32.xlu0 %v779, 4
        %v895 = vpop.permute.xlu0 %894
        %896 = vrot.lane.b32.xlu0 %v787, 4
        %v897 = vpop.permute.xlu0 %896
        %898 = vrot.lane.b32.xlu0 %v795, 4
        %v899 = vpop.permute.xlu0 %898
        %900 = vrot.lane.b32.xlu0 %v803, 4
        %v901 = vpop.permute.xlu0 %900
        %902 = vrot.lane.b32.xlu0 %v811, 4
        %v903 = vpop.permute.xlu0 %902
        %904 = vrot.lane.b32.xlu0 %v819, 4
        %v905 = vpop.permute.xlu0 %904
        %906 = vrot.lane.b32.xlu0 %v827, 4
        %v907 = vpop.permute.xlu0 %906
        %908 = vrot.lane.b32.xlu0 %v835, 4
        %v909 = vpop.permute.xlu0 %908
        %910 = vrot.lane.b32.xlu0 %v843, 4
        %v911 = vpop.permute.xlu0 %910
        %912 = vrot.lane.b32.xlu0 %v851, 4
        %v913 = vpop.permute.xlu0 %912
        %914 = vrot.lane.b32.xlu0 %v859, 4
        %v915 = vpop.permute.xlu0 %914
        %916 = vrot.lane.b32.xlu0 %v867, 4
        %v917 = vpop.permute.xlu0 %916
        %918 = vrot.lane.b32.xlu0 %v875, 4
        %v919 = vpop.permute.xlu0 %918
        %920 = vrot.lane.b32.xlu0 %v883, 4
        %v921 = vpop.permute.xlu0 %920
        %922 = vrot.lane.b32.xlu0 %v891, 4
        %v923 = vpop.permute.xlu0 %922
        %vm940 = vcmask 64544
        %941 = vst.msk [vmem:[#allocation2] sm:$0xff] %vm940, %v893
        %942 = vst.msk [vmem:[#allocation2 + $0x8] sm:$0xff] %vm940, %v895
        %943 = vst.msk [vmem:[#allocation2 + $0x10] sm:$0xff] %vm940, %v897
        %944 = vst.msk [vmem:[#allocation2 + $0x18] sm:$0xff] %vm940, %v899
        %945 = vst.msk [vmem:[#allocation2 + $0x20] sm:$0xff] %vm940, %v901
        %946 = vst.msk [vmem:[#allocation2 + $0x28] sm:$0xff] %vm940, %v903
        %947 = vst.msk [vmem:[#allocation2 + $0x30] sm:$0xff] %vm940, %v905
        %948 = vst.msk [vmem:[#allocation2 + $0x38] sm:$0xff] %vm940, %v907
        %949 = vst.msk [vmem:[#allocation2 + $0x40] sm:$0xff] %vm940, %v909
        %950 = vst.msk [vmem:[#allocation2 + $0x48] sm:$0xff] %vm940, %v911
        %951 = vst.msk [vmem:[#allocation2 + $0x50] sm:$0xff] %vm940, %v913
        %952 = vst.msk [vmem:[#allocation2 + $0x58] sm:$0xff] %vm940, %v915
        %953 = vst.msk [vmem:[#allocation2 + $0x60] sm:$0xff] %vm940, %v917
        %954 = vst.msk [vmem:[#allocation2 + $0x68] sm:$0xff] %vm940, %v919
        %955 = vst.msk [vmem:[#allocation2 + $0x70] sm:$0xff] %vm940, %v921
        %956 = vst.msk [vmem:[#allocation2 + $0x78] sm:$0xff] %vm940, %v923
        %v957 = vld [vmem:[%s232] sm:$0xe]
        %v958 = vld [vmem:[%s232 + $0x4] sm:$0xf]
        %v959 = vld [vmem:[%s232 + $0x8] sm:$0xf]
        %v960 = vld [vmem:[%s232 + $0xc] sm:$0xf]
        %v961 = vld [vmem:[%s232 + $0x10] sm:$0xf]
        %v962 = vld [vmem:[%s232 + $0x14] sm:$0xf]
        %v963 = vld [vmem:[%s232 + $0x18] sm:$0xf]
        %v964 = vld [vmem:[%s232 + $0x1c] sm:$0xf]
        %v965 = vld [vmem:[%s232 + $0x20] sm:$0xf]
        %v966 = vld [vmem:[%s232 + $0x24] sm:$0xf]
        %v967 = vld [vmem:[%s232 + $0x28] sm:$0xf]
        %v968 = vld [vmem:[%s232 + $0x2c] sm:$0xf]
        %v969 = vld [vmem:[%s232 + $0x30] sm:$0xf]
        %v970 = vld [vmem:[%s232 + $0x34] sm:$0xf]
        %v971 = vld [vmem:[%s232 + $0x38] sm:$0xf]
        %v972 = vld [vmem:[%s232 + $0x3c] sm:$0xf]
        %v973 = vld [vmem:[%s232 + $0x40] sm:$0xf]
        %v974 = vld [vmem:[%s232 + $0x44] sm:$0xf]
        %v975 = vld [vmem:[%s232 + $0x48] sm:$0xf]
        %v976 = vld [vmem:[%s232 + $0x4c] sm:$0xf]
        %v977 = vld [vmem:[%s232 + $0x50] sm:$0xf]
        %v978 = vld [vmem:[%s232 + $0x54] sm:$0xf]
        %v979 = vld [vmem:[%s232 + $0x58] sm:$0xf]
        %v980 = vld [vmem:[%s232 + $0x5c] sm:$0xf]
        %v981 = vld [vmem:[%s232 + $0x60] sm:$0xf]
        %v982 = vld [vmem:[%s232 + $0x64] sm:$0xf]
        %v983 = vld [vmem:[%s232 + $0x68] sm:$0xf]
        %v984 = vld [vmem:[%s232 + $0x6c] sm:$0xf]
        %v985 = vld [vmem:[%s232 + $0x70] sm:$0xf]
        %v986 = vld [vmem:[%s232 + $0x74] sm:$0xf]
        %v987 = vld [vmem:[%s232 + $0x78] sm:$0xf]
        %v988 = vld [vmem:[%s232 + $0x7c] sm:$0xf]
        %v989 = vld [vmem:[%s232 + $0x80] sm:$0x1]
        %v990 = vsel %vm338, 1, 0
        %v991 = vsel %vm339, 1, 0
        %v992 = vsel %vm340, 1, 0
        %v993 = vsel %vm341, 1, 0
        %v994 = vsel %vm342, 1, 0
        %v995 = vsel %vm343, 1, 0
        %v996 = vsel %vm344, 1, 0
        %v997 = vsel %vm345, 1, 0
        %v998 = vsel %vm346, 1, 0
        %v999 = vsel %vm347, 1, 0
        %v1000 = vsel %vm348, 1, 0
        %v1001 = vsel %vm349, 1, 0
        %v1002 = vsel %vm350, 1, 0
        %v1003 = vsel %vm351, 1, 0
        %v1004 = vsel %vm352, 1, 0
        %v1005 = vsel %vm353, 1, 0
        %v1006 = vsel %vm354, 1, 0
        %v1007 = vsel %vm355, 1, 0
        %v1008 = vsel %vm356, 1, 0
        %v1009 = vsel %vm357, 1, 0
        %v1010 = vsel %vm358, 1, 0
        %v1011 = vsel %vm359, 1, 0
        %v1012 = vsel %vm360, 1, 0
        %v1013 = vsel %vm361, 1, 0
        %v1014 = vsel %vm362, 1, 0
        %v1015 = vsel %vm363, 1, 0
        %v1016 = vsel %vm364, 1, 0
        %v1017 = vsel %vm365, 1, 0
        %v1018 = vsel %vm366, 1, 0
        %v1019 = vsel %vm367, 1, 0
        %v1020 = vsel %vm368, 1, 0
        %v1021 = vsel %vm369, 1, 0
        %vm1022 = vcmp.eq.s32.totalorder %v990, 1
        %vm1023 = vcmp.eq.s32.totalorder %v991, 1
        %vm1024 = vcmp.eq.s32.totalorder %v992, 1
        %vm1025 = vcmp.eq.s32.totalorder %v993, 1
        %vm1026 = vcmp.eq.s32.totalorder %v994, 1
        %vm1027 = vcmp.eq.s32.totalorder %v995, 1
        %vm1028 = vcmp.eq.s32.totalorder %v996, 1
        %vm1029 = vcmp.eq.s32.totalorder %v997, 1
        %vm1030 = vcmp.eq.s32.totalorder %v998, 1
        %vm1031 = vcmp.eq.s32.totalorder %v999, 1
        %vm1032 = vcmp.eq.s32.totalorder %v1000, 1
        %vm1033 = vcmp.eq.s32.totalorder %v1001, 1
        %vm1034 = vcmp.eq.s32.totalorder %v1002, 1
        %vm1035 = vcmp.eq.s32.totalorder %v1003, 1
        %vm1036 = vcmp.eq.s32.totalorder %v1004, 1
        %vm1037 = vcmp.eq.s32.totalorder %v1005, 1
        %vm1038 = vcmp.eq.s32.totalorder %v1006, 1
        %vm1039 = vcmp.eq.s32.totalorder %v1007, 1
        %vm1040 = vcmp.eq.s32.totalorder %v1008, 1
        %vm1041 = vcmp.eq.s32.totalorder %v1009, 1
        %vm1042 = vcmp.eq.s32.totalorder %v1010, 1
        %vm1043 = vcmp.eq.s32.totalorder %v1011, 1
        %vm1044 = vcmp.eq.s32.totalorder %v1012, 1
        %vm1045 = vcmp.eq.s32.totalorder %v1013, 1
        %vm1046 = vcmp.eq.s32.totalorder %v1014, 1
        %vm1047 = vcmp.eq.s32.totalorder %v1015, 1
        %vm1048 = vcmp.eq.s32.totalorder %v1016, 1
        %vm1049 = vcmp.eq.s32.totalorder %v1017, 1
        %vm1050 = vcmp.eq.s32.totalorder %v1018, 1
        %vm1051 = vcmp.eq.s32.totalorder %v1019, 1
        %vm1052 = vcmp.eq.s32.totalorder %v1020, 1
        %vm1053 = vcmp.eq.s32.totalorder %v1021, 1
        %vm1054 = vmpackc.low %vm1022, %vm1022
        %vm1055 = vmpackc.low %vm1023, %vm1023
        %vm1056 = vmpackc.low %vm1024, %vm1024
        %vm1057 = vmpackc.low %vm1025, %vm1025
        %vm1058 = vmpackc.low %vm1026, %vm1026
        %vm1059 = vmpackc.low %vm1027, %vm1027
        %vm1060 = vmpackc.low %vm1028, %vm1028
        %vm1061 = vmpackc.low %vm1029, %vm1029
        %vm1062 = vmpackc.low %vm1030, %vm1030
        %vm1063 = vmpackc.low %vm1031, %vm1031
        %vm1064 = vmpackc.low %vm1032, %vm1032
        %vm1065 = vmpackc.low %vm1033, %vm1033
        %vm1066 = vmpackc.low %vm1034, %vm1034
        %vm1067 = vmpackc.low %vm1035, %vm1035
        %vm1068 = vmpackc.low %vm1036, %vm1036
        %vm1069 = vmpackc.low %vm1037, %vm1037
        %vm1070 = vmpackc.low %vm1038, %vm1038
        %vm1071 = vmpackc.low %vm1039, %vm1039
        %vm1072 = vmpackc.low %vm1040, %vm1040
        %vm1073 = vmpackc.low %vm1041, %vm1041
        %vm1074 = vmpackc.low %vm1042, %vm1042
        %vm1075 = vmpackc.low %vm1043, %vm1043
        %vm1076 = vmpackc.low %vm1044, %vm1044
        %vm1077 = vmpackc.low %vm1045, %vm1045
        %vm1078 = vmpackc.low %vm1046, %vm1046
        %vm1079 = vmpackc.low %vm1047, %vm1047
        %vm1080 = vmpackc.low %vm1048, %vm1048
        %vm1081 = vmpackc.low %vm1049, %vm1049
        %vm1082 = vmpackc.low %vm1050, %vm1050
        %vm1083 = vmpackc.low %vm1051, %vm1051
        %vm1084 = vmpackc.low %vm1052, %vm1052
        %vm1085 = vmpackc.low %vm1053, %vm1053
        %v1086 = vsel %vm1054, 65537, 0
        %v1087 = vsel %vm1055, 65537, 0
        %v1088 = vsel %vm1056, 65537, 0
        %v1089 = vsel %vm1057, 65537, 0
        %v1090 = vsel %vm1058, 65537, 0
        %v1091 = vsel %vm1059, 65537, 0
        %v1092 = vsel %vm1060, 65537, 0
        %v1093 = vsel %vm1061, 65537, 0
        %v1094 = vsel %vm1062, 65537, 0
        %v1095 = vsel %vm1063, 65537, 0
        %v1096 = vsel %vm1064, 65537, 0
        %v1097 = vsel %vm1065, 65537, 0
        %v1098 = vsel %vm1066, 65537, 0
        %v1099 = vsel %vm1067, 65537, 0
        %v1100 = vsel %vm1068, 65537, 0
        %v1101 = vsel %vm1069, 65537, 0
        %v1102 = vsel %vm1070, 65537, 0
        %v1103 = vsel %vm1071, 65537, 0
        %v1104 = vsel %vm1072, 65537, 0
        %v1105 = vsel %vm1073, 65537, 0
        %v1106 = vsel %vm1074, 65537, 0
        %v1107 = vsel %vm1075, 65537, 0
        %v1108 = vsel %vm1076, 65537, 0
        %v1109 = vsel %vm1077, 65537, 0
        %v1110 = vsel %vm1078, 65537, 0
        %v1111 = vsel %vm1079, 65537, 0
        %v1112 = vsel %vm1080, 65537, 0
        %v1113 = vsel %vm1081, 65537, 0
        %v1114 = vsel %vm1082, 65537, 0
        %v1115 = vsel %vm1083, 65537, 0
        %v1116 = vsel %vm1084, 65537, 0
        %v1117 = vsel %vm1085, 65537, 0
        %vm1118 = vcmask 1040384
        %vm1119 = vcmask 1044484
        %vm1120 = vmor %vm1118, %vm1119
        %v1121 = vrot.slane %v1086, 7
        %v1122 = vrot.slane %v1121, 4
        %v1123 = vrot.slane %v1087, 7
        %v1124 = vsel %vm1120, %v1122, %v1123
        %v1125 = vrot.slane %v1123, 4
        %v1126 = vrot.slane %v1088, 7
        %v1127 = vsel %vm1120, %v1125, %v1126
        %v1128 = vrot.slane %v1126, 4
        %v1129 = vrot.slane %v1089, 7
        %v1130 = vsel %vm1120, %v1128, %v1129
        %v1131 = vrot.slane %v1129, 4
        %v1132 = vrot.slane %v1090, 7
        %v1133 = vsel %vm1120, %v1131, %v1132
        %v1134 = vrot.slane %v1132, 4
        %v1135 = vrot.slane %v1091, 7
        %v1136 = vsel %vm1120, %v1134, %v1135
        %v1137 = vrot.slane %v1135, 4
        %v1138 = vrot.slane %v1092, 7
        %v1139 = vsel %vm1120, %v1137, %v1138
        %v1140 = vrot.slane %v1138, 4
        %v1141 = vrot.slane %v1093, 7
        %v1142 = vsel %vm1120, %v1140, %v1141
        %v1143 = vrot.slane %v1141, 4
        %v1144 = vrot.slane %v1094, 7
        %v1145 = vsel %vm1120, %v1143, %v1144
        %v1146 = vrot.slane %v1144, 4
        %v1147 = vrot.slane %v1095, 7
        %v1148 = vsel %vm1120, %v1146, %v1147
        %v1149 = vrot.slane %v1147, 4
        %v1150 = vrot.slane %v1096, 7
        %v1151 = vsel %vm1120, %v1149, %v1150
        %v1152 = vrot.slane %v1150, 4
        %v1153 = vrot.slane %v1097, 7
        %v1154 = vsel %vm1120, %v1152, %v1153
        %v1155 = vrot.slane %v1153, 4
        %v1156 = vrot.slane %v1098, 7
        %v1157 = vsel %vm1120, %v1155, %v1156
        %v1158 = vrot.slane %v1156, 4
        %v1159 = vrot.slane %v1099, 7
        %v1160 = vsel %vm1120, %v1158, %v1159
        %v1161 = vrot.slane %v1159, 4
        %v1162 = vrot.slane %v1100, 7
        %v1163 = vsel %vm1120, %v1161, %v1162
        %v1164 = vrot.slane %v1162, 4
        %v1165 = vrot.slane %v1101, 7
        %v1166 = vsel %vm1120, %v1164, %v1165
        %v1167 = vrot.slane %v1165, 4
        %v1168 = vrot.slane %v1102, 7
        %v1169 = vsel %vm1120, %v1167, %v1168
        %v1170 = vrot.slane %v1168, 4
        %v1171 = vrot.slane %v1103, 7
        %v1172 = vsel %vm1120, %v1170, %v1171
        %v1173 = vrot.slane %v1171, 4
        %v1174 = vrot.slane %v1104, 7
        %v1175 = vsel %vm1120, %v1173, %v1174
        %v1176 = vrot.slane %v1174, 4
        %v1177 = vrot.slane %v1105, 7
        %v1178 = vsel %vm1120, %v1176, %v1177
        %v1179 = vrot.slane %v1177, 4
        %v1180 = vrot.slane %v1106, 7
        %v1181 = vsel %vm1120, %v1179, %v1180
        %v1182 = vrot.slane %v1180, 4
        %v1183 = vrot.slane %v1107, 7
        %v1184 = vsel %vm1120, %v1182, %v1183
        %v1185 = vrot.slane %v1183, 4
        %v1186 = vrot.slane %v1108, 7
        %v1187 = vsel %vm1120, %v1185, %v1186
        %v1188 = vrot.slane %v1186, 4
        %v1189 = vrot.slane %v1109, 7
        %v1190 = vsel %vm1120, %v1188, %v1189
        %v1191 = vrot.slane %v1189, 4
        %v1192 = vrot.slane %v1110, 7
        %v1193 = vsel %vm1120, %v1191, %v1192
        %v1194 = vrot.slane %v1192, 4
        %v1195 = vrot.slane %v1111, 7
        %v1196 = vsel %vm1120, %v1194, %v1195
        %v1197 = vrot.slane %v1195, 4
        %v1198 = vrot.slane %v1112, 7
        %v1199 = vsel %vm1120, %v1197, %v1198
        %v1200 = vrot.slane %v1198, 4
        %v1201 = vrot.slane %v1113, 7
        %v1202 = vsel %vm1120, %v1200, %v1201
        %v1203 = vrot.slane %v1201, 4
        %v1204 = vrot.slane %v1114, 7
        %v1205 = vsel %vm1120, %v1203, %v1204
        %v1206 = vrot.slane %v1204, 4
        %v1207 = vrot.slane %v1115, 7
        %v1208 = vsel %vm1120, %v1206, %v1207
        %v1209 = vrot.slane %v1207, 4
        %v1210 = vrot.slane %v1116, 7
        %v1211 = vsel %vm1120, %v1209, %v1210
        %v1212 = vrot.slane %v1210, 4
        %v1213 = vrot.slane %v1117, 7
        %v1214 = vsel %vm1120, %v1212, %v1213
        %v1215 = vrot.slane %v1213, 4
        %vm1216 = vcmp.ne.s16.totalorder %v1121, 0
        %vm1217 = vcmp.ne.s16.totalorder %v1124, 0
        %vm1218 = vcmp.ne.s16.totalorder %v1127, 0
        %vm1219 = vcmp.ne.s16.totalorder %v1130, 0
        %vm1220 = vcmp.ne.s16.totalorder %v1133, 0
        %vm1221 = vcmp.ne.s16.totalorder %v1136, 0
        %vm1222 = vcmp.ne.s16.totalorder %v1139, 0
        %vm1223 = vcmp.ne.s16.totalorder %v1142, 0
        %vm1224 = vcmp.ne.s16.totalorder %v1145, 0
        %vm1225 = vcmp.ne.s16.totalorder %v1148, 0
        %vm1226 = vcmp.ne.s16.totalorder %v1151, 0
        %vm1227 = vcmp.ne.s16.totalorder %v1154, 0
        %vm1228 = vcmp.ne.s16.totalorder %v1157, 0
        %vm1229 = vcmp.ne.s16.totalorder %v1160, 0
        %vm1230 = vcmp.ne.s16.totalorder %v1163, 0
        %vm1231 = vcmp.ne.s16.totalorder %v1166, 0
        %vm1232 = vcmp.ne.s16.totalorder %v1169, 0
        %vm1233 = vcmp.ne.s16.totalorder %v1172, 0
        %vm1234 = vcmp.ne.s16.totalorder %v1175, 0
        %vm1235 = vcmp.ne.s16.totalorder %v1178, 0
        %vm1236 = vcmp.ne.s16.totalorder %v1181, 0
        %vm1237 = vcmp.ne.s16.totalorder %v1184, 0
        %vm1238 = vcmp.ne.s16.totalorder %v1187, 0
        %vm1239 = vcmp.ne.s16.totalorder %v1190, 0
        %vm1240 = vcmp.ne.s16.totalorder %v1193, 0
        %vm1241 = vcmp.ne.s16.totalorder %v1196, 0
        %vm1242 = vcmp.ne.s16.totalorder %v1199, 0
        %vm1243 = vcmp.ne.s16.totalorder %v1202, 0
        %vm1244 = vcmp.ne.s16.totalorder %v1205, 0
        %vm1245 = vcmp.ne.s16.totalorder %v1208, 0
        %vm1246 = vcmp.ne.s16.totalorder %v1211, 0
        %vm1247 = vcmp.ne.s16.totalorder %v1214, 0
        %vm1248 = vcmp.ne.s16.totalorder %v1215, 0
        %v1249 = vsel %vm1216, %v957, 0
        %v1250 = vsel %vm1217, %v958, 0
        %v1251 = vsel %vm1218, %v959, 0
        %v1252 = vsel %vm1219, %v960, 0
        %v1253 = vsel %vm1220, %v961, 0
        %v1254 = vsel %vm1221, %v962, 0
        %v1255 = vsel %vm1222, %v963, 0
        %v1256 = vsel %vm1223, %v964, 0
        %v1257 = vsel %vm1224, %v965, 0
        %v1258 = vsel %vm1225, %v966, 0
        %v1259 = vsel %vm1226, %v967, 0
        %v1260 = vsel %vm1227, %v968, 0
        %v1261 = vsel %vm1228, %v969, 0
        %v1262 = vsel %vm1229, %v970, 0
        %v1263 = vsel %vm1230, %v971, 0
        %v1264 = vsel %vm1231, %v972, 0
        %v1265 = vsel %vm1232, %v973, 0
        %v1266 = vsel %vm1233, %v974, 0
        %v1267 = vsel %vm1234, %v975, 0
        %v1268 = vsel %vm1235, %v976, 0
        %v1269 = vsel %vm1236, %v977, 0
        %v1270 = vsel %vm1237, %v978, 0
        %v1271 = vsel %vm1238, %v979, 0
        %v1272 = vsel %vm1239, %v980, 0
        %v1273 = vsel %vm1240, %v981, 0
        %v1274 = vsel %vm1241, %v982, 0
        %v1275 = vsel %vm1242, %v983, 0
        %v1276 = vsel %vm1243, %v984, 0
        %v1277 = vsel %vm1244, %v985, 0
        %v1278 = vsel %vm1245, %v986, 0
        %v1279 = vsel %vm1246, %v987, 0
        %v1280 = vsel %vm1247, %v988, 0
        %v1281 = vsel %vm1248, %v989, 0
        %v1315 = vunpack.c.l.b16 %v1249
        %v1316 = vunpack.c.l.b16 %v1250
        %v1317 = vunpack.c.l.b16 %v1251
        %v1318 = vunpack.c.l.b16 %v1252
        %v1319 = vunpack.c.l.b16 %v1253
        %v1320 = vunpack.c.l.b16 %v1254
        %v1321 = vunpack.c.l.b16 %v1255
        %v1322 = vunpack.c.l.b16 %v1256
        %v1323 = vunpack.c.l.b16 %v1257
        %v1324 = vunpack.c.l.b16 %v1258
        %v1325 = vunpack.c.l.b16 %v1259
        %v1326 = vunpack.c.l.b16 %v1260
        %v1327 = vunpack.c.l.b16 %v1261
        %v1328 = vunpack.c.l.b16 %v1262
        %v1329 = vunpack.c.l.b16 %v1263
        %v1330 = vunpack.c.l.b16 %v1264
        %v1331 = vunpack.c.l.b16 %v1265
        %v1332 = vunpack.c.l.b16 %v1266
        %v1333 = vunpack.c.l.b16 %v1267
        %v1334 = vunpack.c.l.b16 %v1268
        %v1335 = vunpack.c.l.b16 %v1269
        %v1336 = vunpack.c.l.b16 %v1270
        %v1337 = vunpack.c.l.b16 %v1271
        %v1338 = vunpack.c.l.b16 %v1272
        %v1339 = vunpack.c.l.b16 %v1273
        %v1340 = vunpack.c.l.b16 %v1274
        %v1341 = vunpack.c.l.b16 %v1275
        %v1342 = vunpack.c.l.b16 %v1276
        %v1343 = vunpack.c.l.b16 %v1277
        %v1344 = vunpack.c.l.b16 %v1278
        %v1345 = vunpack.c.l.b16 %v1279
        %v1346 = vunpack.c.l.b16 %v1280
        %v1347 = vunpack.c.l.b16 %v1281
        %v1348 = vpack.c.b16 %v1316, %v1315
        %v1349 = vpack.c.b16 %v1318, %v1317
        %v1350 = vpack.c.b16 %v1320, %v1319
        %v1351 = vpack.c.b16 %v1322, %v1321
        %v1352 = vpack.c.b16 %v1324, %v1323
        %v1353 = vpack.c.b16 %v1326, %v1325
        %v1354 = vpack.c.b16 %v1328, %v1327
        %v1355 = vpack.c.b16 %v1330, %v1329
        %v1356 = vpack.c.b16 %v1332, %v1331
        %v1357 = vpack.c.b16 %v1334, %v1333
        %v1358 = vpack.c.b16 %v1336, %v1335
        %v1359 = vpack.c.b16 %v1338, %v1337
        %v1360 = vpack.c.b16 %v1340, %v1339
        %v1361 = vpack.c.b16 %v1342, %v1341
        %v1362 = vpack.c.b16 %v1344, %v1343
        %v1363 = vpack.c.b16 %v1346, %v1345
        %v1364 = vpack.c.b16 %v1347, %v1347
        %vm1365 = vcmask 1046528
        %v1366 = vrot.slane %v1348, 1
        %v1367 = vrot.slane %v1349, 1
        %v1368 = vsel %vm1365, %v1366, %v1367
        %v1369 = vrot.slane %v1350, 1
        %v1370 = vsel %vm1365, %v1367, %v1369
        %v1371 = vrot.slane %v1351, 1
        %v1372 = vsel %vm1365, %v1369, %v1371
        %v1373 = vrot.slane %v1352, 1
        %v1374 = vsel %vm1365, %v1371, %v1373
        %v1375 = vrot.slane %v1353, 1
        %v1376 = vsel %vm1365, %v1373, %v1375
        %v1377 = vrot.slane %v1354, 1
        %v1378 = vsel %vm1365, %v1375, %v1377
        %v1379 = vrot.slane %v1355, 1
        %v1380 = vsel %vm1365, %v1377, %v1379
        %v1381 = vrot.slane %v1356, 1
        %v1382 = vsel %vm1365, %v1379, %v1381
        %v1383 = vrot.slane %v1357, 1
        %v1384 = vsel %vm1365, %v1381, %v1383
        %v1385 = vrot.slane %v1358, 1
        %v1386 = vsel %vm1365, %v1383, %v1385
        %v1387 = vrot.slane %v1359, 1
        %v1388 = vsel %vm1365, %v1385, %v1387
        %v1389 = vrot.slane %v1360, 1
        %v1390 = vsel %vm1365, %v1387, %v1389
        %v1391 = vrot.slane %v1361, 1
        %v1392 = vsel %vm1365, %v1389, %v1391
        %v1393 = vrot.slane %v1362, 1
        %v1394 = vsel %vm1365, %v1391, %v1393
        %v1395 = vrot.slane %v1363, 1
        %v1396 = vsel %vm1365, %v1393, %v1395
        %v1397 = vrot.slane %v1364, 1
        %v1398 = vsel %vm1365, %v1395, %v1397
        %1399 = vrot.lane.b32.xlu0 %v1368, 8
        %v1400 = vpop.permute.xlu0 %1399
        %1401 = vrot.lane.b32.xlu0 %v1370, 8
        %v1402 = vpop.permute.xlu0 %1401
        %1403 = vrot.lane.b32.xlu0 %v1372, 8
        %v1404 = vpop.permute.xlu0 %1403
        %1405 = vrot.lane.b32.xlu0 %v1374, 8
        %v1406 = vpop.permute.xlu0 %1405
        %1407 = vrot.lane.b32.xlu0 %v1376, 8
        %v1408 = vpop.permute.xlu0 %1407
        %1409 = vrot.lane.b32.xlu0 %v1378, 8
        %v1410 = vpop.permute.xlu0 %1409
        %1411 = vrot.lane.b32.xlu0 %v1380, 8
        %v1412 = vpop.permute.xlu0 %1411
        %1413 = vrot.lane.b32.xlu0 %v1382, 8
        %v1414 = vpop.permute.xlu0 %1413
        %1415 = vrot.lane.b32.xlu0 %v1384, 8
        %v1416 = vpop.permute.xlu0 %1415
        %1417 = vrot.lane.b32.xlu0 %v1386, 8
        %v1418 = vpop.permute.xlu0 %1417
        %1419 = vrot.lane.b32.xlu0 %v1388, 8
        %v1420 = vpop.permute.xlu0 %1419
        %1421 = vrot.lane.b32.xlu0 %v1390, 8
        %v1422 = vpop.permute.xlu0 %1421
        %1423 = vrot.lane.b32.xlu0 %v1392, 8
        %v1424 = vpop.permute.xlu0 %1423
        %1425 = vrot.lane.b32.xlu0 %v1394, 8
        %v1426 = vpop.permute.xlu0 %1425
        %1427 = vrot.lane.b32.xlu0 %v1396, 8
        %v1428 = vpop.permute.xlu0 %1427
        %1429 = vrot.lane.b32.xlu0 %v1398, 8
        %v1430 = vpop.permute.xlu0 %1429
        %vm1447 = vcmask 97344
        %1448 = vst.msk [vmem:[#allocation2] sm:$0xff] %vm1447, %v1400
        %1449 = vst.msk [vmem:[#allocation2 + $0x8] sm:$0xff] %vm1447, %v1402
        %1450 = vst.msk [vmem:[#allocation2 + $0x10] sm:$0xff] %vm1447, %v1404
        %1451 = vst.msk [vmem:[#allocation2 + $0x18] sm:$0xff] %vm1447, %v1406
        %1452 = vst.msk [vmem:[#allocation2 + $0x20] sm:$0xff] %vm1447, %v1408
        %1453 = vst.msk [vmem:[#allocation2 + $0x28] sm:$0xff] %vm1447, %v1410
        %1454 = vst.msk [vmem:[#allocation2 + $0x30] sm:$0xff] %vm1447, %v1412
        %1455 = vst.msk [vmem:[#allocation2 + $0x38] sm:$0xff] %vm1447, %v1414
        %1456 = vst.msk [vmem:[#allocation2 + $0x40] sm:$0xff] %vm1447, %v1416
        %1457 = vst.msk [vmem:[#allocation2 + $0x48] sm:$0xff] %vm1447, %v1418
        %1458 = vst.msk [vmem:[#allocation2 + $0x50] sm:$0xff] %vm1447, %v1420
        %1459 = vst.msk [vmem:[#allocation2 + $0x58] sm:$0xff] %vm1447, %v1422
        %1460 = vst.msk [vmem:[#allocation2 + $0x60] sm:$0xff] %vm1447, %v1424
        %1461 = vst.msk [vmem:[#allocation2 + $0x68] sm:$0xff] %vm1447, %v1426
        %1462 = vst.msk [vmem:[#allocation2 + $0x70] sm:$0xff] %vm1447, %v1428
        %1463 = vst.msk [vmem:[#allocation2 + $0x78] sm:$0xff] %vm1447, %v1430
        %v1464 = vld [vmem:[%s232 + $0x8] sm:$0xf]
        %v1465 = vld [vmem:[%s232 + $0xc] sm:$0xf]
        %v1466 = vld [vmem:[%s232 + $0x10] sm:$0xf]
        %v1467 = vld [vmem:[%s232 + $0x14] sm:$0xf]
        %v1468 = vld [vmem:[%s232 + $0x18] sm:$0xf]
        %v1469 = vld [vmem:[%s232 + $0x1c] sm:$0xf]
        %v1470 = vld [vmem:[%s232 + $0x20] sm:$0xf]
        %v1471 = vld [vmem:[%s232 + $0x24] sm:$0xf]
        %v1472 = vld [vmem:[%s232 + $0x28] sm:$0xf]
        %v1473 = vld [vmem:[%s232 + $0x2c] sm:$0xf]
        %v1474 = vld [vmem:[%s232 + $0x30] sm:$0xf]
        %v1475 = vld [vmem:[%s232 + $0x34] sm:$0xf]
        %v1476 = vld [vmem:[%s232 + $0x38] sm:$0xf]
        %v1477 = vld [vmem:[%s232 + $0x3c] sm:$0xf]
        %v1478 = vld [vmem:[%s232 + $0x40] sm:$0xf]
        %v1479 = vld [vmem:[%s232 + $0x44] sm:$0xf]
        %v1480 = vld [vmem:[%s232 + $0x48] sm:$0xf]
        %v1481 = vld [vmem:[%s232 + $0x4c] sm:$0xf]
        %v1482 = vld [vmem:[%s232 + $0x50] sm:$0xf]
        %v1483 = vld [vmem:[%s232 + $0x54] sm:$0xf]
        %v1484 = vld [vmem:[%s232 + $0x58] sm:$0xf]
        %v1485 = vld [vmem:[%s232 + $0x5c] sm:$0xf]
        %v1486 = vld [vmem:[%s232 + $0x60] sm:$0xf]
        %v1487 = vld [vmem:[%s232 + $0x64] sm:$0xf]
        %v1488 = vld [vmem:[%s232 + $0x68] sm:$0xf]
        %v1489 = vld [vmem:[%s232 + $0x6c] sm:$0xf]
        %v1490 = vld [vmem:[%s232 + $0x70] sm:$0xf]
        %v1491 = vld [vmem:[%s232 + $0x74] sm:$0xf]
        %v1492 = vld [vmem:[%s232 + $0x78] sm:$0xf]
        %v1493 = vld [vmem:[%s232 + $0x7c] sm:$0xf]
        %v1494 = vld [vmem:[%s232 + $0x80] sm:$0xf]
        %v1495 = vld [vmem:[%s232 + $0x84] sm:$0xf]
        %v1496 = vsel %vm466, %v1464, 0
        %v1497 = vsel %vm467, %v1465, 0
        %v1498 = vsel %vm468, %v1466, 0
        %v1499 = vsel %vm469, %v1467, 0
        %v1500 = vsel %vm470, %v1468, 0
        %v1501 = vsel %vm471, %v1469, 0
        %v1502 = vsel %vm472, %v1470, 0
        %v1503 = vsel %vm473, %v1471, 0
        %v1504 = vsel %vm474, %v1472, 0
        %v1505 = vsel %vm475, %v1473, 0
        %v1506 = vsel %vm476, %v1474, 0
        %v1507 = vsel %vm477, %v1475, 0
        %v1508 = vsel %vm478, %v1476, 0
        %v1509 = vsel %vm479, %v1477, 0
        %v1510 = vsel %vm480, %v1478, 0
        %v1511 = vsel %vm481, %v1479, 0
        %v1512 = vsel %vm482, %v1480, 0
        %v1513 = vsel %vm483, %v1481, 0
        %v1514 = vsel %vm484, %v1482, 0
        %v1515 = vsel %vm485, %v1483, 0
        %v1516 = vsel %vm486, %v1484, 0
        %v1517 = vsel %vm487, %v1485, 0
        %v1518 = vsel %vm488, %v1486, 0
        %v1519 = vsel %vm489, %v1487, 0
        %v1520 = vsel %vm490, %v1488, 0
        %v1521 = vsel %vm491, %v1489, 0
        %v1522 = vsel %vm492, %v1490, 0
        %v1523 = vsel %vm493, %v1491, 0
        %v1524 = vsel %vm494, %v1492, 0
        %v1525 = vsel %vm495, %v1493, 0
        %v1526 = vsel %vm496, %v1494, 0
        %v1527 = vsel %vm497, %v1495, 0
        %v1560 = vunpack.c.l.b16 %v1496
        %v1561 = vunpack.c.l.b16 %v1497
        %v1562 = vunpack.c.l.b16 %v1498
        %v1563 = vunpack.c.l.b16 %v1499
        %v1564 = vunpack.c.l.b16 %v1500
        %v1565 = vunpack.c.l.b16 %v1501
        %v1566 = vunpack.c.l.b16 %v1502
        %v1567 = vunpack.c.l.b16 %v1503
        %v1568 = vunpack.c.l.b16 %v1504
        %v1569 = vunpack.c.l.b16 %v1505
        %v1570 = vunpack.c.l.b16 %v1506
        %v1571 = vunpack.c.l.b16 %v1507
        %v1572 = vunpack.c.l.b16 %v1508
        %v1573 = vunpack.c.l.b16 %v1509
        %v1574 = vunpack.c.l.b16 %v1510
        %v1575 = vunpack.c.l.b16 %v1511
        %v1576 = vunpack.c.l.b16 %v1512
        %v1577 = vunpack.c.l.b16 %v1513
        %v1578 = vunpack.c.l.b16 %v1514
        %v1579 = vunpack.c.l.b16 %v1515
        %v1580 = vunpack.c.l.b16 %v1516
        %v1581 = vunpack.c.l.b16 %v1517
        %v1582 = vunpack.c.l.b16 %v1518
        %v1583 = vunpack.c.l.b16 %v1519
        %v1584 = vunpack.c.l.b16 %v1520
        %v1585 = vunpack.c.l.b16 %v1521
        %v1586 = vunpack.c.l.b16 %v1522
        %v1587 = vunpack.c.l.b16 %v1523
        %v1588 = vunpack.c.l.b16 %v1524
        %v1589 = vunpack.c.l.b16 %v1525
        %v1590 = vunpack.c.l.b16 %v1526
        %v1591 = vunpack.c.l.b16 %v1527
        %v1592 = vpack.c.b16 %v1561, %v1560
        %v1593 = vpack.c.b16 %v1563, %v1562
        %v1594 = vpack.c.b16 %v1565, %v1564
        %v1595 = vpack.c.b16 %v1567, %v1566
        %v1596 = vpack.c.b16 %v1569, %v1568
        %v1597 = vpack.c.b16 %v1571, %v1570
        %v1598 = vpack.c.b16 %v1573, %v1572
        %v1599 = vpack.c.b16 %v1575, %v1574
        %v1600 = vpack.c.b16 %v1577, %v1576
        %v1601 = vpack.c.b16 %v1579, %v1578
        %v1602 = vpack.c.b16 %v1581, %v1580
        %v1603 = vpack.c.b16 %v1583, %v1582
        %v1604 = vpack.c.b16 %v1585, %v1584
        %v1605 = vpack.c.b16 %v1587, %v1586
        %v1606 = vpack.c.b16 %v1589, %v1588
        %v1607 = vpack.c.b16 %v1591, %v1590
        %1608 = vrot.lane.b32.xlu0 %v1592, 12
        %v1609 = vpop.permute.xlu0 %1608
        %1610 = vrot.lane.b32.xlu0 %v1593, 12
        %v1611 = vpop.permute.xlu0 %1610
        %1612 = vrot.lane.b32.xlu0 %v1594, 12
        %v1613 = vpop.permute.xlu0 %1612
        %1614 = vrot.lane.b32.xlu0 %v1595, 12
        %v1615 = vpop.permute.xlu0 %1614
        %1616 = vrot.lane.b32.xlu0 %v1596, 12
        %v1617 = vpop.permute.xlu0 %1616
        %1618 = vrot.lane.b32.xlu0 %v1597, 12
        %v1619 = vpop.permute.xlu0 %1618
        %1620 = vrot.lane.b32.xlu0 %v1598, 12
        %v1621 = vpop.permute.xlu0 %1620
        %1622 = vrot.lane.b32.xlu0 %v1599, 12
        %v1623 = vpop.permute.xlu0 %1622
        %1624 = vrot.lane.b32.xlu0 %v1600, 12
        %v1625 = vpop.permute.xlu0 %1624
        %1626 = vrot.lane.b32.xlu0 %v1601, 12
        %v1627 = vpop.permute.xlu0 %1626
        %1628 = vrot.lane.b32.xlu0 %v1602, 12
        %v1629 = vpop.permute.xlu0 %1628
        %1630 = vrot.lane.b32.xlu0 %v1603, 12
        %v1631 = vpop.permute.xlu0 %1630
        %1632 = vrot.lane.b32.xlu0 %v1604, 12
        %v1633 = vpop.permute.xlu0 %1632
        %1634 = vrot.lane.b32.xlu0 %v1605, 12
        %v1635 = vpop.permute.xlu0 %1634
        %1636 = vrot.lane.b32.xlu0 %v1606, 12
        %v1637 = vpop.permute.xlu0 %1636
        %1638 = vrot.lane.b32.xlu0 %v1607, 12
        %v1639 = vpop.permute.xlu0 %1638
        %vm1656 = vcmask 130144
        %1657 = vst.msk [vmem:[#allocation2] sm:$0xff] %vm1656, %v1609
        %1658 = vst.msk [vmem:[#allocation2 + $0x8] sm:$0xff] %vm1656, %v1611
        %1659 = vst.msk [vmem:[#allocation2 + $0x10] sm:$0xff] %vm1656, %v1613
        %1660 = vst.msk [vmem:[#allocation2 + $0x18] sm:$0xff] %vm1656, %v1615
        %1661 = vst.msk [vmem:[#allocation2 + $0x20] sm:$0xff] %vm1656, %v1617
        %1662 = vst.msk [vmem:[#allocation2 + $0x28] sm:$0xff] %vm1656, %v1619
        %1663 = vst.msk [vmem:[#allocation2 + $0x30] sm:$0xff] %vm1656, %v1621
        %1664 = vst.msk [vmem:[#allocation2 + $0x38] sm:$0xff] %vm1656, %v1623
        %1665 = vst.msk [vmem:[#allocation2 + $0x40] sm:$0xff] %vm1656, %v1625
        %1666 = vst.msk [vmem:[#allocation2 + $0x48] sm:$0xff] %vm1656, %v1627
        %1667 = vst.msk [vmem:[#allocation2 + $0x50] sm:$0xff] %vm1656, %v1629
        %1668 = vst.msk [vmem:[#allocation2 + $0x58] sm:$0xff] %vm1656, %v1631
        %1669 = vst.msk [vmem:[#allocation2 + $0x60] sm:$0xff] %vm1656, %v1633
        %1670 = vst.msk [vmem:[#allocation2 + $0x68] sm:$0xff] %vm1656, %v1635
        %1671 = vst.msk [vmem:[#allocation2 + $0x70] sm:$0xff] %vm1656, %v1637
        %1672 = vst.msk [vmem:[#allocation2 + $0x78] sm:$0xff] %vm1656, %v1639
        %v1673 = vld [vmem:[%s232 + $0x8] sm:$0xf]
        %v1674 = vld [vmem:[%s232 + $0xc] sm:$0xf]
        %v1675 = vld [vmem:[%s232 + $0x10] sm:$0xf]
        %v1676 = vld [vmem:[%s232 + $0x14] sm:$0xf]
        %v1677 = vld [vmem:[%s232 + $0x18] sm:$0xf]
        %v1678 = vld [vmem:[%s232 + $0x1c] sm:$0xf]
        %v1679 = vld [vmem:[%s232 + $0x20] sm:$0xf]
        %v1680 = vld [vmem:[%s232 + $0x24] sm:$0xf]
        %v1681 = vld [vmem:[%s232 + $0x28] sm:$0xf]
        %v1682 = vld [vmem:[%s232 + $0x2c] sm:$0xf]
        %v1683 = vld [vmem:[%s232 + $0x30] sm:$0xf]
        %v1684 = vld [vmem:[%s232 + $0x34] sm:$0xf]
        %v1685 = vld [vmem:[%s232 + $0x38] sm:$0xf]
        %v1686 = vld [vmem:[%s232 + $0x3c] sm:$0xf]
        %v1687 = vld [vmem:[%s232 + $0x40] sm:$0xf]
        %v1688 = vld [vmem:[%s232 + $0x44] sm:$0xf]
        %v1689 = vld [vmem:[%s232 + $0x48] sm:$0xf]
        %v1690 = vld [vmem:[%s232 + $0x4c] sm:$0xf]
        %v1691 = vld [vmem:[%s232 + $0x50] sm:$0xf]
        %v1692 = vld [vmem:[%s232 + $0x54] sm:$0xf]
        %v1693 = vld [vmem:[%s232 + $0x58] sm:$0xf]
        %v1694 = vld [vmem:[%s232 + $0x5c] sm:$0xf]
        %v1695 = vld [vmem:[%s232 + $0x60] sm:$0xf]
        %v1696 = vld [vmem:[%s232 + $0x64] sm:$0xf]
        %v1697 = vld [vmem:[%s232 + $0x68] sm:$0xf]
        %v1698 = vld [vmem:[%s232 + $0x6c] sm:$0xf]
        %v1699 = vld [vmem:[%s232 + $0x70] sm:$0xf]
        %v1700 = vld [vmem:[%s232 + $0x74] sm:$0xf]
        %v1701 = vld [vmem:[%s232 + $0x78] sm:$0xf]
        %v1702 = vld [vmem:[%s232 + $0x7c] sm:$0xf]
        %v1703 = vld [vmem:[%s232 + $0x80] sm:$0xf]
        %v1704 = vld [vmem:[%s232 + $0x84] sm:$0xf]
        %v1705 = vld [vmem:[%s232 + $0x88] sm:$0x1]
        %v1739 = vunpack.c.l.b16 %v1673
        %v1740 = vunpack.c.l.b16 %v1674
        %v1741 = vunpack.c.l.b16 %v1675
        %v1742 = vunpack.c.l.b16 %v1676
        %v1743 = vunpack.c.l.b16 %v1677
        %v1744 = vunpack.c.l.b16 %v1678
        %v1745 = vunpack.c.l.b16 %v1679
        %v1746 = vunpack.c.l.b16 %v1680
        %v1747 = vunpack.c.l.b16 %v1681
        %v1748 = vunpack.c.l.b16 %v1682
        %v1749 = vunpack.c.l.b16 %v1683
        %v1750 = vunpack.c.l.b16 %v1684
        %v1751 = vunpack.c.l.b16 %v1685
        %v1752 = vunpack.c.l.b16 %v1686
        %v1753 = vunpack.c.l.b16 %v1687
        %v1754 = vunpack.c.l.b16 %v1688
        %v1755 = vunpack.c.l.b16 %v1689
        %v1756 = vunpack.c.l.b16 %v1690
        %v1757 = vunpack.c.l.b16 %v1691
        %v1758 = vunpack.c.l.b16 %v1692
        %v1759 = vunpack.c.l.b16 %v1693
        %v1760 = vunpack.c.l.b16 %v1694
        %v1761 = vunpack.c.l.b16 %v1695
        %v1762 = vunpack.c.l.b16 %v1696
        %v1763 = vunpack.c.l.b16 %v1697
        %v1764 = vunpack.c.l.b16 %v1698
        %v1765 = vunpack.c.l.b16 %v1699
        %v1766 = vunpack.c.l.b16 %v1700
        %v1767 = vunpack.c.l.b16 %v1701
        %v1768 = vunpack.c.l.b16 %v1702
        %v1769 = vunpack.c.l.b16 %v1703
        %v1770 = vunpack.c.l.b16 %v1704
        %v1771 = vunpack.c.l.b16 %v1705
        %v1772 = vpack.c.b16 %v1740, %v1739
        %v1773 = vpack.c.b16 %v1742, %v1741
        %v1774 = vpack.c.b16 %v1744, %v1743
        %v1775 = vpack.c.b16 %v1746, %v1745
        %v1776 = vpack.c.b16 %v1748, %v1747
        %v1777 = vpack.c.b16 %v1750, %v1749
        %v1778 = vpack.c.b16 %v1752, %v1751
        %v1779 = vpack.c.b16 %v1754, %v1753
        %v1780 = vpack.c.b16 %v1756, %v1755
        %v1781 = vpack.c.b16 %v1758, %v1757
        %v1782 = vpack.c.b16 %v1760, %v1759
        %v1783 = vpack.c.b16 %v1762, %v1761
        %v1784 = vpack.c.b16 %v1764, %v1763
        %v1785 = vpack.c.b16 %v1766, %v1765
        %v1786 = vpack.c.b16 %v1768, %v1767
        %v1787 = vpack.c.b16 %v1770, %v1769
        %v1788 = vpack.c.b16 %v1771, %v1771
        %v1790 = vshrl.u32 %v1772, 16
        %v1792 = vshll.u32 %v1772, 16
        %v1794 = vrot.slane %v1792, 1
        %v1795 = vor.u32 %v1790, %v1794
        %v1797 = vshll.u32 %v1773, 16
        %v1799 = vrot.slane %v1797, 1
        %v1800 = vsel %vm759, %v1795, %v1799
        %v1801 = vshrl.u32 %v1773, 16
        %v1803 = vor.u32 %v1801, %v1799
        %v1805 = vshll.u32 %v1774, 16
        %v1807 = vrot.slane %v1805, 1
        %v1808 = vsel %vm759, %v1803, %v1807
        %v1809 = vshrl.u32 %v1774, 16
        %v1811 = vor.u32 %v1809, %v1807
        %v1813 = vshll.u32 %v1775, 16
        %v1815 = vrot.slane %v1813, 1
        %v1816 = vsel %vm759, %v1811, %v1815
        %v1817 = vshrl.u32 %v1775, 16
        %v1819 = vor.u32 %v1817, %v1815
        %v1821 = vshll.u32 %v1776, 16
        %v1823 = vrot.slane %v1821, 1
        %v1824 = vsel %vm759, %v1819, %v1823
        %v1825 = vshrl.u32 %v1776, 16
        %v1827 = vor.u32 %v1825, %v1823
        %v1829 = vshll.u32 %v1777, 16
        %v1831 = vrot.slane %v1829, 1
        %v1832 = vsel %vm759, %v1827, %v1831
        %v1833 = vshrl.u32 %v1777, 16
        %v1835 = vor.u32 %v1833, %v1831
        %v1837 = vshll.u32 %v1778, 16
        %v1839 = vrot.slane %v1837, 1
        %v1840 = vsel %vm759, %v1835, %v1839
        %v1841 = vshrl.u32 %v1778, 16
        %v1843 = vor.u32 %v1841, %v1839
        %v1845 = vshll.u32 %v1779, 16
        %v1847 = vrot.slane %v1845, 1
        %v1848 = vsel %vm759, %v1843, %v1847
        %v1849 = vshrl.u32 %v1779, 16
        %v1851 = vor.u32 %v1849, %v1847
        %v1853 = vshll.u32 %v1780, 16
        %v1855 = vrot.slane %v1853, 1
        %v1856 = vsel %vm759, %v1851, %v1855
        %v1857 = vshrl.u32 %v1780, 16
        %v1859 = vor.u32 %v1857, %v1855
        %v1861 = vshll.u32 %v1781, 16
        %v1863 = vrot.slane %v1861, 1
        %v1864 = vsel %vm759, %v1859, %v1863
        %v1865 = vshrl.u32 %v1781, 16
        %v1867 = vor.u32 %v1865, %v1863
        %v1869 = vshll.u32 %v1782, 16
        %v1871 = vrot.slane %v1869, 1
        %v1872 = vsel %vm759, %v1867, %v1871
        %v1873 = vshrl.u32 %v1782, 16
        %v1875 = vor.u32 %v1873, %v1871
        %v1877 = vshll.u32 %v1783, 16
        %v1879 = vrot.slane %v1877, 1
        %v1880 = vsel %vm759, %v1875, %v1879
        %v1881 = vshrl.u32 %v1783, 16
        %v1883 = vor.u32 %v1881, %v1879
        %v1885 = vshll.u32 %v1784, 16
        %v1887 = vrot.slane %v1885, 1
        %v1888 = vsel %vm759, %v1883, %v1887
        %v1889 = vshrl.u32 %v1784, 16
        %v1891 = vor.u32 %v1889, %v1887
        %v1893 = vshll.u32 %v1785, 16
        %v1895 = vrot.slane %v1893, 1
        %v1896 = vsel %vm759, %v1891, %v1895
        %v1897 = vshrl.u32 %v1785, 16
        %v1899 = vor.u32 %v1897, %v1895
        %v1901 = vshll.u32 %v1786, 16
        %v1903 = vrot.slane %v1901, 1
        %v1904 = vsel %vm759, %v1899, %v1903
        %v1905 = vshrl.u32 %v1786, 16
        %v1907 = vor.u32 %v1905, %v1903
        %v1909 = vshll.u32 %v1787, 16
        %v1911 = vrot.slane %v1909, 1
        %v1912 = vsel %vm759, %v1907, %v1911
        %v1913 = vshrl.u32 %v1787, 16
        %v1915 = vor.u32 %v1913, %v1911
        %v1917 = vshll.u32 %v1788, 16
        %v1919 = vrot.slane %v1917, 1
        %v1920 = vsel %vm759, %v1915, %v1919
        %1921 = vrot.lane.b32.xlu0 %v1800, 16
        %v1922 = vpop.permute.xlu0 %1921
        %1923 = vrot.lane.b32.xlu0 %v1808, 16
        %v1924 = vpop.permute.xlu0 %1923
        %1925 = vrot.lane.b32.xlu0 %v1816, 16
        %v1926 = vpop.permute.xlu0 %1925
        %1927 = vrot.lane.b32.xlu0 %v1824, 16
        %v1928 = vpop.permute.xlu0 %1927
        %1929 = vrot.lane.b32.xlu0 %v1832, 16
        %v1930 = vpop.permute.xlu0 %1929
        %1931 = vrot.lane.b32.xlu0 %v1840, 16
        %v1932 = vpop.permute.xlu0 %1931
        %1933 = vrot.lane.b32.xlu0 %v1848, 16
        %v1934 = vpop.permute.xlu0 %1933
        %1935 = vrot.lane.b32.xlu0 %v1856, 16
        %v1936 = vpop.permute.xlu0 %1935
        %1937 = vrot.lane.b32.xlu0 %v1864, 16
        %v1938 = vpop.permute.xlu0 %1937
        %1939 = vrot.lane.b32.xlu0 %v1872, 16
        %v1940 = vpop.permute.xlu0 %1939
        %1941 = vrot.lane.b32.xlu0 %v1880, 16
        %v1942 = vpop.permute.xlu0 %1941
        %1943 = vrot.lane.b32.xlu0 %v1888, 16
        %v1944 = vpop.permute.xlu0 %1943
        %1945 = vrot.lane.b32.xlu0 %v1896, 16
        %v1946 = vpop.permute.xlu0 %1945
        %1947 = vrot.lane.b32.xlu0 %v1904, 16
        %v1948 = vpop.permute.xlu0 %1947
        %1949 = vrot.lane.b32.xlu0 %v1912, 16
        %v1950 = vpop.permute.xlu0 %1949
        %1951 = vrot.lane.b32.xlu0 %v1920, 16
        %v1952 = vpop.permute.xlu0 %1951
        %vm1969 = vcmask 162944
        %1970 = vst.msk [vmem:[#allocation2] sm:$0xff] %vm1969, %v1922
        %1971 = vst.msk [vmem:[#allocation2 + $0x8] sm:$0xff] %vm1969, %v1924
        %1972 = vst.msk [vmem:[#allocation2 + $0x10] sm:$0xff] %vm1969, %v1926
        %1973 = vst.msk [vmem:[#allocation2 + $0x18] sm:$0xff] %vm1969, %v1928
        %1974 = vst.msk [vmem:[#allocation2 + $0x20] sm:$0xff] %vm1969, %v1930
        %1975 = vst.msk [vmem:[#allocation2 + $0x28] sm:$0xff] %vm1969, %v1932
        %1976 = vst.msk [vmem:[#allocation2 + $0x30] sm:$0xff] %vm1969, %v1934
        %1977 = vst.msk [vmem:[#allocation2 + $0x38] sm:$0xff] %vm1969, %v1936
        %1978 = vst.msk [vmem:[#allocation2 + $0x40] sm:$0xff] %vm1969, %v1938
        %1979 = vst.msk [vmem:[#allocation2 + $0x48] sm:$0xff] %vm1969, %v1940
        %1980 = vst.msk [vmem:[#allocation2 + $0x50] sm:$0xff] %vm1969, %v1942
        %1981 = vst.msk [vmem:[#allocation2 + $0x58] sm:$0xff] %vm1969, %v1944
        %1982 = vst.msk [vmem:[#allocation2 + $0x60] sm:$0xff] %vm1969, %v1946
        %1983 = vst.msk [vmem:[#allocation2 + $0x68] sm:$0xff] %vm1969, %v1948
        %1984 = vst.msk [vmem:[#allocation2 + $0x70] sm:$0xff] %vm1969, %v1950
        %1985 = vst.msk [vmem:[#allocation2 + $0x78] sm:$0xff] %vm1969, %v1952
        %v1986 = vld [vmem:[%s232 + $0x8] sm:$0xe]
        %v1987 = vld [vmem:[%s232 + $0xc] sm:$0xf]
        %v1988 = vld [vmem:[%s232 + $0x10] sm:$0xf]
        %v1989 = vld [vmem:[%s232 + $0x14] sm:$0xf]
        %v1990 = vld [vmem:[%s232 + $0x18] sm:$0xf]
        %v1991 = vld [vmem:[%s232 + $0x1c] sm:$0xf]
        %v1992 = vld [vmem:[%s232 + $0x20] sm:$0xf]
        %v1993 = vld [vmem:[%s232 + $0x24] sm:$0xf]
        %v1994 = vld [vmem:[%s232 + $0x28] sm:$0xf]
        %v1995 = vld [vmem:[%s232 + $0x2c] sm:$0xf]
        %v1996 = vld [vmem:[%s232 + $0x30] sm:$0xf]
        %v1997 = vld [vmem:[%s232 + $0x34] sm:$0xf]
        %v1998 = vld [vmem:[%s232 + $0x38] sm:$0xf]
        %v1999 = vld [vmem:[%s232 + $0x3c] sm:$0xf]
        %v2000 = vld [vmem:[%s232 + $0x40] sm:$0xf]
        %v2001 = vld [vmem:[%s232 + $0x44] sm:$0xf]
        %v2002 = vld [vmem:[%s232 + $0x48] sm:$0xf]
        %v2003 = vld [vmem:[%s232 + $0x4c] sm:$0xf]
        %v2004 = vld [vmem:[%s232 + $0x50] sm:$0xf]
        %v2005 = vld [vmem:[%s232 + $0x54] sm:$0xf]
        %v2006 = vld [vmem:[%s232 + $0x58] sm:$0xf]
        %v2007 = vld [vmem:[%s232 + $0x5c] sm:$0xf]
        %v2008 = vld [vmem:[%s232 + $0x60] sm:$0xf]
        %v2009 = vld [vmem:[%s232 + $0x64] sm:$0xf]
        %v2010 = vld [vmem:[%s232 + $0x68] sm:$0xf]
        %v2011 = vld [vmem:[%s232 + $0x6c] sm:$0xf]
        %v2012 = vld [vmem:[%s232 + $0x70] sm:$0xf]
        %v2013 = vld [vmem:[%s232 + $0x74] sm:$0xf]
        %v2014 = vld [vmem:[%s232 + $0x78] sm:$0xf]
        %v2015 = vld [vmem:[%s232 + $0x7c] sm:$0xf]
        %v2016 = vld [vmem:[%s232 + $0x80] sm:$0xf]
        %v2017 = vld [vmem:[%s232 + $0x84] sm:$0xf]
        %v2018 = vld [vmem:[%s232 + $0x88] sm:$0x1]
        %v2019 = vsel %vm1216, %v1986, 0
        %v2020 = vsel %vm1217, %v1987, 0
        %v2021 = vsel %vm1218, %v1988, 0
        %v2022 = vsel %vm1219, %v1989, 0
        %v2023 = vsel %vm1220, %v1990, 0
        %v2024 = vsel %vm1221, %v1991, 0
        %v2025 = vsel %vm1222, %v1992, 0
        %v2026 = vsel %vm1223, %v1993, 0
        %v2027 = vsel %vm1224, %v1994, 0
        %v2028 = vsel %vm1225, %v1995, 0
        %v2029 = vsel %vm1226, %v1996, 0
        %v2030 = vsel %vm1227, %v1997, 0
        %v2031 = vsel %vm1228, %v1998, 0
        %v2032 = vsel %vm1229, %v1999, 0
        %v2033 = vsel %vm1230, %v2000, 0
        %v2034 = vsel %vm1231, %v2001, 0
        %v2035 = vsel %vm1232, %v2002, 0
        %v2036 = vsel %vm1233, %v2003, 0
        %v2037 = vsel %vm1234, %v2004, 0
        %v2038 = vsel %vm1235, %v2005, 0
        %v2039 = vsel %vm1236, %v2006, 0
        %v2040 = vsel %vm1237, %v2007, 0
        %v2041 = vsel %vm1238, %v2008, 0
        %v2042 = vsel %vm1239, %v2009, 0
        %v2043 = vsel %vm1240, %v2010, 0
        %v2044 = vsel %vm1241, %v2011, 0
        %v2045 = vsel %vm1242, %v2012, 0
        %v2046 = vsel %vm1243, %v2013, 0
        %v2047 = vsel %vm1244, %v2014, 0
        %v2048 = vsel %vm1245, %v2015, 0
        %v2049 = vsel %vm1246, %v2016, 0
        %v2050 = vsel %vm1247, %v2017, 0
        %v2051 = vsel %vm1248, %v2018, 0
        %v2085 = vunpack.c.l.b16 %v2019
        %v2086 = vunpack.c.l.b16 %v2020
        %v2087 = vunpack.c.l.b16 %v2021
        %v2088 = vunpack.c.l.b16 %v2022
        %v2089 = vunpack.c.l.b16 %v2023
        %v2090 = vunpack.c.l.b16 %v2024
        %v2091 = vunpack.c.l.b16 %v2025
        %v2092 = vunpack.c.l.b16 %v2026
        %v2093 = vunpack.c.l.b16 %v2027
        %v2094 = vunpack.c.l.b16 %v2028
        %v2095 = vunpack.c.l.b16 %v2029
        %v2096 = vunpack.c.l.b16 %v2030
        %v2097 = vunpack.c.l.b16 %v2031
        %v2098 = vunpack.c.l.b16 %v2032
        %v2099 = vunpack.c.l.b16 %v2033
        %v2100 = vunpack.c.l.b16 %v2034
        %v2101 = vunpack.c.l.b16 %v2035
        %v2102 = vunpack.c.l.b16 %v2036
        %v2103 = vunpack.c.l.b16 %v2037
        %v2104 = vunpack.c.l.b16 %v2038
        %v2105 = vunpack.c.l.b16 %v2039
        %v2106 = vunpack.c.l.b16 %v2040
        %v2107 = vunpack.c.l.b16 %v2041
        %v2108 = vunpack.c.l.b16 %v2042
        %v2109 = vunpack.c.l.b16 %v2043
        %v2110 = vunpack.c.l.b16 %v2044
        %v2111 = vunpack.c.l.b16 %v2045
        %v2112 = vunpack.c.l.b16 %v2046
        %v2113 = vunpack.c.l.b16 %v2047
        %v2114 = vunpack.c.l.b16 %v2048
        %v2115 = vunpack.c.l.b16 %v2049
        %v2116 = vunpack.c.l.b16 %v2050
        %v2117 = vunpack.c.l.b16 %v2051
        %v2118 = vpack.c.b16 %v2086, %v2085
        %v2119 = vpack.c.b16 %v2088, %v2087
        %v2120 = vpack.c.b16 %v2090, %v2089
        %v2121 = vpack.c.b16 %v2092, %v2091
        %v2122 = vpack.c.b16 %v2094, %v2093
        %v2123 = vpack.c.b16 %v2096, %v2095
        %v2124 = vpack.c.b16 %v2098, %v2097
        %v2125 = vpack.c.b16 %v2100, %v2099
        %v2126 = vpack.c.b16 %v2102, %v2101
        %v2127 = vpack.c.b16 %v2104, %v2103
        %v2128 = vpack.c.b16 %v2106, %v2105
        %v2129 = vpack.c.b16 %v2108, %v2107
        %v2130 = vpack.c.b16 %v2110, %v2109
        %v2131 = vpack.c.b16 %v2112, %v2111
        %v2132 = vpack.c.b16 %v2114, %v2113
        %v2133 = vpack.c.b16 %v2116, %v2115
        %v2134 = vpack.c.b16 %v2117, %v2117
        %v2135 = vrot.slane %v2118, 1
        %v2136 = vrot.slane %v2119, 1
        %v2137 = vsel %vm1365, %v2135, %v2136
        %v2138 = vrot.slane %v2120, 1
        %v2139 = vsel %vm1365, %v2136, %v2138
        %v2140 = vrot.slane %v2121, 1
        %v2141 = vsel %vm1365, %v2138, %v2140
        %v2142 = vrot.slane %v2122, 1
        %v2143 = vsel %vm1365, %v2140, %v2142
        %v2144 = vrot.slane %v2123, 1
        %v2145 = vsel %vm1365, %v2142, %v2144
        %v2146 = vrot.slane %v2124, 1
        %v2147 = vsel %vm1365, %v2144, %v2146
        %v2148 = vrot.slane %v2125, 1
        %v2149 = vsel %vm1365, %v2146, %v2148
        %v2150 = vrot.slane %v2126, 1
        %v2151 = vsel %vm1365, %v2148, %v2150
        %v2152 = vrot.slane %v2127, 1
        %v2153 = vsel %vm1365, %v2150, %v2152
        %v2154 = vrot.slane %v2128, 1
        %v2155 = vsel %vm1365, %v2152, %v2154
        %v2156 = vrot.slane %v2129, 1
        %v2157 = vsel %vm1365, %v2154, %v2156
        %v2158 = vrot.slane %v2130, 1
        %v2159 = vsel %vm1365, %v2156, %v2158
        %v2160 = vrot.slane %v2131, 1
        %v2161 = vsel %vm1365, %v2158, %v2160
        %v2162 = vrot.slane %v2132, 1
        %v2163 = vsel %vm1365, %v2160, %v2162
        %v2164 = vrot.slane %v2133, 1
        %v2165 = vsel %vm1365, %v2162, %v2164
        %v2166 = vrot.slane %v2134, 1
        %v2167 = vsel %vm1365, %v2164, %v2166
        %2168 = vrot.lane.b32.xlu0 %v2137, 20
        %v2169 = vpop.permute.xlu0 %2168
        %2170 = vrot.lane.b32.xlu0 %v2139, 20
        %v2171 = vpop.permute.xlu0 %2170
        %2172 = vrot.lane.b32.xlu0 %v2141, 20
        %v2173 = vpop.permute.xlu0 %2172
        %2174 = vrot.lane.b32.xlu0 %v2143, 20
        %v2175 = vpop.permute.xlu0 %2174
        %2176 = vrot.lane.b32.xlu0 %v2145, 20
        %v2177 = vpop.permute.xlu0 %2176
        %2178 = vrot.lane.b32.xlu0 %v2147, 20
        %v2179 = vpop.permute.xlu0 %2178
        %2180 = vrot.lane.b32.xlu0 %v2149, 20
        %v2181 = vpop.permute.xlu0 %2180
        %2182 = vrot.lane.b32.xlu0 %v2151, 20
        %v2183 = vpop.permute.xlu0 %2182
        %2184 = vrot.lane.b32.xlu0 %v2153, 20
        %v2185 = vpop.permute.xlu0 %2184
        %2186 = vrot.lane.b32.xlu0 %v2155, 20
        %v2187 = vpop.permute.xlu0 %2186
        %2188 = vrot.lane.b32.xlu0 %v2157, 20
        %v2189 = vpop.permute.xlu0 %2188
        %2190 = vrot.lane.b32.xlu0 %v2159, 20
        %v2191 = vpop.permute.xlu0 %2190
        %2192 = vrot.lane.b32.xlu0 %v2161, 20
        %v2193 = vpop.permute.xlu0 %2192
        %2194 = vrot.lane.b32.xlu0 %v2163, 20
        %v2195 = vpop.permute.xlu0 %2194
        %2196 = vrot.lane.b32.xlu0 %v2165, 20
        %v2197 = vpop.permute.xlu0 %2196
        %2198 = vrot.lane.b32.xlu0 %v2167, 20
        %v2199 = vpop.permute.xlu0 %2198
        %vm2216 = vcmask 195744
        %2217 = vst.msk [vmem:[#allocation2] sm:$0xff] %vm2216, %v2169
        %2218 = vst.msk [vmem:[#allocation2 + $0x8] sm:$0xff] %vm2216, %v2171
        %2219 = vst.msk [vmem:[#allocation2 + $0x10] sm:$0xff] %vm2216, %v2173
        %2220 = vst.msk [vmem:[#allocation2 + $0x18] sm:$0xff] %vm2216, %v2175
        %2221 = vst.msk [vmem:[#allocation2 + $0x20] sm:$0xff] %vm2216, %v2177
        %2222 = vst.msk [vmem:[#allocation2 + $0x28] sm:$0xff] %vm2216, %v2179
        %2223 = vst.msk [vmem:[#allocation2 + $0x30] sm:$0xff] %vm2216, %v2181
        %2224 = vst.msk [vmem:[#allocation2 + $0x38] sm:$0xff] %vm2216, %v2183
        %2225 = vst.msk [vmem:[#allocation2 + $0x40] sm:$0xff] %vm2216, %v2185
        %2226 = vst.msk [vmem:[#allocation2 + $0x48] sm:$0xff] %vm2216, %v2187
        %2227 = vst.msk [vmem:[#allocation2 + $0x50] sm:$0xff] %vm2216, %v2189
        %2228 = vst.msk [vmem:[#allocation2 + $0x58] sm:$0xff] %vm2216, %v2191
        %2229 = vst.msk [vmem:[#allocation2 + $0x60] sm:$0xff] %vm2216, %v2193
        %2230 = vst.msk [vmem:[#allocation2 + $0x68] sm:$0xff] %vm2216, %v2195
        %2231 = vst.msk [vmem:[#allocation2 + $0x70] sm:$0xff] %vm2216, %v2197
        %2232 = vst.msk [vmem:[#allocation2 + $0x78] sm:$0xff] %vm2216, %v2199
        %v2233 = vld [vmem:[%s232 + $0x10] sm:$0xf]
        %v2234 = vld [vmem:[%s232 + $0x14] sm:$0xf]
        %v2235 = vld [vmem:[%s232 + $0x18] sm:$0xf]
        %v2236 = vld [vmem:[%s232 + $0x1c] sm:$0xf]
        %v2237 = vld [vmem:[%s232 + $0x20] sm:$0xf]
        %v2238 = vld [vmem:[%s232 + $0x24] sm:$0xf]
        %v2239 = vld [vmem:[%s232 + $0x28] sm:$0xf]
        %v2240 = vld [vmem:[%s232 + $0x2c] sm:$0xf]
        %v2241 = vld [vmem:[%s232 + $0x30] sm:$0xf]
        %v2242 = vld [vmem:[%s232 + $0x34] sm:$0xf]
        %v2243 = vld [vmem:[%s232 + $0x38] sm:$0xf]
        %v2244 = vld [vmem:[%s232 + $0x3c] sm:$0xf]
        %v2245 = vld [vmem:[%s232 + $0x40] sm:$0xf]
        %v2246 = vld [vmem:[%s232 + $0x44] sm:$0xf]
        %v2247 = vld [vmem:[%s232 + $0x48] sm:$0xf]
        %v2248 = vld [vmem:[%s232 + $0x4c] sm:$0xf]
        %v2249 = vld [vmem:[%s232 + $0x50] sm:$0xf]
        %v2250 = vld [vmem:[%s232 + $0x54] sm:$0xf]
        %v2251 = vld [vmem:[%s232 + $0x58] sm:$0xf]
        %v2252 = vld [vmem:[%s232 + $0x5c] sm:$0xf]
        %v2253 = vld [vmem:[%s232 + $0x60] sm:$0xf]
        %v2254 = vld [vmem:[%s232 + $0x64] sm:$0xf]
        %v2255 = vld [vmem:[%s232 + $0x68] sm:$0xf]
        %v2256 = vld [vmem:[%s232 + $0x6c] sm:$0xf]
        %v2257 = vld [vmem:[%s232 + $0x70] sm:$0xf]
        %v2258 = vld [vmem:[%s232 + $0x74] sm:$0xf]
        %v2259 = vld [vmem:[%s232 + $0x78] sm:$0xf]
        %v2260 = vld [vmem:[%s232 + $0x7c] sm:$0xf]
        %v2261 = vld [vmem:[%s232 + $0x80] sm:$0xf]
        %v2262 = vld [vmem:[%s232 + $0x84] sm:$0xf]
        %v2263 = vld [vmem:[%s232 + $0x88] sm:$0xf]
        %v2264 = vld [vmem:[%s232 + $0x8c] sm:$0xf]
        %v2265 = vsel %vm466, %v2233, 0
        %v2266 = vsel %vm467, %v2234, 0
        %v2267 = vsel %vm468, %v2235, 0
        %v2268 = vsel %vm469, %v2236, 0
        %v2269 = vsel %vm470, %v2237, 0
        %v2270 = vsel %vm471, %v2238, 0
        %v2271 = vsel %vm472, %v2239, 0
        %v2272 = vsel %vm473, %v2240, 0
        %v2273 = vsel %vm474, %v2241, 0
        %v2274 = vsel %vm475, %v2242, 0
        %v2275 = vsel %vm476, %v2243, 0
        %v2276 = vsel %vm477, %v2244, 0
        %v2277 = vsel %vm478, %v2245, 0
        %v2278 = vsel %vm479, %v2246, 0
        %v2279 = vsel %vm480, %v2247, 0
        %v2280 = vsel %vm481, %v2248, 0
        %v2281 = vsel %vm482, %v2249, 0
        %v2282 = vsel %vm483, %v2250, 0
        %v2283 = vsel %vm484, %v2251, 0
        %v2284 = vsel %vm485, %v2252, 0
        %v2285 = vsel %vm486, %v2253, 0
        %v2286 = vsel %vm487, %v2254, 0
        %v2287 = vsel %vm488, %v2255, 0
        %v2288 = vsel %vm489, %v2256, 0
        %v2289 = vsel %vm490, %v2257, 0
        %v2290 = vsel %vm491, %v2258, 0
        %v2291 = vsel %vm492, %v2259, 0
        %v2292 = vsel %vm493, %v2260, 0
        %v2293 = vsel %vm494, %v2261, 0
        %v2294 = vsel %vm495, %v2262, 0
        %v2295 = vsel %vm496, %v2263, 0
        %v2296 = vsel %vm497, %v2264, 0
        %v2329 = vunpack.c.l.b16 %v2265
        %v2330 = vunpack.c.l.b16 %v2266
        %v2331 = vunpack.c.l.b16 %v2267
        %v2332 = vunpack.c.l.b16 %v2268
        %v2333 = vunpack.c.l.b16 %v2269
        %v2334 = vunpack.c.l.b16 %v2270
        %v2335 = vunpack.c.l.b16 %v2271
        %v2336 = vunpack.c.l.b16 %v2272
        %v2337 = vunpack.c.l.b16 %v2273
        %v2338 = vunpack.c.l.b16 %v2274
        %v2339 = vunpack.c.l.b16 %v2275
        %v2340 = vunpack.c.l.b16 %v2276
        %v2341 = vunpack.c.l.b16 %v2277
        %v2342 = vunpack.c.l.b16 %v2278
        %v2343 = vunpack.c.l.b16 %v2279
        %v2344 = vunpack.c.l.b16 %v2280
        %v2345 = vunpack.c.l.b16 %v2281
        %v2346 = vunpack.c.l.b16 %v2282
        %v2347 = vunpack.c.l.b16 %v2283
        %v2348 = vunpack.c.l.b16 %v2284
        %v2349 = vunpack.c.l.b16 %v2285
        %v2350 = vunpack.c.l.b16 %v2286
        %v2351 = vunpack.c.l.b16 %v2287
        %v2352 = vunpack.c.l.b16 %v2288
        %v2353 = vunpack.c.l.b16 %v2289
        %v2354 = vunpack.c.l.b16 %v2290
        %v2355 = vunpack.c.l.b16 %v2291
        %v2356 = vunpack.c.l.b16 %v2292
        %v2357 = vunpack.c.l.b16 %v2293
        %v2358 = vunpack.c.l.b16 %v2294
        %v2359 = vunpack.c.l.b16 %v2295
        %v2360 = vunpack.c.l.b16 %v2296
        %v2361 = vpack.c.b16 %v2330, %v2329
        %v2362 = vpack.c.b16 %v2332, %v2331
        %v2363 = vpack.c.b16 %v2334, %v2333
        %v2364 = vpack.c.b16 %v2336, %v2335
        %v2365 = vpack.c.b16 %v2338, %v2337
        %v2366 = vpack.c.b16 %v2340, %v2339
        %v2367 = vpack.c.b16 %v2342, %v2341
        %v2368 = vpack.c.b16 %v2344, %v2343
        %v2369 = vpack.c.b16 %v2346, %v2345
        %v2370 = vpack.c.b16 %v2348, %v2347
        %v2371 = vpack.c.b16 %v2350, %v2349
        %v2372 = vpack.c.b16 %v2352, %v2351
        %v2373 = vpack.c.b16 %v2354, %v2353
        %v2374 = vpack.c.b16 %v2356, %v2355
        %v2375 = vpack.c.b16 %v2358, %v2357
        %v2376 = vpack.c.b16 %v2360, %v2359
        %2377 = vrot.lane.b32.xlu0 %v2361, 24
        %v2378 = vpop.permute.xlu0 %2377
        %2379 = vrot.lane.b32.xlu0 %v2362, 24
        %v2380 = vpop.permute.xlu0 %2379
        %2381 = vrot.lane.b32.xlu0 %v2363, 24
        %v2382 = vpop.permute.xlu0 %2381
        %2383 = vrot.lane.b32.xlu0 %v2364, 24
        %v2384 = vpop.permute.xlu0 %2383
        %2385 = vrot.lane.b32.xlu0 %v2365, 24
        %v2386 = vpop.permute.xlu0 %2385
        %2387 = vrot.lane.b32.xlu0 %v2366, 24
        %v2388 = vpop.permute.xlu0 %2387
        %2389 = vrot.lane.b32.xlu0 %v2367, 24
        %v2390 = vpop.permute.xlu0 %2389
        %2391 = vrot.lane.b32.xlu0 %v2368, 24
        %v2392 = vpop.permute.xlu0 %2391
        %2393 = vrot.lane.b32.xlu0 %v2369, 24
        %v2394 = vpop.permute.xlu0 %2393
        %2395 = vrot.lane.b32.xlu0 %v2370, 24
        %v2396 = vpop.permute.xlu0 %2395
        %2397 = vrot.lane.b32.xlu0 %v2371, 24
        %v2398 = vpop.permute.xlu0 %2397
        %2399 = vrot.lane.b32.xlu0 %v2372, 24
        %v2400 = vpop.permute.xlu0 %2399
        %2401 = vrot.lane.b32.xlu0 %v2373, 24
        %v2402 = vpop.permute.xlu0 %2401
        %2403 = vrot.lane.b32.xlu0 %v2374, 24
        %v2404 = vpop.permute.xlu0 %2403
        %2405 = vrot.lane.b32.xlu0 %v2375, 24
        %v2406 = vpop.permute.xlu0 %2405
        %2407 = vrot.lane.b32.xlu0 %v2376, 24
        %v2408 = vpop.permute.xlu0 %2407
        %vm2425 = vcmask 228544
        %2426 = vst.msk [vmem:[#allocation2] sm:$0xff] %vm2425, %v2378
        %2427 = vst.msk [vmem:[#allocation2 + $0x8] sm:$0xff] %vm2425, %v2380
        %2428 = vst.msk [vmem:[#allocation2 + $0x10] sm:$0xff] %vm2425, %v2382
        %2429 = vst.msk [vmem:[#allocation2 + $0x18] sm:$0xff] %vm2425, %v2384
        %2430 = vst.msk [vmem:[#allocation2 + $0x20] sm:$0xff] %vm2425, %v2386
        %2431 = vst.msk [vmem:[#allocation2 + $0x28] sm:$0xff] %vm2425, %v2388
        %2432 = vst.msk [vmem:[#allocation2 + $0x30] sm:$0xff] %vm2425, %v2390
        %2433 = vst.msk [vmem:[#allocation2 + $0x38] sm:$0xff] %vm2425, %v2392
        %2434 = vst.msk [vmem:[#allocation2 + $0x40] sm:$0xff] %vm2425, %v2394
        %2435 = vst.msk [vmem:[#allocation2 + $0x48] sm:$0xff] %vm2425, %v2396
        %2436 = vst.msk [vmem:[#allocation2 + $0x50] sm:$0xff] %vm2425, %v2398
        %2437 = vst.msk [vmem:[#allocation2 + $0x58] sm:$0xff] %vm2425, %v2400
        %2438 = vst.msk [vmem:[#allocation2 + $0x60] sm:$0xff] %vm2425, %v2402
        %2439 = vst.msk [vmem:[#allocation2 + $0x68] sm:$0xff] %vm2425, %v2404
        %2440 = vst.msk [vmem:[#allocation2 + $0x70] sm:$0xff] %vm2425, %v2406
        %2441 = vst.msk [vmem:[#allocation2 + $0x78] sm:$0xff] %vm2425, %v2408
        %v2442 = vld [vmem:[%s232 + $0x10] sm:$0xf]
        %v2443 = vld [vmem:[%s232 + $0x14] sm:$0xf]
        %v2444 = vld [vmem:[%s232 + $0x18] sm:$0xf]
        %v2445 = vld [vmem:[%s232 + $0x1c] sm:$0xf]
        %v2446 = vld [vmem:[%s232 + $0x20] sm:$0xf]
        %v2447 = vld [vmem:[%s232 + $0x24] sm:$0xf]
        %v2448 = vld [vmem:[%s232 + $0x28] sm:$0xf]
        %v2449 = vld [vmem:[%s232 + $0x2c] sm:$0xf]
        %v2450 = vld [vmem:[%s232 + $0x30] sm:$0xf]
        %v2451 = vld [vmem:[%s232 + $0x34] sm:$0xf]
        %v2452 = vld [vmem:[%s232 + $0x38] sm:$0xf]
        %v2453 = vld [vmem:[%s232 + $0x3c] sm:$0xf]
        %v2454 = vld [vmem:[%s232 + $0x40] sm:$0xf]
        %v2455 = vld [vmem:[%s232 + $0x44] sm:$0xf]
        %v2456 = vld [vmem:[%s232 + $0x48] sm:$0xf]
        %v2457 = vld [vmem:[%s232 + $0x4c] sm:$0xf]
        %v2458 = vld [vmem:[%s232 + $0x50] sm:$0xf]
        %v2459 = vld [vmem:[%s232 + $0x54] sm:$0xf]
        %v2460 = vld [vmem:[%s232 + $0x58] sm:$0xf]
        %v2461 = vld [vmem:[%s232 + $0x5c] sm:$0xf]
        %v2462 = vld [vmem:[%s232 + $0x60] sm:$0xf]
        %v2463 = vld [vmem:[%s232 + $0x64] sm:$0xf]
        %v2464 = vld [vmem:[%s232 + $0x68] sm:$0xf]
        %v2465 = vld [vmem:[%s232 + $0x6c] sm:$0xf]
        %v2466 = vld [vmem:[%s232 + $0x70] sm:$0xf]
        %v2467 = vld [vmem:[%s232 + $0x74] sm:$0xf]
        %v2468 = vld [vmem:[%s232 + $0x78] sm:$0xf]
        %v2469 = vld [vmem:[%s232 + $0x7c] sm:$0xf]
        %v2470 = vld [vmem:[%s232 + $0x80] sm:$0xf]
        %v2471 = vld [vmem:[%s232 + $0x84] sm:$0xf]
        %v2472 = vld [vmem:[%s232 + $0x88] sm:$0xf]
        %v2473 = vld [vmem:[%s232 + $0x8c] sm:$0xf]
        %v2474 = vld [vmem:[%s232 + $0x90] sm:$0x1]
        %v2508 = vunpack.c.l.b16 %v2442
        %v2509 = vunpack.c.l.b16 %v2443
        %v2510 = vunpack.c.l.b16 %v2444
        %v2511 = vunpack.c.l.b16 %v2445
        %v2512 = vunpack.c.l.b16 %v2446
        %v2513 = vunpack.c.l.b16 %v2447
        %v2514 = vunpack.c.l.b16 %v2448
        %v2515 = vunpack.c.l.b16 %v2449
        %v2516 = vunpack.c.l.b16 %v2450
        %v2517 = vunpack.c.l.b16 %v2451
        %v2518 = vunpack.c.l.b16 %v2452
        %v2519 = vunpack.c.l.b16 %v2453
        %v2520 = vunpack.c.l.b16 %v2454
        %v2521 = vunpack.c.l.b16 %v2455
        %v2522 = vunpack.c.l.b16 %v2456
        %v2523 = vunpack.c.l.b16 %v2457
        %v2524 = vunpack.c.l.b16 %v2458
        %v2525 = vunpack.c.l.b16 %v2459
        %v2526 = vunpack.c.l.b16 %v2460
        %v2527 = vunpack.c.l.b16 %v2461
        %v2528 = vunpack.c.l.b16 %v2462
        %v2529 = vunpack.c.l.b16 %v2463
        %v2530 = vunpack.c.l.b16 %v2464
        %v2531 = vunpack.c.l.b16 %v2465
        %v2532 = vunpack.c.l.b16 %v2466
        %v2533 = vunpack.c.l.b16 %v2467
        %v2534 = vunpack.c.l.b16 %v2468
        %v2535 = vunpack.c.l.b16 %v2469
        %v2536 = vunpack.c.l.b16 %v2470
        %v2537 = vunpack.c.l.b16 %v2471
        %v2538 = vunpack.c.l.b16 %v2472
        %v2539 = vunpack.c.l.b16 %v2473
        %v2540 = vunpack.c.l.b16 %v2474
        %v2541 = vpack.c.b16 %v2509, %v2508
        %v2542 = vpack.c.b16 %v2511, %v2510
        %v2543 = vpack.c.b16 %v2513, %v2512
        %v2544 = vpack.c.b16 %v2515, %v2514
        %v2545 = vpack.c.b16 %v2517, %v2516
        %v2546 = vpack.c.b16 %v2519, %v2518
        %v2547 = vpack.c.b16 %v2521, %v2520
        %v2548 = vpack.c.b16 %v2523, %v2522
        %v2549 = vpack.c.b16 %v2525, %v2524
        %v2550 = vpack.c.b16 %v2527, %v2526
        %v2551 = vpack.c.b16 %v2529, %v2528
        %v2552 = vpack.c.b16 %v2531, %v2530
        %v2553 = vpack.c.b16 %v2533, %v2532
        %v2554 = vpack.c.b16 %v2535, %v2534
        %v2555 = vpack.c.b16 %v2537, %v2536
        %v2556 = vpack.c.b16 %v2539, %v2538
        %v2557 = vpack.c.b16 %v2540, %v2540
        %v2559 = vshrl.u32 %v2541, 16
        %v2561 = vshll.u32 %v2541, 16
        %v2563 = vrot.slane %v2561, 1
        %v2564 = vor.u32 %v2559, %v2563
        %v2566 = vshll.u32 %v2542, 16
        %v2568 = vrot.slane %v2566, 1
        %v2569 = vsel %vm759, %v2564, %v2568
        %v2570 = vshrl.u32 %v2542, 16
        %v2572 = vor.u32 %v2570, %v2568
        %v2574 = vshll.u32 %v2543, 16
        %v2576 = vrot.slane %v2574, 1
        %v2577 = vsel %vm759, %v2572, %v2576
        %v2578 = vshrl.u32 %v2543, 16
        %v2580 = vor.u32 %v2578, %v2576
        %v2582 = vshll.u32 %v2544, 16
        %v2584 = vrot.slane %v2582, 1
        %v2585 = vsel %vm759, %v2580, %v2584
        %v2586 = vshrl.u32 %v2544, 16
        %v2588 = vor.u32 %v2586, %v2584
        %v2590 = vshll.u32 %v2545, 16
        %v2592 = vrot.slane %v2590, 1
        %v2593 = vsel %vm759, %v2588, %v2592
        %v2594 = vshrl.u32 %v2545, 16
        %v2596 = vor.u32 %v2594, %v2592
        %v2598 = vshll.u32 %v2546, 16
        %v2600 = vrot.slane %v2598, 1
        %v2601 = vsel %vm759, %v2596, %v2600
        %v2602 = vshrl.u32 %v2546, 16
        %v2604 = vor.u32 %v2602, %v2600
        %v2606 = vshll.u32 %v2547, 16
        %v2608 = vrot.slane %v2606, 1
        %v2609 = vsel %vm759, %v2604, %v2608
        %v2610 = vshrl.u32 %v2547, 16
        %v2612 = vor.u32 %v2610, %v2608
        %v2614 = vshll.u32 %v2548, 16
        %v2616 = vrot.slane %v2614, 1
        %v2617 = vsel %vm759, %v2612, %v2616
        %v2618 = vshrl.u32 %v2548, 16
        %v2620 = vor.u32 %v2618, %v2616
        %v2622 = vshll.u32 %v2549, 16
        %v2624 = vrot.slane %v2622, 1
        %v2625 = vsel %vm759, %v2620, %v2624
        %v2626 = vshrl.u32 %v2549, 16
        %v2628 = vor.u32 %v2626, %v2624
        %v2630 = vshll.u32 %v2550, 16
        %v2632 = vrot.slane %v2630, 1
        %v2633 = vsel %vm759, %v2628, %v2632
        %v2634 = vshrl.u32 %v2550, 16
        %v2636 = vor.u32 %v2634, %v2632
        %v2638 = vshll.u32 %v2551, 16
        %v2640 = vrot.slane %v2638, 1
        %v2641 = vsel %vm759, %v2636, %v2640
        %v2642 = vshrl.u32 %v2551, 16
        %v2644 = vor.u32 %v2642, %v2640
        %v2646 = vshll.u32 %v2552, 16
        %v2648 = vrot.slane %v2646, 1
        %v2649 = vsel %vm759, %v2644, %v2648
        %v2650 = vshrl.u32 %v2552, 16
        %v2652 = vor.u32 %v2650, %v2648
        %v2654 = vshll.u32 %v2553, 16
        %v2656 = vrot.slane %v2654, 1
        %v2657 = vsel %vm759, %v2652, %v2656
        %v2658 = vshrl.u32 %v2553, 16
        %v2660 = vor.u32 %v2658, %v2656
        %v2662 = vshll.u32 %v2554, 16
        %v2664 = vrot.slane %v2662, 1
        %v2665 = vsel %vm759, %v2660, %v2664
        %v2666 = vshrl.u32 %v2554, 16
        %v2668 = vor.u32 %v2666, %v2664
        %v2670 = vshll.u32 %v2555, 16
        %v2672 = vrot.slane %v2670, 1
        %v2673 = vsel %vm759, %v2668, %v2672
        %v2674 = vshrl.u32 %v2555, 16
        %v2676 = vor.u32 %v2674, %v2672
        %v2678 = vshll.u32 %v2556, 16
        %v2680 = vrot.slane %v2678, 1
        %v2681 = vsel %vm759, %v2676, %v2680
        %v2682 = vshrl.u32 %v2556, 16
        %v2684 = vor.u32 %v2682, %v2680
        %v2686 = vshll.u32 %v2557, 16
        %v2688 = vrot.slane %v2686, 1
        %v2689 = vsel %vm759, %v2684, %v2688
        %2690 = vrot.lane.b32.xlu0 %v2569, 28
        %v2691 = vpop.permute.xlu0 %2690
        %2692 = vrot.lane.b32.xlu0 %v2577, 28
        %v2693 = vpop.permute.xlu0 %2692
        %2694 = vrot.lane.b32.xlu0 %v2585, 28
        %v2695 = vpop.permute.xlu0 %2694
        %2696 = vrot.lane.b32.xlu0 %v2593, 28
        %v2697 = vpop.permute.xlu0 %2696
        %2698 = vrot.lane.b32.xlu0 %v2601, 28
        %v2699 = vpop.permute.xlu0 %2698
        %2700 = vrot.lane.b32.xlu0 %v2609, 28
        %v2701 = vpop.permute.xlu0 %2700
        %2702 = vrot.lane.b32.xlu0 %v2617, 28
        %v2703 = vpop.permute.xlu0 %2702
        %2704 = vrot.lane.b32.xlu0 %v2625, 28
        %v2705 = vpop.permute.xlu0 %2704
        %2706 = vrot.lane.b32.xlu0 %v2633, 28
        %v2707 = vpop.permute.xlu0 %2706
        %2708 = vrot.lane.b32.xlu0 %v2641, 28
        %v2709 = vpop.permute.xlu0 %2708
        %2710 = vrot.lane.b32.xlu0 %v2649, 28
        %v2711 = vpop.permute.xlu0 %2710
        %2712 = vrot.lane.b32.xlu0 %v2657, 28
        %v2713 = vpop.permute.xlu0 %2712
        %2714 = vrot.lane.b32.xlu0 %v2665, 28
        %v2715 = vpop.permute.xlu0 %2714
        %2716 = vrot.lane.b32.xlu0 %v2673, 28
        %v2717 = vpop.permute.xlu0 %2716
        %2718 = vrot.lane.b32.xlu0 %v2681, 28
        %v2719 = vpop.permute.xlu0 %2718
        %2720 = vrot.lane.b32.xlu0 %v2689, 28
        %v2721 = vpop.permute.xlu0 %2720
        %vm2738 = vcmask 261344
        %2739 = vst.msk [vmem:[#allocation2] sm:$0xff] %vm2738, %v2691
        %2740 = vst.msk [vmem:[#allocation2 + $0x8] sm:$0xff] %vm2738, %v2693
        %2741 = vst.msk [vmem:[#allocation2 + $0x10] sm:$0xff] %vm2738, %v2695
        %2742 = vst.msk [vmem:[#allocation2 + $0x18] sm:$0xff] %vm2738, %v2697
        %2743 = vst.msk [vmem:[#allocation2 + $0x20] sm:$0xff] %vm2738, %v2699
        %2744 = vst.msk [vmem:[#allocation2 + $0x28] sm:$0xff] %vm2738, %v2701
        %2745 = vst.msk [vmem:[#allocation2 + $0x30] sm:$0xff] %vm2738, %v2703
        %2746 = vst.msk [vmem:[#allocation2 + $0x38] sm:$0xff] %vm2738, %v2705
        %2747 = vst.msk [vmem:[#allocation2 + $0x40] sm:$0xff] %vm2738, %v2707
        %2748 = vst.msk [vmem:[#allocation2 + $0x48] sm:$0xff] %vm2738, %v2709
        %2749 = vst.msk [vmem:[#allocation2 + $0x50] sm:$0xff] %vm2738, %v2711
        %2750 = vst.msk [vmem:[#allocation2 + $0x58] sm:$0xff] %vm2738, %v2713
        %2751 = vst.msk [vmem:[#allocation2 + $0x60] sm:$0xff] %vm2738, %v2715
        %2752 = vst.msk [vmem:[#allocation2 + $0x68] sm:$0xff] %vm2738, %v2717
        %2753 = vst.msk [vmem:[#allocation2 + $0x70] sm:$0xff] %vm2738, %v2719
        %2754 = vst.msk [vmem:[#allocation2 + $0x78] sm:$0xff] %vm2738, %v2721
        %v2755 = vld [vmem:[%s232 + $0x10] sm:$0xe]
        %v2756 = vld [vmem:[%s232 + $0x14] sm:$0xf]
        %v2757 = vld [vmem:[%s232 + $0x18] sm:$0xf]
        %v2758 = vld [vmem:[%s232 + $0x1c] sm:$0xf]
        %v2759 = vld [vmem:[%s232 + $0x20] sm:$0xf]
        %v2760 = vld [vmem:[%s232 + $0x24] sm:$0xf]
        %v2761 = vld [vmem:[%s232 + $0x28] sm:$0xf]
        %v2762 = vld [vmem:[%s232 + $0x2c] sm:$0xf]
        %v2763 = vld [vmem:[%s232 + $0x30] sm:$0xf]
        %v2764 = vld [vmem:[%s232 + $0x34] sm:$0xf]
        %v2765 = vld [vmem:[%s232 + $0x38] sm:$0xf]
        %v2766 = vld [vmem:[%s232 + $0x3c] sm:$0xf]
        %v2767 = vld [vmem:[%s232 + $0x40] sm:$0xf]
        %v2768 = vld [vmem:[%s232 + $0x44] sm:$0xf]
        %v2769 = vld [vmem:[%s232 + $0x48] sm:$0xf]
        %v2770 = vld [vmem:[%s232 + $0x4c] sm:$0xf]
        %v2771 = vld [vmem:[%s232 + $0x50] sm:$0xf]
        %v2772 = vld [vmem:[%s232 + $0x54] sm:$0xf]
        %v2773 = vld [vmem:[%s232 + $0x58] sm:$0xf]
        %v2774 = vld [vmem:[%s232 + $0x5c] sm:$0xf]
        %v2775 = vld [vmem:[%s232 + $0x60] sm:$0xf]
        %v2776 = vld [vmem:[%s232 + $0x64] sm:$0xf]
        %v2777 = vld [vmem:[%s232 + $0x68] sm:$0xf]
        %v2778 = vld [vmem:[%s232 + $0x6c] sm:$0xf]
        %v2779 = vld [vmem:[%s232 + $0x70] sm:$0xf]
        %v2780 = vld [vmem:[%s232 + $0x74] sm:$0xf]
        %v2781 = vld [vmem:[%s232 + $0x78] sm:$0xf]
        %v2782 = vld [vmem:[%s232 + $0x7c] sm:$0xf]
        %v2783 = vld [vmem:[%s232 + $0x80] sm:$0xf]
        %v2784 = vld [vmem:[%s232 + $0x84] sm:$0xf]
        %v2785 = vld [vmem:[%s232 + $0x88] sm:$0xf]
        %v2786 = vld [vmem:[%s232 + $0x8c] sm:$0xf]
        %v2787 = vld [vmem:[%s232 + $0x90] sm:$0x1]
        %v2788 = vsel %vm1216, %v2755, 0
        %v2789 = vsel %vm1217, %v2756, 0
        %v2790 = vsel %vm1218, %v2757, 0
        %v2791 = vsel %vm1219, %v2758, 0
        %v2792 = vsel %vm1220, %v2759, 0
        %v2793 = vsel %vm1221, %v2760, 0
        %v2794 = vsel %vm1222, %v2761, 0
        %v2795 = vsel %vm1223, %v2762, 0
        %v2796 = vsel %vm1224, %v2763, 0
        %v2797 = vsel %vm1225, %v2764, 0
        %v2798 = vsel %vm1226, %v2765, 0
        %v2799 = vsel %vm1227, %v2766, 0
        %v2800 = vsel %vm1228, %v2767, 0
        %v2801 = vsel %vm1229, %v2768, 0
        %v2802 = vsel %vm1230, %v2769, 0
        %v2803 = vsel %vm1231, %v2770, 0
        %v2804 = vsel %vm1232, %v2771, 0
        %v2805 = vsel %vm1233, %v2772, 0
        %v2806 = vsel %vm1234, %v2773, 0
        %v2807 = vsel %vm1235, %v2774, 0
        %v2808 = vsel %vm1236, %v2775, 0
        %v2809 = vsel %vm1237, %v2776, 0
        %v2810 = vsel %vm1238, %v2777, 0
        %v2811 = vsel %vm1239, %v2778, 0
        %v2812 = vsel %vm1240, %v2779, 0
        %v2813 = vsel %vm1241, %v2780, 0
        %v2814 = vsel %vm1242, %v2781, 0
        %v2815 = vsel %vm1243, %v2782, 0
        %v2816 = vsel %vm1244, %v2783, 0
        %v2817 = vsel %vm1245, %v2784, 0
        %v2818 = vsel %vm1246, %v2785, 0
        %v2819 = vsel %vm1247, %v2786, 0
        %v2820 = vsel %vm1248, %v2787, 0
        %v2854 = vunpack.c.l.b16 %v2788
        %v2855 = vunpack.c.l.b16 %v2789
        %v2856 = vunpack.c.l.b16 %v2790
        %v2857 = vunpack.c.l.b16 %v2791
        %v2858 = vunpack.c.l.b16 %v2792
        %v2859 = vunpack.c.l.b16 %v2793
        %v2860 = vunpack.c.l.b16 %v2794
        %v2861 = vunpack.c.l.b16 %v2795
        %v2862 = vunpack.c.l.b16 %v2796
        %v2863 = vunpack.c.l.b16 %v2797
        %v2864 = vunpack.c.l.b16 %v2798
        %v2865 = vunpack.c.l.b16 %v2799
        %v2866 = vunpack.c.l.b16 %v2800
        %v2867 = vunpack.c.l.b16 %v2801
        %v2868 = vunpack.c.l.b16 %v2802
        %v2869 = vunpack.c.l.b16 %v2803
        %v2870 = vunpack.c.l.b16 %v2804
        %v2871 = vunpack.c.l.b16 %v2805
        %v2872 = vunpack.c.l.b16 %v2806
        %v2873 = vunpack.c.l.b16 %v2807
        %v2874 = vunpack.c.l.b16 %v2808
        %v2875 = vunpack.c.l.b16 %v2809
        %v2876 = vunpack.c.l.b16 %v2810
        %v2877 = vunpack.c.l.b16 %v2811
        %v2878 = vunpack.c.l.b16 %v2812
        %v2879 = vunpack.c.l.b16 %v2813
        %v2880 = vunpack.c.l.b16 %v2814
        %v2881 = vunpack.c.l.b16 %v2815
        %v2882 = vunpack.c.l.b16 %v2816
        %v2883 = vunpack.c.l.b16 %v2817
        %v2884 = vunpack.c.l.b16 %v2818
        %v2885 = vunpack.c.l.b16 %v2819
        %v2886 = vunpack.c.l.b16 %v2820
        %v2887 = vpack.c.b16 %v2855, %v2854
        %v2888 = vpack.c.b16 %v2857, %v2856
        %v2889 = vpack.c.b16 %v2859, %v2858
        %v2890 = vpack.c.b16 %v2861, %v2860
        %v2891 = vpack.c.b16 %v2863, %v2862
        %v2892 = vpack.c.b16 %v2865, %v2864
        %v2893 = vpack.c.b16 %v2867, %v2866
        %v2894 = vpack.c.b16 %v2869, %v2868
        %v2895 = vpack.c.b16 %v2871, %v2870
        %v2896 = vpack.c.b16 %v2873, %v2872
        %v2897 = vpack.c.b16 %v2875, %v2874
        %v2898 = vpack.c.b16 %v2877, %v2876
        %v2899 = vpack.c.b16 %v2879, %v2878
        %v2900 = vpack.c.b16 %v2881, %v2880
        %v2901 = vpack.c.b16 %v2883, %v2882
        %v2902 = vpack.c.b16 %v2885, %v2884
        %v2903 = vpack.c.b16 %v2886, %v2886
        %v2904 = vrot.slane %v2887, 1
        %v2905 = vrot.slane %v2888, 1
        %v2906 = vsel %vm1365, %v2904, %v2905
        %v2907 = vrot.slane %v2889, 1
        %v2908 = vsel %vm1365, %v2905, %v2907
        %v2909 = vrot.slane %v2890, 1
        %v2910 = vsel %vm1365, %v2907, %v2909
        %v2911 = vrot.slane %v2891, 1
        %v2912 = vsel %vm1365, %v2909, %v2911
        %v2913 = vrot.slane %v2892, 1
        %v2914 = vsel %vm1365, %v2911, %v2913
        %v2915 = vrot.slane %v2893, 1
        %v2916 = vsel %vm1365, %v2913, %v2915
        %v2917 = vrot.slane %v2894, 1
        %v2918 = vsel %vm1365, %v2915, %v2917
        %v2919 = vrot.slane %v2895, 1
        %v2920 = vsel %vm1365, %v2917, %v2919
        %v2921 = vrot.slane %v2896, 1
        %v2922 = vsel %vm1365, %v2919, %v2921
        %v2923 = vrot.slane %v2897, 1
        %v2924 = vsel %vm1365, %v2921, %v2923
        %v2925 = vrot.slane %v2898, 1
        %v2926 = vsel %vm1365, %v2923, %v2925
        %v2927 = vrot.slane %v2899, 1
        %v2928 = vsel %vm1365, %v2925, %v2927
        %v2929 = vrot.slane %v2900, 1
        %v2930 = vsel %vm1365, %v2927, %v2929
        %v2931 = vrot.slane %v2901, 1
        %v2932 = vsel %vm1365, %v2929, %v2931
        %v2933 = vrot.slane %v2902, 1
        %v2934 = vsel %vm1365, %v2931, %v2933
        %v2935 = vrot.slane %v2903, 1
        %v2936 = vsel %vm1365, %v2933, %v2935
        %2937 = vrot.lane.b32.xlu0 %v2906, 32
        %v2938 = vpop.permute.xlu0 %2937
        %2939 = vrot.lane.b32.xlu0 %v2908, 32
        %v2940 = vpop.permute.xlu0 %2939
        %2941 = vrot.lane.b32.xlu0 %v2910, 32
        %v2942 = vpop.permute.xlu0 %2941
        %2943 = vrot.lane.b32.xlu0 %v2912, 32
        %v2944 = vpop.permute.xlu0 %2943
        %2945 = vrot.lane.b32.xlu0 %v2914, 32
        %v2946 = vpop.permute.xlu0 %2945
        %2947 = vrot.lane.b32.xlu0 %v2916, 32
        %v2948 = vpop.permute.xlu0 %2947
        %2949 = vrot.lane.b32.xlu0 %v2918, 32
        %v2950 = vpop.permute.xlu0 %2949
        %2951 = vrot.lane.b32.xlu0 %v2920, 32
        %v2952 = vpop.permute.xlu0 %2951
        %2953 = vrot.lane.b32.xlu0 %v2922, 32
        %v2954 = vpop.permute.xlu0 %2953
        %2955 = vrot.lane.b32.xlu0 %v2924, 32
        %v2956 = vpop.permute.xlu0 %2955
        %2957 = vrot.lane.b32.xlu0 %v2926, 32
        %v2958 = vpop.permute.xlu0 %2957
        %2959 = vrot.lane.b32.xlu0 %v2928, 32
        %v2960 = vpop.permute.xlu0 %2959
        %2961 = vrot.lane.b32.xlu0 %v2930, 32
        %v2962 = vpop.permute.xlu0 %2961
        %2963 = vrot.lane.b32.xlu0 %v2932, 32
        %v2964 = vpop.permute.xlu0 %2963
        %2965 = vrot.lane.b32.xlu0 %v2934, 32
        %v2966 = vpop.permute.xlu0 %2965
        %2967 = vrot.lane.b32.xlu0 %v2936, 32
        %v2968 = vpop.permute.xlu0 %2967
        %vm2985 = vcmask 294144
        %2986 = vst.msk [vmem:[#allocation2] sm:$0xff] %vm2985, %v2938
        %2987 = vst.msk [vmem:[#allocation2 + $0x8] sm:$0xff] %vm2985, %v2940
        %2988 = vst.msk [vmem:[#allocation2 + $0x10] sm:$0xff] %vm2985, %v2942
        %2989 = vst.msk [vmem:[#allocation2 + $0x18] sm:$0xff] %vm2985, %v2944
        %2990 = vst.msk [vmem:[#allocation2 + $0x20] sm:$0xff] %vm2985, %v2946
        %2991 = vst.msk [vmem:[#allocation2 + $0x28] sm:$0xff] %vm2985, %v2948
        %2992 = vst.msk [vmem:[#allocation2 + $0x30] sm:$0xff] %vm2985, %v2950
        %2993 = vst.msk [vmem:[#allocation2 + $0x38] sm:$0xff] %vm2985, %v2952
        %2994 = vst.msk [vmem:[#allocation2 + $0x40] sm:$0xff] %vm2985, %v2954
        %2995 = vst.msk [vmem:[#allocation2 + $0x48] sm:$0xff] %vm2985, %v2956
        %2996 = vst.msk [vmem:[#allocation2 + $0x50] sm:$0xff] %vm2985, %v2958
        %2997 = vst.msk [vmem:[#allocation2 + $0x58] sm:$0xff] %vm2985, %v2960
        %2998 = vst.msk [vmem:[#allocation2 + $0x60] sm:$0xff] %vm2985, %v2962
        %2999 = vst.msk [vmem:[#allocation2 + $0x68] sm:$0xff] %vm2985, %v2964
        %3000 = vst.msk [vmem:[#allocation2 + $0x70] sm:$0xff] %vm2985, %v2966
        %3001 = vst.msk [vmem:[#allocation2 + $0x78] sm:$0xff] %vm2985, %v2968
        %v3002 = vld [vmem:[#allocation2] sm:$0xff]
        %v3003 = vld [vmem:[#allocation2 + $0x8] sm:$0xff]
        %v3004 = vld [vmem:[#allocation2 + $0x10] sm:$0xff]
        %v3005 = vld [vmem:[#allocation2 + $0x18] sm:$0xff]
        %v3006 = vld [vmem:[#allocation2 + $0x20] sm:$0xff]
        %v3007 = vld [vmem:[#allocation2 + $0x28] sm:$0xff]
        %v3008 = vld [vmem:[#allocation2 + $0x30] sm:$0xff]
        %v3009 = vld [vmem:[#allocation2 + $0x38] sm:$0xff]
        %v3010 = vld [vmem:[#allocation2 + $0x40] sm:$0xff]
        %v3011 = vld [vmem:[#allocation2 + $0x48] sm:$0xff]
        %v3012 = vld [vmem:[#allocation2 + $0x50] sm:$0xff]
        %v3013 = vld [vmem:[#allocation2 + $0x58] sm:$0xff]
        %v3014 = vld [vmem:[#allocation2 + $0x60] sm:$0xff]
        %v3015 = vld [vmem:[#allocation2 + $0x68] sm:$0xff]
        %v3016 = vld [vmem:[#allocation2 + $0x70] sm:$0xff]
        %v3017 = vld [vmem:[#allocation2 + $0x78] sm:$0xff]
        %v3018 = vld [vmem:[%s1] sm:$0xf]
        %v3019 = vld [vmem:[%s1 + $0x4] sm:$0xf]
        %v3020 = vld [vmem:[%s1 + $0x8] sm:$0xf]
        %v3021 = vld [vmem:[%s1 + $0xc] sm:$0xf]
        %v3022 = vld [vmem:[%s1 + $0x10] sm:$0x3]
        %v3023 = vld [vmem:[#allocation3] sm:$0x1]
        %v3025 = vlaneseq
        %v3026 = vshrl.u32 %v3025, 7
        %v3027 = vsub.s32 0, %v3026
        %v3028 = vrot.slane %v3023, %v3027
        %v3035 = vunpack.c.l.b16 %v3018
        %v3036 = vunpack.c.l.b16 %v3019
        %v3037 = vunpack.c.l.b16 %v3020
        %v3038 = vunpack.c.l.b16 %v3021
        %v3039 = vunpack.c.l.b16 %v3022
        %v3040 = vpack.c.b16 %v3036, %v3035
        %v3041 = vpack.c.b16 %v3038, %v3037
        %v3042 = vpack.c.b16 %v3039, %v3039
        %vm3045 = vcmask 293888
        %v3047 = vsel %vm3045, %v3002, 0
        %v3050 = vsel %vm3045, %v3003, 0
        %v3053 = vsel %vm3045, %v3004, 0
        %v3056 = vsel %vm3045, %v3005, 0
        %v3059 = vsel %vm3045, %v3006, 0
        %v3062 = vsel %vm3045, %v3007, 0
        %v3065 = vsel %vm3045, %v3008, 0
        %v3068 = vsel %vm3045, %v3009, 0
        %v3071 = vsel %vm3045, %v3010, 0
        %v3074 = vsel %vm3045, %v3011, 0
        %v3077 = vsel %vm3045, %v3012, 0
        %v3080 = vsel %vm3045, %v3013, 0
        %v3083 = vsel %vm3045, %v3014, 0
        %v3086 = vsel %vm3045, %v3015, 0
        %v3089 = vsel %vm3045, %v3016, 0
        %v3092 = vsel %vm3045, %v3017, 0
        %vm3094 = vcmask 1041408
        %v3096 = vsel %vm3094, %v3042, 0
        %3098 = vmatprep.subr.bf16.mxu0 0
        %3099 = vmatpush1.bf16.msra.mxu0 %v3040
        %3100 = vmatprep.subr.bf16.mxu0 0
        %3101 = vmatpush1.bf16.msra.mxu0 %v3041
        %3102 = vmatprep.subr.bf16.mxu0 0
        %3103 = vmatpush1.bf16.msra.mxu0 %v3096
        %3104 = vmatprep.subr.bf16.mxu0 0
        %3105 = vmatpush1.bf16.msra.mxu0 0
        %3106 = vmatprep.subr.bf16.mxu0 0
        %3107 = vmatpush1.bf16.msra.mxu0 0
        %3108 = vmatprep.subr.bf16.mxu0 0
        %3109 = vmatpush1.bf16.msra.mxu0 0
        %3110 = vmatprep.subr.bf16.mxu0 0
        %3111 = vmatpush1.bf16.msra.mxu0 0
        %3112 = vmatprep.subr.bf16.mxu0 0
        %3113 = vmatpush1.bf16.msra.mxu0 0
        %3114 = vmatprep.subr.bf16.mxu0 0
        %3115 = vmatpush1.bf16.msra.mxu0 0
        %3116 = vmatprep.subr.bf16.mxu0 0
        %3117 = vmatpush1.bf16.msra.mxu0 0
        %3118 = vmatprep.subr.bf16.mxu0 0
        %3119 = vmatpush1.bf16.msra.mxu0 0
        %3120 = vmatprep.subr.bf16.mxu0 0
        %3121 = vmatpush1.bf16.msra.mxu0 0
        %3122 = vmatprep.subr.bf16.mxu0 0
        %3123 = vmatpush1.bf16.msra.mxu0 0
        %3124 = vmatprep.subr.bf16.mxu0 0
        %3125 = vmatpush1.bf16.msra.mxu0 0
        %3126 = vmatprep.subr.bf16.mxu0 0
        %3127 = vmatpush1.bf16.msra.mxu0 0
        %3128 = vmatprep.subr.bf16.mxu0 0
        %3129 = vmatpush1.bf16.msra.mxu0 0
        %3130 = vmatprep.mubr.bf16.mxu0 0
        %3131 = vmatmul.mubr.bf16.gmra.mrb[0].mxu0 %v3047
        %v3132 = vpop.f32.mrb[0].mxu0
        %v3133 = vadd.f32 %v3028, %v3132
        %v3134 = vpop.f32.mrb[0].mxu0
        %v3135 = vpop.f32.mrb[0].mxu0
        %v3136 = vadd.f32 %v3028, %v3135
        %v3137 = vpop.f32.mrb[0].mxu0
        %3138 = vmatprep.mubr.bf16.mxu0 0
        %3139 = vmatmul.mubr.bf16.gmra.mrb[0].mxu0 %v3050
        %v3140 = vpop.f32.mrb[0].mxu0
        %v3141 = vadd.f32 %v3028, %v3140
        %v3142 = vpop.f32.mrb[0].mxu0
        %v3143 = vpop.f32.mrb[0].mxu0
        %v3144 = vadd.f32 %v3028, %v3143
        %v3145 = vpop.f32.mrb[0].mxu0
        %3146 = vmatprep.mubr.bf16.mxu0 0
        %3147 = vmatmul.mubr.bf16.gmra.mrb[0].mxu0 %v3053
        %v3148 = vpop.f32.mrb[0].mxu0
        %v3149 = vadd.f32 %v3028, %v3148
        %v3150 = vpop.f32.mrb[0].mxu0
        %v3151 = vpop.f32.mrb[0].mxu0
        %v3152 = vadd.f32 %v3028, %v3151
        %v3153 = vpop.f32.mrb[0].mxu0
        %3154 = vmatprep.mubr.bf16.mxu0 0
        %3155 = vmatmul.mubr.bf16.gmra.mrb[0].mxu0 %v3056
        %v3156 = vpop.f32.mrb[0].mxu0
        %v3157 = vadd.f32 %v3028, %v3156
        %v3158 = vpop.f32.mrb[0].mxu0
        %v3159 = vpop.f32.mrb[0].mxu0
        %v3160 = vadd.f32 %v3028, %v3159
        %v3161 = vpop.f32.mrb[0].mxu0
        %3162 = vmatprep.mubr.bf16.mxu0 0
        %3163 = vmatmul.mubr.bf16.gmra.mrb[0].mxu0 %v3059
        %v3164 = vpop.f32.mrb[0].mxu0
        %v3165 = vadd.f32 %v3028, %v3164
        %v3166 = vpop.f32.mrb[0].mxu0
        %v3167 = vpop.f32.mrb[0].mxu0
        %v3168 = vadd.f32 %v3028, %v3167
        %v3169 = vpop.f32.mrb[0].mxu0
        %3170 = vmatprep.mubr.bf16.mxu0 0
        %3171 = vmatmul.mubr.bf16.gmra.mrb[0].mxu0 %v3062
        %v3172 = vpop.f32.mrb[0].mxu0
        %v3173 = vadd.f32 %v3028, %v3172
        %v3174 = vpop.f32.mrb[0].mxu0
        %v3175 = vpop.f32.mrb[0].mxu0
        %v3176 = vadd.f32 %v3028, %v3175
        %v3177 = vpop.f32.mrb[0].mxu0
        %3178 = vmatprep.mubr.bf16.mxu0 0
        %3179 = vmatmul.mubr.bf16.gmra.mrb[0].mxu0 %v3065
        %v3180 = vpop.f32.mrb[0].mxu0
        %v3181 = vadd.f32 %v3028, %v3180
        %v3182 = vpop.f32.mrb[0].mxu0
        %v3183 = vpop.f32.mrb[0].mxu0
        %v3184 = vadd.f32 %v3028, %v3183
        %v3185 = vpop.f32.mrb[0].mxu0
        %3186 = vmatprep.mubr.bf16.mxu0 0
        %3187 = vmatmul.mubr.bf16.gmra.mrb[0].mxu0 %v3068
        %v3188 = vpop.f32.mrb[0].mxu0
        %v3189 = vadd.f32 %v3028, %v3188
        %v3190 = vpop.f32.mrb[0].mxu0
        %v3191 = vpop.f32.mrb[0].mxu0
        %v3192 = vadd.f32 %v3028, %v3191
        %v3193 = vpop.f32.mrb[0].mxu0
        %3194 = vmatprep.mubr.bf16.mxu0 0
        %3195 = vmatmul.mubr.bf16.gmra.mrb[0].mxu0 %v3071
        %v3196 = vpop.f32.mrb[0].mxu0
        %v3197 = vadd.f32 %v3028, %v3196
        %v3198 = vpop.f32.mrb[0].mxu0
        %v3199 = vpop.f32.mrb[0].mxu0
        %v3200 = vadd.f32 %v3028, %v3199
        %v3201 = vpop.f32.mrb[0].mxu0
        %3202 = vmatprep.mubr.bf16.mxu0 0
        %3203 = vmatmul.mubr.bf16.gmra.mrb[0].mxu0 %v3074
        %v3204 = vpop.f32.mrb[0].mxu0
        %v3205 = vadd.f32 %v3028, %v3204
        %v3206 = vpop.f32.mrb[0].mxu0
        %v3207 = vpop.f32.mrb[0].mxu0
        %v3208 = vadd.f32 %v3028, %v3207
        %v3209 = vpop.f32.mrb[0].mxu0
        %3210 = vmatprep.mubr.bf16.mxu0 0
        %3211 = vmatmul.mubr.bf16.gmra.mrb[0].mxu0 %v3077
        %v3212 = vpop.f32.mrb[0].mxu0
        %v3213 = vadd.f32 %v3028, %v3212
        %v3214 = vpop.f32.mrb[0].mxu0
        %v3215 = vpop.f32.mrb[0].mxu0
        %v3216 = vadd.f32 %v3028, %v3215
        %v3217 = vpop.f32.mrb[0].mxu0
        %3218 = vmatprep.mubr.bf16.mxu0 0
        %3219 = vmatmul.mubr.bf16.gmra.mrb[0].mxu0 %v3080
        %v3220 = vpop.f32.mrb[0].mxu0
        %v3221 = vadd.f32 %v3028, %v3220
        %v3222 = vpop.f32.mrb[0].mxu0
        %v3223 = vpop.f32.mrb[0].mxu0
        %v3224 = vadd.f32 %v3028, %v3223
        %v3225 = vpop.f32.mrb[0].mxu0
        %3226 = vmatprep.mubr.bf16.mxu0 0
        %3227 = vmatmul.mubr.bf16.gmra.mrb[0].mxu0 %v3083
        %v3228 = vpop.f32.mrb[0].mxu0
        %v3229 = vadd.f32 %v3028, %v3228
        %v3230 = vpop.f32.mrb[0].mxu0
        %v3231 = vpop.f32.mrb[0].mxu0
        %v3232 = vadd.f32 %v3028, %v3231
        %v3233 = vpop.f32.mrb[0].mxu0
        %3234 = vmatprep.mubr.bf16.mxu0 0
        %3235 = vmatmul.mubr.bf16.gmra.mrb[0].mxu0 %v3086
        %v3236 = vpop.f32.mrb[0].mxu0
        %v3237 = vadd.f32 %v3028, %v3236
        %v3238 = vpop.f32.mrb[0].mxu0
        %v3239 = vpop.f32.mrb[0].mxu0
        %v3240 = vadd.f32 %v3028, %v3239
        %v3241 = vpop.f32.mrb[0].mxu0
        %3242 = vmatprep.mubr.bf16.mxu0 0
        %3243 = vmatmul.mubr.bf16.gmra.mrb[0].mxu0 %v3089
        %v3244 = vpop.f32.mrb[0].mxu0
        %v3245 = vadd.f32 %v3028, %v3244
        %v3246 = vpop.f32.mrb[0].mxu0
        %v3247 = vpop.f32.mrb[0].mxu0
        %v3248 = vadd.f32 %v3028, %v3247
        %v3249 = vpop.f32.mrb[0].mxu0
        %3250 = vmatprep.mubr.bf16.mxu0 0
        %3251 = vmatmul.mubr.bf16.gmra.mrb[0].mxu0 %v3092
        %v3252 = vpop.f32.mrb[0].mxu0
        %v3253 = vadd.f32 %v3028, %v3252
        %v3254 = vpop.f32.mrb[0].mxu0
        %v3255 = vpop.f32.mrb[0].mxu0
        %v3256 = vadd.f32 %v3028, %v3255
        %v3257 = vpop.f32.mrb[0].mxu0
        %3258 = vdwg.mxu0
        %v3259 = vmax.f32 %v3133, 0.0
        %v3260 = vmax.f32 %v3136, 0.0
        %v3261 = vmax.f32 %v3141, 0.0
        %v3262 = vmax.f32 %v3144, 0.0
        %v3263 = vmax.f32 %v3149, 0.0
        %v3264 = vmax.f32 %v3152, 0.0
        %v3265 = vmax.f32 %v3157, 0.0
        %v3266 = vmax.f32 %v3160, 0.0
        %v3267 = vmax.f32 %v3165, 0.0
        %v3268 = vmax.f32 %v3168, 0.0
        %v3269 = vmax.f32 %v3173, 0.0
        %v3270 = vmax.f32 %v3176, 0.0
        %v3271 = vmax.f32 %v3181, 0.0
        %v3272 = vmax.f32 %v3184, 0.0
        %v3273 = vmax.f32 %v3189, 0.0
        %v3274 = vmax.f32 %v3192, 0.0
        %v3275 = vmax.f32 %v3197, 0.0
        %v3276 = vmax.f32 %v3200, 0.0
        %v3277 = vmax.f32 %v3205, 0.0
        %v3278 = vmax.f32 %v3208, 0.0
        %v3279 = vmax.f32 %v3213, 0.0
        %v3280 = vmax.f32 %v3216, 0.0
        %v3281 = vmax.f32 %v3221, 0.0
        %v3282 = vmax.f32 %v3224, 0.0
        %v3283 = vmax.f32 %v3229, 0.0
        %v3284 = vmax.f32 %v3232, 0.0
        %v3285 = vmax.f32 %v3237, 0.0
        %v3286 = vmax.f32 %v3240, 0.0
        %v3287 = vmax.f32 %v3245, 0.0
        %v3288 = vmax.f32 %v3248, 0.0
        %v3289 = vmax.f32 %v3253, 0.0
        %v3290 = vmax.f32 %v3256, 0.0
        %v3291 = vld [vmem:[%s3] sm:$0xf]
        %v3292 = vld [vmem:[%s3 + $0x4] sm:$0xf]
        %v3293 = vpack.c.bf16 %v3260, %v3259
        %v3294 = vpack.c.bf16 %v3262, %v3261
        %v3295 = vpack.c.bf16 %v3264, %v3263
        %v3296 = vpack.c.bf16 %v3266, %v3265
        %v3297 = vpack.c.bf16 %v3268, %v3267
        %v3298 = vpack.c.bf16 %v3270, %v3269
        %v3299 = vpack.c.bf16 %v3272, %v3271
        %v3300 = vpack.c.bf16 %v3274, %v3273
        %v3301 = vpack.c.bf16 %v3276, %v3275
        %v3302 = vpack.c.bf16 %v3278, %v3277
        %v3303 = vpack.c.bf16 %v3280, %v3279
        %v3304 = vpack.c.bf16 %v3282, %v3281
        %v3305 = vpack.c.bf16 %v3284, %v3283
        %v3306 = vpack.c.bf16 %v3286, %v3285
        %v3307 = vpack.c.bf16 %v3288, %v3287
        %v3308 = vpack.c.bf16 %v3290, %v3289
        %v3309 = vld [vmem:[%s4] sm:$0xff]
        %v3310 = vld [vmem:[%s4 + $0x8] sm:$0xff]
        %3312 = vset.pattern.permute.xlu0 0
        %3313 = vperm.xlu0 %3312, %v3309
        %v3314 = vpop.permute.xlu0 %3313
        %3317 = vset.pattern.permute.xlu0 0
        %3318 = vperm.xlu0 %3317, %v3310
        %v3319 = vpop.permute.xlu0 %3318
        %v3323 = vunpack.c.l.b16 %v3291
        %v3324 = vunpack.c.l.b16 %v3292
        %v3325 = vpack.c.b16 %v3324, %v3323
        %vm3326 = vcmask 261120
        %v3328 = vsel %vm3326, %v3325, 0
        %v3331 = vsel %vm3326, %v3293, 0
        %v3334 = vsel %vm3326, %v3294, 0
        %v3337 = vsel %vm3326, %v3295, 0
        %v3340 = vsel %vm3326, %v3296, 0
        %v3343 = vsel %vm3326, %v3297, 0
        %v3346 = vsel %vm3326, %v3298, 0
        %v3349 = vsel %vm3326, %v3299, 0
        %v3352 = vsel %vm3326, %v3300, 0
        %v3355 = vsel %vm3326, %v3301, 0
        %v3358 = vsel %vm3326, %v3302, 0
        %v3361 = vsel %vm3326, %v3303, 0
        %v3364 = vsel %vm3326, %v3304, 0
        %v3367 = vsel %vm3326, %v3305, 0
        %v3370 = vsel %vm3326, %v3306, 0
        %v3373 = vsel %vm3326, %v3307, 0
        %v3376 = vsel %vm3326, %v3308, 0
        %3378 = vmatprep.subr.bf16.mxu0 0
        %3379 = vmatpush1.bf16.xpose.msra.mxu0 %v3331
        %3380 = vmatprep.subr.bf16.mxu0 0
        %3381 = vmatpush1.bf16.xpose.msra.mxu0 %v3334
        %3382 = vmatprep.subr.bf16.mxu0 0
        %3383 = vmatpush1.bf16.xpose.msra.mxu0 %v3337
        %3384 = vmatprep.subr.bf16.mxu0 0
        %3385 = vmatpush1.bf16.xpose.msra.mxu0 %v3340
        %3386 = vmatprep.subr.bf16.mxu0 0
        %3387 = vmatpush1.bf16.xpose.msra.mxu0 %v3343
        %3388 = vmatprep.subr.bf16.mxu0 0
        %3389 = vmatpush1.bf16.xpose.msra.mxu0 %v3346
        %3390 = vmatprep.subr.bf16.mxu0 0
        %3391 = vmatpush1.bf16.xpose.msra.mxu0 %v3349
        %3392 = vmatprep.subr.bf16.mxu0 0
        %3393 = vmatpush1.bf16.xpose.msra.mxu0 %v3352
        %3394 = vmatprep.subr.bf16.mxu0 0
        %3395 = vmatpush1.bf16.xpose.msra.mxu0 %v3355
        %3396 = vmatprep.subr.bf16.mxu0 0
        %3397 = vmatpush1.bf16.xpose.msra.mxu0 %v3358
        %3398 = vmatprep.subr.bf16.mxu0 0
        %3399 = vmatpush1.bf16.xpose.msra.mxu0 %v3361
        %3400 = vmatprep.subr.bf16.mxu0 0
        %3401 = vmatpush1.bf16.xpose.msra.mxu0 %v3364
        %3402 = vmatprep.subr.bf16.mxu0 0
        %3403 = vmatpush1.bf16.xpose.msra.mxu0 %v3367
        %3404 = vmatprep.subr.bf16.mxu0 0
        %3405 = vmatpush1.bf16.xpose.msra.mxu0 %v3370
        %3406 = vmatprep.subr.bf16.mxu0 0
        %3407 = vmatpush1.bf16.xpose.msra.mxu0 %v3373
        %3408 = vmatprep.subr.bf16.mxu0 0
        %3409 = vmatpush1.bf16.xpose.msra.mxu0 %v3376
        %3410 = vmatprep.mubr.bf16.mxu0 0
        %3411 = vmatmul.mubr.bf16.gmra.mrb[0].mxu0 %v3328
        %v3412 = vpop.f32.mrb[0].mxu0
        %v3413 = vadd.f32 %v3314, %v3412
        %v3414 = vpop.f32.mrb[0].mxu0
        %v3415 = vadd.f32 %v3314, %v3414
        %v3416 = vpop.f32.mrb[0].mxu0
        %v3417 = vadd.f32 %v3319, %v3416
        %v3418 = vpop.f32.mrb[0].mxu0
        %v3419 = vadd.f32 %v3319, %v3418
        %3420 = vdwg.mxu0
        %v3421 = vpack.c.bf16 %v3417, %v3413
        %v3422 = vpack.c.bf16 %v3419, %v3415
        %v3425 = vunpack.c.l.b16 %v3421
        %v3426 = vunpack.c.l.b16 %v3422
        %v3427 = vunpack.c.h.b16 %v3421
        %v3428 = vunpack.c.h.b16 %v3422
        %v3429 = vpack.c.b16 %v3426, %v3425
        %v3430 = vpack.c.b16 %v3428, %v3427
        %3433 = vst [vmem:[%s237] sm:$0xff] %v3429
        %3434 = vst [vmem:[%s237 + $0x8] sm:$0xff] %v3430
        %p3435 = scmp.lt.s32.totalorder %s17, 3
        %s3436 = scalar_select %p3435, %s17, 3
        %s3437 = smul.addr %s3436, 4
        %s3438 = smul.addr %s3437, 4
        %s3439 = scalar_lea.vmem %s5, %s3438
        // Predicated region
        $region45: #{siamese_pinet_forward.2} parent=39 // pred_check
          %p3440 = pneg %p145
        $region46: #{siamese_pinet_forward.2} parent=39 // pred_check_branch
          %3442 = sbr.rel (%p3440) target = $region48
        $region47: #{siamese_pinet_forward.2} parent=39 // pred_region
          _
        $region48: #{siamese_pinet_forward.2} parent=39 // pred_fallthru
          _
      $region40: #{siamese_pinet_forward.2} parent=5 // pred_fallthru
        _
      %p3443 = scmp.le.s32.totalorder 2, %s12
      // Predicated region
      $region49: #{siamese_pinet_forward.2} parent=5 // pred_check
        %p3444 = pneg %p3443
      $region50: #{siamese_pinet_forward.2} parent=5 // pred_check_branch
        %3446 = sbr.rel (%p3444) target = $region52
      $region51: #{siamese_pinet_forward.2} parent=5 // pred_region
        %s3447 = ssub.s32 %s12, 2
        // Predicated region
        $region53: #{siamese_pinet_forward.2} parent=51 // pred_check
          %p3448 = pneg %p151
        $region54: #{siamese_pinet_forward.2} parent=51 // pred_check_branch
          %3450 = sbr.rel (%p3448) target = $region56
        $region55: #{siamese_pinet_forward.2} parent=51 // pred_region
          %p3451 = scmp.lt.s32.totalorder %s18, 3
          %s3452 = scalar_select %p3451, %s18, 3
          %s3453 = smul.addr %s3452, 4
          %s3454 = smul.addr %s3453, 4
          %s3455 = scalar_lea.vmem %s5, %s3454
        $region56: #{siamese_pinet_forward.2} parent=51 // pred_fallthru
          _
      $region52: #{siamese_pinet_forward.2} parent=5 // pred_fallthru
        _
    $region6: #{siamese_pinet_forward.2} parent=1 // loop_footer
      %s16 = sadd.s32 1, %s12
    $region7: #{siamese_pinet_forward.2} parent=1 // loop_footer_branch
      %11 = sbr.rel target = $region3
    $region8: #{siamese_pinet_forward.2} parent=1 // loop_exit
      _
    %3456 = vsyncpa [#allocation4], 1
    %s3457 = scalar_lea.sflag [#allocation4], 1
    %3458 = vsyncpa %s3457, 1

</llo_original>
